<compile_context>
chip_gen: v6e
topology: v6e:2x2x1
jax: 0.10.0
libtpu: 0.0.40
codegen_flags: <defaults>
</compile_context>

<pallas_src>
import functools

import jax
import jax.numpy as jnp
from jax import lax
from jax.experimental import pallas as pl
from jax.experimental.pallas import tpu as pltpu  # noqa: F401  (TPU backend)


# ----------------------------------------------------------------------------
# Fused kernel: whole GPS forward for one graph, everything VMEM-resident.
# ----------------------------------------------------------------------------
def gps_fused_kernel(
    # graph data
    h0_ref,                      # [N, C]  node feats ‖ ntype-emb, zero-padded PE slots
    e0_ref,                      # [E, CE] edge feats ‖ etype-emb
    row_ref, col_ref,            # [1, E]  int32 edge_index (src / dst)
    # random-walk-PE linear (eval-BN folded, padded to the C channel slots)
    pe_w_ref, pe_b_ref,          # [n_walks, C], [1, C]
    # GINEConv
    eg_w_ref, eg_b_ref,          # edge lin : [CE, C], [1, C]
    g1_w_ref, g1_b_ref,          # ffnn lin1: [C, C],  [1, C]
    g2_w_ref, g2_b_ref,          # ffnn lin2: [C, C],  [1, C]
    bn1_s_ref, bn1_b_ref,        # eval-BN folded scale/shift: [1, C]
    # multi-head attention (QKV fused; 1/sqrt(dh) folded into Wq)
    qkv_w_ref, qkv_b_ref,        # [C, 3C], [1, 3C]
    wo_ref, wo_b_ref,            # [C, C],  [1, C]
    bn2_s_ref, bn2_b_ref,        # [1, C]
    # GPSConv MLP
    m1_w_ref, m1_b_ref,          # [C, 2C], [1, 2C]
    m2_w_ref, m2_b_ref,          # [2C, C], [1, C]
    bn3_s_ref, bn3_b_ref,        # [1, C]
    # output
    out_ref,                     # [N, C]
    *, n_walks, num_heads, eps):
    f32 = jnp.float32
    nt = (((1,), (1,)), ((), ()))     # contract last axes :  X @ Y^T
    tn = (((0,), (0,)), ((), ()))     # contract first axes:  X^T @ Y

    h0 = h0_ref[...]
    e0 = e0_ref[...]
    n, c = h0.shape
    n_edges = e0.shape[0]

    # ---- incidence one-hots built in VMEM from edge_index (no HBM [E,N]) ----
    node_ids = lax.broadcasted_iota(jnp.int32, (n, n_edges), 0)
    src_m = (node_ids == row_ref[...]).astype(f32)     # [N, E] = src_onehot^T
    dst_m = (node_ids == col_ref[...]).astype(f32)     # [N, E] = dst_onehot^T

    # ---- random-walk PE fused with BN(eval) + pe_lin ------------------------
    a = lax.dot_general(src_m, dst_m, nt, preferred_element_type=f32)    # A   [N,N]
    a_t = lax.dot_general(dst_m, src_m, nt, preferred_element_type=f32)  # A^T [N,N]
    inv_deg = pl.reciprocal(
        jnp.maximum(jnp.sum(a, axis=1, keepdims=True), 1.0), approx=True)     # [N,1]
    inv_deg_r = pl.reciprocal(
        jnp.maximum(jnp.sum(a_t, axis=0, keepdims=True), 1.0), approx=True)   # [1,N]
    adj = a * inv_deg                  # D^-1 A
    adj_t = a_t * inv_deg_r            # (D^-1 A)^T  -- no eye / no transpose op

    # h accumulates  [h0 | pe_lin(pe_norm(pe))]  directly (weights pre-padded).
    pe_w = pe_w_ref[...]
    h = h0 + pe_b_ref[...]
    diag = jnp.sum(src_m * dst_m, axis=1, keepdims=True) * inv_deg   # diag(adj)
    h = h + diag * pe_w[0:1, :]
    walk = adj
    for k in range(1, n_walks):
        # diag(walk @ adj) == rowsum(walk * adj^T): no eye, no extra matmul
        diag = jnp.sum(walk * adj_t, axis=-1, keepdims=True)
        h = h + diag * pe_w[k:k + 1, :]
        if k + 1 < n_walks:
            walk = jnp.dot(walk, adj, preferred_element_type=f32)

    # ---- GPSConv local branch: GINEConv(ffnn) + residual + BN(eval) ---------
    e_proj = jnp.dot(e0, eg_w_ref[...], preferred_element_type=f32) + eg_b_ref[...]
    x_src = lax.dot_general(src_m, h, tn, preferred_element_type=f32)   # gather [E,C]
    msg = jnp.maximum(x_src + e_proj, 0.0)
    agg = jnp.dot(dst_m, msg, preferred_element_type=f32)               # scatter-sum
    gin = agg + (1.0 + eps) * h
    t = jnp.maximum(
        jnp.dot(gin, g1_w_ref[...], preferred_element_type=f32) + g1_b_ref[...], 0.0)
    t = jnp.dot(t, g2_w_ref[...], preferred_element_type=f32) + g2_b_ref[...]
    h_local = (t + h) * bn1_s_ref[...] + bn1_b_ref[...]

    # ---- GPSConv global branch: dense MHA + residual + BN(eval) -------------
    dh = c // num_heads
    qkv = jnp.dot(h, qkv_w_ref[...], preferred_element_type=f32) + qkv_b_ref[...]
    q = qkv[:, 0:c]                    # already scaled by 1/sqrt(dh) (folded)
    k_ = qkv[:, c:2 * c]
    v = qkv[:, 2 * c:3 * c]
    wo = wo_ref[...]
    attn = jnp.zeros((n, c), f32) + wo_b_ref[...]
    for i in range(num_heads):                       # static unroll, heads=4
        qs = q[:, i * dh:(i + 1) * dh]
        ks = k_[:, i * dh:(i + 1) * dh]
        vs = v[:, i * dh:(i + 1) * dh]
        s = lax.dot_general(qs, ks, nt, preferred_element_type=f32)     # [N,N]
        s = s - jnp.max(s, axis=-1, keepdims=True)
        p = jnp.exp(s)
        p = p * pl.reciprocal(jnp.sum(p, axis=-1, keepdims=True), approx=True)
        head = jnp.dot(p, vs, preferred_element_type=f32)               # [N,dh]
        # concat(heads) @ Wo  ==  sum_i head_i @ Wo[i*dh:(i+1)*dh, :]
        attn = attn + jnp.dot(head, wo[i * dh:(i + 1) * dh, :],
                              preferred_element_type=f32)
    h_attn = (attn + h) * bn2_s_ref[...] + bn2_b_ref[...]

    # ---- combine + MLP + BN(eval) -------------------------------------------
    out = h_local + h_attn
    m = jnp.maximum(
        jnp.dot(out, m1_w_ref[...], preferred_element_type=f32) + m1_b_ref[...], 0.0)
    m = jnp.dot(m, m2_w_ref[...], preferred_element_type=f32) + m2_b_ref[...]
    out_ref[...] = (out + m) * bn3_s_ref[...] + bn3_b_ref[...]


# ----------------------------------------------------------------------------
# Forward pass: JAX glue (embedding gathers, weight folds) + one pallas_call.
# ----------------------------------------------------------------------------
def homo_molecule_gnn_gps_forward(params, x, edge_index, ntypes, etypes, eattr,
                                  *, num_heads=4, n_walks=20, eps=0.0):
    n_nodes = x.shape[0]
    pe_dim = params["pe_lin_w"].shape[1]
    channels = params["gine_w1"].shape[0]

    # --- embedding lookups + feature concat (plain-JAX glue) -----------------
    ntype_embs = jnp.take(params["ntype_emb"], ntypes, axis=0)
    h0 = jnp.concatenate([ntype_embs, x], axis=-1)                  # [N, C0]
    c0 = h0.shape[-1]
    # zero-pad h0 into the full channel layout; PE columns filled in-kernel
    h0p = jnp.concatenate(
        [h0, jnp.zeros((n_nodes, pe_dim), jnp.float32)], axis=-1)   # [N, C]
    etype_embs = jnp.take(params["etype_emb"], etypes, axis=0)
    e0 = jnp.concatenate([etype_embs, eattr], axis=-1)              # [E, CE]

    # --- fold eval-BatchNorm(20) into pe_lin and pad to channel slots --------
    w_pe = params["pe_bn_scale"].reshape(-1, 1) * params["pe_lin_w"]          # [20, pe]
    b_pe = params["pe_bn_shift"] @ params["pe_lin_w"] + params["pe_lin_b"]    # [1, pe]
    w_pe = jnp.concatenate([jnp.zeros((n_walks, c0), jnp.float32), w_pe], axis=-1)
    b_pe = jnp.concatenate([jnp.zeros((1, c0), jnp.float32), b_pe], axis=-1)

    # --- fuse QKV weights; fold 1/sqrt(d_head) into the Q projection ---------
    scale = 1.0 / float(channels // num_heads) ** 0.5
    wqkv = jnp.concatenate([params["attn_wq"] * scale, params["attn_wk"],
                            params["attn_wv"]], axis=-1)            # [C, 3C]
    bqkv = jnp.concatenate([params["attn_bq"] * scale, params["attn_bk"],
                            params["attn_bv"]], axis=-1)            # [1, 3C]

    row = edge_index[0:1, :].astype(jnp.int32)                      # [1, E]
    col = edge_index[1:2, :].astype(jnp.int32)                      # [1, E]

    kernel = functools.partial(gps_fused_kernel, n_walks=n_walks,
                               num_heads=num_heads, eps=eps)
    # Single fused call: all inputs/intermediates VMEM-resident, one HBM store.
    # TODO(synk): for multi-graph inference, add a graph grid axis marked
    #             "parallel" so v7x's two TensorCores are both used.
    return pl.pallas_call(
        kernel,
        out_shape=jax.ShapeDtypeStruct((n_nodes, channels), jnp.float32),
    )(h0p, e0, row, col,
      w_pe, b_pe,
      params["gine_edge_w"], params["gine_edge_b"],
      params["gine_w1"], params["gine_b1"],
      params["gine_w2"], params["gine_b2"],
      params["bn1_scale"], params["bn1_shift"],
      wqkv, bqkv, params["attn_wo"], params["attn_bo"],
      params["bn2_scale"], params["bn2_shift"],
      params["mlp_w1"], params["mlp_b1"],
      params["mlp_w2"], params["mlp_b2"],
      params["bn3_scale"], params["bn3_shift"])


# ----------------------------------------------------------------------------
# Deterministic parameter construction and smoke test
# ----------------------------------------------------------------------------
def _bn_eval(d, eps=1e-5):
    # eval-mode BatchNorm with default init: gamma=1, beta=0, mean=0, var=1
    scale = jnp.full((1, d), 1.0 / jnp.sqrt(1.0 + eps), jnp.float32)
    shift = jnp.zeros((1, d), jnp.float32)
    return scale, shift


def make_params(key, *, in_ch, ntype_emb, etype_emb, num_ntypes, num_etypes,
                edge_dim, pe_dim, channels):
    ks = iter(jax.random.split(key, 32))

    def dense(shape, s=0.1):
        return s * jax.random.normal(next(ks), shape, dtype=jnp.float32)

    edge_total = edge_dim + etype_emb
    p = {
        "ntype_emb": dense((num_ntypes, ntype_emb), 1.0),
        "etype_emb": dense((num_etypes, etype_emb), 1.0),
        "pe_lin_w": dense((20, pe_dim)), "pe_lin_b": dense((1, pe_dim), 0.01),
        "gine_edge_w": dense((edge_total, channels)),
        "gine_edge_b": dense((1, channels), 0.01),
        "gine_w1": dense((channels, channels)), "gine_b1": dense((1, channels), 0.01),
        "gine_w2": dense((channels, channels)), "gine_b2": dense((1, channels), 0.01),
        "attn_wq": dense((channels, channels)), "attn_bq": dense((1, channels), 0.01),
        "attn_wk": dense((channels, channels)), "attn_bk": dense((1, channels), 0.01),
        "attn_wv": dense((channels, channels)), "attn_bv": dense((1, channels), 0.01),
        "attn_wo": dense((channels, channels)), "attn_bo": dense((1, channels), 0.01),
        "mlp_w1": dense((channels, 2 * channels)), "mlp_b1": dense((1, 2 * channels), 0.01),
        "mlp_w2": dense((2 * channels, channels)), "mlp_b2": dense((1, channels), 0.01),
    }
    p["pe_bn_scale"], p["pe_bn_shift"] = _bn_eval(20)
    p["bn1_scale"], p["bn1_shift"] = _bn_eval(channels)
    p["bn2_scale"], p["bn2_shift"] = _bn_eval(channels)
    p["bn3_scale"], p["bn3_shift"] = _bn_eval(channels)
    return p


if __name__ == "__main__":
    key = jax.random.PRNGKey(0)

    # Small, self-consistent configuration.
    # GPSConv's residual (h + x) requires conv input/output widths to match:
    # in_channels + ntype_emb_dim + pe_dim == out_channels.
    N, E = 32, 64
    IN_CH, NTYPE_EMB, PE_DIM = 4, 4, 8
    EDGE_DIM, ETYPE_EMB = 3, 5
    NUM_NTYPES, NUM_ETYPES = 6, 4
    CHANNELS = IN_CH + NTYPE_EMB + PE_DIM        # = out_channels = 16

    kp, kx, ke, kn, kt, kei = jax.random.split(key, 6)
    params = make_params(kp, in_ch=IN_CH, ntype_emb=NTYPE_EMB,
                         etype_emb=ETYPE_EMB, num_ntypes=NUM_NTYPES,
                         num_etypes=NUM_ETYPES, edge_dim=EDGE_DIM,
                         pe_dim=PE_DIM, channels=CHANNELS)

    x = jax.random.normal(kx, (N, IN_CH), jnp.float32)
    eattr = jax.random.normal(ke, (E, EDGE_DIM), jnp.float32)
    ntypes = jax.random.randint(kn, (N,), 0, NUM_NTYPES)
    etypes = jax.random.randint(kt, (E,), 0, NUM_ETYPES)
    edge_index = jax.random.randint(kei, (2, E), 0, N)

    fwd = jax.jit(homo_molecule_gnn_gps_forward)
    out = fwd(params, x, edge_index, ntypes, etypes, eattr)
    out = jax.block_until_ready(out)

    assert out.shape == (N, CHANNELS)
    assert bool(jnp.all(jnp.isfinite(out)))
    print("KERNEL_OK")
</pallas_src>

<mosaic_0001>
module attributes {stable_mosaic.version = 11 : i64} {
  func.func @gps_fused_kernel(%arg0: memref<32x16xf32, #tpu.memory_space<vmem>>, %arg1: memref<64x8xf32, #tpu.memory_space<vmem>>, %arg2: memref<1x64xi32, #tpu.memory_space<vmem>>, %arg3: memref<1x64xi32, #tpu.memory_space<vmem>>, %arg4: memref<20x16xf32, #tpu.memory_space<vmem>>, %arg5: memref<1x16xf32, #tpu.memory_space<vmem>>, %arg6: memref<8x16xf32, #tpu.memory_space<vmem>>, %arg7: memref<1x16xf32, #tpu.memory_space<vmem>>, %arg8: memref<16x16xf32, #tpu.memory_space<vmem>>, %arg9: memref<1x16xf32, #tpu.memory_space<vmem>>, %arg10: memref<16x16xf32, #tpu.memory_space<vmem>>, %arg11: memref<1x16xf32, #tpu.memory_space<vmem>>, %arg12: memref<1x16xf32, #tpu.memory_space<vmem>>, %arg13: memref<1x16xf32, #tpu.memory_space<vmem>>, %arg14: memref<16x48xf32, #tpu.memory_space<vmem>>, %arg15: memref<1x48xf32, #tpu.memory_space<vmem>>, %arg16: memref<16x16xf32, #tpu.memory_space<vmem>>, %arg17: memref<1x16xf32, #tpu.memory_space<vmem>>, %arg18: memref<1x16xf32, #tpu.memory_space<vmem>>, %arg19: memref<1x16xf32, #tpu.memory_space<vmem>>, %arg20: memref<16x32xf32, #tpu.memory_space<vmem>>, %arg21: memref<1x32xf32, #tpu.memory_space<vmem>>, %arg22: memref<32x16xf32, #tpu.memory_space<vmem>>, %arg23: memref<1x16xf32, #tpu.memory_space<vmem>>, %arg24: memref<1x16xf32, #tpu.memory_space<vmem>>, %arg25: memref<1x16xf32, #tpu.memory_space<vmem>>, %arg26: memref<32x16xf32, #tpu.memory_space<vmem>>) attributes {dimension_semantics = [], scalar_prefetch = 0 : i64, scratch_operands = 0 : i64, tpu.core_type = #tpu.core_type<tc>} {
    %c0 = arith.constant 0 : index
    %c0_0 = arith.constant 0 : index
    %0 = vector.load %arg0[%c0, %c0_0] : memref<32x16xf32, #tpu.memory_space<vmem>>, vector<32x16xf32>
    %c0_1 = arith.constant 0 : index
    %c0_2 = arith.constant 0 : index
    %1 = vector.load %arg1[%c0_1, %c0_2] : memref<64x8xf32, #tpu.memory_space<vmem>>, vector<64x8xf32>
    %2 = tpu.iota {dimensions = array<i32: 0>} : vector<32x64xi32>
    %c0_3 = arith.constant 0 : index
    %c0_4 = arith.constant 0 : index
    %3 = vector.load %arg2[%c0_3, %c0_4] : memref<1x64xi32, #tpu.memory_space<vmem>>, vector<1x64xi32>
    %4 = vector.broadcast %3 : vector<1x64xi32> to vector<32x64xi32>
    %5 = arith.cmpi eq, %2, %4 : vector<32x64xi32>
    %6 = arith.extui %5 : vector<32x64xi1> to vector<32x64xi32>
    %7 = arith.sitofp %6 : vector<32x64xi32> to vector<32x64xf32>
    %c0_5 = arith.constant 0 : index
    %c0_6 = arith.constant 0 : index
    %8 = vector.load %arg3[%c0_5, %c0_6] : memref<1x64xi32, #tpu.memory_space<vmem>>, vector<1x64xi32>
    %9 = vector.broadcast %8 : vector<1x64xi32> to vector<32x64xi32>
    %10 = arith.cmpi eq, %2, %9 : vector<32x64xi32>
    %11 = arith.extui %10 : vector<32x64xi1> to vector<32x64xi32>
    %12 = arith.sitofp %11 : vector<32x64xi32> to vector<32x64xf32>
    %cst = arith.constant dense<0.000000e+00> : vector<32x32xf32>
    %13 = tpu.matmul %7, %12, %cst {dimension_numbers = #tpu.dot_dimension_numbers<[1], [1], [0], [0], [0, 0, 1, 0], [], []>} : vector<32x64xf32>, vector<32x64xf32>, vector<32x32xf32> -> vector<32x32xf32>
    %cst_7 = arith.constant dense<0.000000e+00> : vector<32x32xf32>
    %14 = tpu.matmul %12, %7, %cst_7 {dimension_numbers = #tpu.dot_dimension_numbers<[1], [1], [0], [0], [0, 0, 1, 0], [], []>} : vector<32x64xf32>, vector<32x64xf32>, vector<32x32xf32> -> vector<32x32xf32>
    %cst_8 = arith.constant dense<0.000000e+00> : vector<32xf32>
    %15 = vector.multi_reduction <add>, %13, %cst_8 [1] : vector<32x32xf32> to vector<32xf32>
    %16 = vector.shape_cast %15 : vector<32xf32> to vector<32x1xf32>
    %cst_9 = arith.constant 1.000000e+00 : f32
    %17 = vector.broadcast %cst_9 : f32 to vector<32x1xf32>
    %18 = arith.maximumf %16, %17 : vector<32x1xf32>
    %19 = tpu.reciprocal %18 {approx = true} : vector<32x1xf32> -> vector<32x1xf32>
    %cst_10 = arith.constant dense<0.000000e+00> : vector<32xf32>
    %20 = vector.multi_reduction <add>, %14, %cst_10 [0] : vector<32x32xf32> to vector<32xf32>
    %21 = vector.shape_cast %20 : vector<32xf32> to vector<1x32xf32>
    %cst_11 = arith.constant 1.000000e+00 : f32
    %22 = vector.broadcast %cst_11 : f32 to vector<1x32xf32>
    %23 = arith.maximumf %21, %22 : vector<1x32xf32>
    %24 = tpu.reciprocal %23 {approx = true} : vector<1x32xf32> -> vector<1x32xf32>
    %25 = vector.broadcast %19 : vector<32x1xf32> to vector<32x32xf32>
    %26 = arith.mulf %13, %25 : vector<32x32xf32>
    %27 = vector.broadcast %24 : vector<1x32xf32> to vector<32x32xf32>
    %28 = arith.mulf %14, %27 : vector<32x32xf32>
    %c0_12 = arith.constant 0 : index
    %c0_13 = arith.constant 0 : index
    %29 = vector.load %arg4[%c0_12, %c0_13] : memref<20x16xf32, #tpu.memory_space<vmem>>, vector<20x16xf32>
    %c0_14 = arith.constant 0 : index
    %c0_15 = arith.constant 0 : index
    %30 = vector.load %arg5[%c0_14, %c0_15] : memref<1x16xf32, #tpu.memory_space<vmem>>, vector<1x16xf32>
    %31 = vector.broadcast %30 : vector<1x16xf32> to vector<32x16xf32>
    %32 = arith.addf %0, %31 : vector<32x16xf32>
    %33 = arith.mulf %7, %12 : vector<32x64xf32>
    %cst_16 = arith.constant dense<0.000000e+00> : vector<32xf32>
    %34 = vector.multi_reduction <add>, %33, %cst_16 [1] : vector<32x64xf32> to vector<32xf32>
    %35 = vector.shape_cast %34 : vector<32xf32> to vector<32x1xf32>
    %36 = arith.mulf %35, %19 : vector<32x1xf32>
    %37 = vector.extract_strided_slice %29 {offsets = [0, 0], sizes = [1, 16], strides = [1, 1]} : vector<20x16xf32> to vector<1x16xf32>
    %38 = vector.broadcast %36 : vector<32x1xf32> to vector<32x16xf32>
    %39 = vector.broadcast %37 : vector<1x16xf32> to vector<32x16xf32>
    %40 = arith.mulf %38, %39 : vector<32x16xf32>
    %41 = arith.addf %32, %40 : vector<32x16xf32>
    %42 = arith.mulf %26, %28 : vector<32x32xf32>
    %cst_17 = arith.constant dense<0.000000e+00> : vector<32xf32>
    %43 = vector.multi_reduction <add>, %42, %cst_17 [1] : vector<32x32xf32> to vector<32xf32>
    %44 = vector.shape_cast %43 : vector<32xf32> to vector<32x1xf32>
    %45 = vector.extract_strided_slice %29 {offsets = [1, 0], sizes = [1, 16], strides = [1, 1]} : vector<20x16xf32> to vector<1x16xf32>
    %46 = vector.broadcast %44 : vector<32x1xf32> to vector<32x16xf32>
    %47 = vector.broadcast %45 : vector<1x16xf32> to vector<32x16xf32>
    %48 = arith.mulf %46, %47 : vector<32x16xf32>
    %49 = arith.addf %41, %48 : vector<32x16xf32>
    %cst_18 = arith.constant dense<0.000000e+00> : vector<32x32xf32>
    %50 = tpu.matmul %26, %26, %cst_18 {dimension_numbers = #tpu.dot_dimension_numbers<[1], [0], [0], [1], [0, 0, 1, 1], [], []>} : vector<32x32xf32>, vector<32x32xf32>, vector<32x32xf32> -> vector<32x32xf32>
    %51 = arith.mulf %50, %28 : vector<32x32xf32>
    %cst_19 = arith.constant dense<0.000000e+00> : vector<32xf32>
    %52 = vector.multi_reduction <add>, %51, %cst_19 [1] : vector<32x32xf32> to vector<32xf32>
    %53 = vector.shape_cast %52 : vector<32xf32> to vector<32x1xf32>
    %54 = vector.extract_strided_slice %29 {offsets = [2, 0], sizes = [1, 16], strides = [1, 1]} : vector<20x16xf32> to vector<1x16xf32>
    %55 = vector.broadcast %53 : vector<32x1xf32> to vector<32x16xf32>
    %56 = vector.broadcast %54 : vector<1x16xf32> to vector<32x16xf32>
    %57 = arith.mulf %55, %56 : vector<32x16xf32>
    %58 = arith.addf %49, %57 : vector<32x16xf32>
    %cst_20 = arith.constant dense<0.000000e+00> : vector<32x32xf32>
    %59 = tpu.matmul %50, %26, %cst_20 {dimension_numbers = #tpu.dot_dimension_numbers<[1], [0], [0], [1], [0, 0, 1, 1], [], []>} : vector<32x32xf32>, vector<32x32xf32>, vector<32x32xf32> -> vector<32x32xf32>
    %60 = arith.mulf %59, %28 : vector<32x32xf32>
    %cst_21 = arith.constant dense<0.000000e+00> : vector<32xf32>
    %61 = vector.multi_reduction <add>, %60, %cst_21 [1] : vector<32x32xf32> to vector<32xf32>
    %62 = vector.shape_cast %61 : vector<32xf32> to vector<32x1xf32>
    %63 = vector.extract_strided_slice %29 {offsets = [3, 0], sizes = [1, 16], strides = [1, 1]} : vector<20x16xf32> to vector<1x16xf32>
    %64 = vector.broadcast %62 : vector<32x1xf32> to vector<32x16xf32>
    %65 = vector.broadcast %63 : vector<1x16xf32> to vector<32x16xf32>
    %66 = arith.mulf %64, %65 : vector<32x16xf32>
    %67 = arith.addf %58, %66 : vector<32x16xf32>
    %cst_22 = arith.constant dense<0.000000e+00> : vector<32x32xf32>
    %68 = tpu.matmul %59, %26, %cst_22 {dimension_numbers = #tpu.dot_dimension_numbers<[1], [0], [0], [1], [0, 0, 1, 1], [], []>} : vector<32x32xf32>, vector<32x32xf32>, vector<32x32xf32> -> vector<32x32xf32>
    %69 = arith.mulf %68, %28 : vector<32x32xf32>
    %cst_23 = arith.constant dense<0.000000e+00> : vector<32xf32>
    %70 = vector.multi_reduction <add>, %69, %cst_23 [1] : vector<32x32xf32> to vector<32xf32>
    %71 = vector.shape_cast %70 : vector<32xf32> to vector<32x1xf32>
    %72 = vector.extract_strided_slice %29 {offsets = [4, 0], sizes = [1, 16], strides = [1, 1]} : vector<20x16xf32> to vector<1x16xf32>
    %73 = vector.broadcast %71 : vector<32x1xf32> to vector<32x16xf32>
    %74 = vector.broadcast %72 : vector<1x16xf32> to vector<32x16xf32>
    %75 = arith.mulf %73, %74 : vector<32x16xf32>
    %76 = arith.addf %67, %75 : vector<32x16xf32>
    %cst_24 = arith.constant dense<0.000000e+00> : vector<32x32xf32>
    %77 = tpu.matmul %68, %26, %cst_24 {dimension_numbers = #tpu.dot_dimension_numbers<[1], [0], [0], [1], [0, 0, 1, 1], [], []>} : vector<32x32xf32>, vector<32x32xf32>, vector<32x32xf32> -> vector<32x32xf32>
    %78 = arith.mulf %77, %28 : vector<32x32xf32>
    %cst_25 = arith.constant dense<0.000000e+00> : vector<32xf32>
    %79 = vector.multi_reduction <add>, %78, %cst_25 [1] : vector<32x32xf32> to vector<32xf32>
    %80 = vector.shape_cast %79 : vector<32xf32> to vector<32x1xf32>
    %81 = vector.extract_strided_slice %29 {offsets = [5, 0], sizes = [1, 16], strides = [1, 1]} : vector<20x16xf32> to vector<1x16xf32>
    %82 = vector.broadcast %80 : vector<32x1xf32> to vector<32x16xf32>
    %83 = vector.broadcast %81 : vector<1x16xf32> to vector<32x16xf32>
    %84 = arith.mulf %82, %83 : vector<32x16xf32>
    %85 = arith.addf %76, %84 : vector<32x16xf32>
    %cst_26 = arith.constant dense<0.000000e+00> : vector<32x32xf32>
    %86 = tpu.matmul %77, %26, %cst_26 {dimension_numbers = #tpu.dot_dimension_numbers<[1], [0], [0], [1], [0, 0, 1, 1], [], []>} : vector<32x32xf32>, vector<32x32xf32>, vector<32x32xf32> -> vector<32x32xf32>
    %87 = arith.mulf %86, %28 : vector<32x32xf32>
    %cst_27 = arith.constant dense<0.000000e+00> : vector<32xf32>
    %88 = vector.multi_reduction <add>, %87, %cst_27 [1] : vector<32x32xf32> to vector<32xf32>
    %89 = vector.shape_cast %88 : vector<32xf32> to vector<32x1xf32>
    %90 = vector.extract_strided_slice %29 {offsets = [6, 0], sizes = [1, 16], strides = [1, 1]} : vector<20x16xf32> to vector<1x16xf32>
    %91 = vector.broadcast %89 : vector<32x1xf32> to vector<32x16xf32>
    %92 = vector.broadcast %90 : vector<1x16xf32> to vector<32x16xf32>
    %93 = arith.mulf %91, %92 : vector<32x16xf32>
    %94 = arith.addf %85, %93 : vector<32x16xf32>
    %cst_28 = arith.constant dense<0.000000e+00> : vector<32x32xf32>
    %95 = tpu.matmul %86, %26, %cst_28 {dimension_numbers = #tpu.dot_dimension_numbers<[1], [0], [0], [1], [0, 0, 1, 1], [], []>} : vector<32x32xf32>, vector<32x32xf32>, vector<32x32xf32> -> vector<32x32xf32>
    %96 = arith.mulf %95, %28 : vector<32x32xf32>
    %cst_29 = arith.constant dense<0.000000e+00> : vector<32xf32>
    %97 = vector.multi_reduction <add>, %96, %cst_29 [1] : vector<32x32xf32> to vector<32xf32>
    %98 = vector.shape_cast %97 : vector<32xf32> to vector<32x1xf32>
    %99 = vector.extract_strided_slice %29 {offsets = [7, 0], sizes = [1, 16], strides = [1, 1]} : vector<20x16xf32> to vector<1x16xf32>
    %100 = vector.broadcast %98 : vector<32x1xf32> to vector<32x16xf32>
    %101 = vector.broadcast %99 : vector<1x16xf32> to vector<32x16xf32>
    %102 = arith.mulf %100, %101 : vector<32x16xf32>
    %103 = arith.addf %94, %102 : vector<32x16xf32>
    %cst_30 = arith.constant dense<0.000000e+00> : vector<32x32xf32>
    %104 = tpu.matmul %95, %26, %cst_30 {dimension_numbers = #tpu.dot_dimension_numbers<[1], [0], [0], [1], [0, 0, 1, 1], [], []>} : vector<32x32xf32>, vector<32x32xf32>, vector<32x32xf32> -> vector<32x32xf32>
    %105 = arith.mulf %104, %28 : vector<32x32xf32>
    %cst_31 = arith.constant dense<0.000000e+00> : vector<32xf32>
    %106 = vector.multi_reduction <add>, %105, %cst_31 [1] : vector<32x32xf32> to vector<32xf32>
    %107 = vector.shape_cast %106 : vector<32xf32> to vector<32x1xf32>
    %108 = vector.extract_strided_slice %29 {offsets = [8, 0], sizes = [1, 16], strides = [1, 1]} : vector<20x16xf32> to vector<1x16xf32>
    %109 = vector.broadcast %107 : vector<32x1xf32> to vector<32x16xf32>
    %110 = vector.broadcast %108 : vector<1x16xf32> to vector<32x16xf32>
    %111 = arith.mulf %109, %110 : vector<32x16xf32>
    %112 = arith.addf %103, %111 : vector<32x16xf32>
    %cst_32 = arith.constant dense<0.000000e+00> : vector<32x32xf32>
    %113 = tpu.matmul %104, %26, %cst_32 {dimension_numbers = #tpu.dot_dimension_numbers<[1], [0], [0], [1], [0, 0, 1, 1], [], []>} : vector<32x32xf32>, vector<32x32xf32>, vector<32x32xf32> -> vector<32x32xf32>
    %114 = arith.mulf %113, %28 : vector<32x32xf32>
    %cst_33 = arith.constant dense<0.000000e+00> : vector<32xf32>
    %115 = vector.multi_reduction <add>, %114, %cst_33 [1] : vector<32x32xf32> to vector<32xf32>
    %116 = vector.shape_cast %115 : vector<32xf32> to vector<32x1xf32>
    %117 = vector.extract_strided_slice %29 {offsets = [9, 0], sizes = [1, 16], strides = [1, 1]} : vector<20x16xf32> to vector<1x16xf32>
    %118 = vector.broadcast %116 : vector<32x1xf32> to vector<32x16xf32>
    %119 = vector.broadcast %117 : vector<1x16xf32> to vector<32x16xf32>
    %120 = arith.mulf %118, %119 : vector<32x16xf32>
    %121 = arith.addf %112, %120 : vector<32x16xf32>
    %cst_34 = arith.constant dense<0.000000e+00> : vector<32x32xf32>
    %122 = tpu.matmul %113, %26, %cst_34 {dimension_numbers = #tpu.dot_dimension_numbers<[1], [0], [0], [1], [0, 0, 1, 1], [], []>} : vector<32x32xf32>, vector<32x32xf32>, vector<32x32xf32> -> vector<32x32xf32>
    %123 = arith.mulf %122, %28 : vector<32x32xf32>
    %cst_35 = arith.constant dense<0.000000e+00> : vector<32xf32>
    %124 = vector.multi_reduction <add>, %123, %cst_35 [1] : vector<32x32xf32> to vector<32xf32>
    %125 = vector.shape_cast %124 : vector<32xf32> to vector<32x1xf32>
    %126 = vector.extract_strided_slice %29 {offsets = [10, 0], sizes = [1, 16], strides = [1, 1]} : vector<20x16xf32> to vector<1x16xf32>
    %127 = vector.broadcast %125 : vector<32x1xf32> to vector<32x16xf32>
    %128 = vector.broadcast %126 : vector<1x16xf32> to vector<32x16xf32>
    %129 = arith.mulf %127, %128 : vector<32x16xf32>
    %130 = arith.addf %121, %129 : vector<32x16xf32>
    %cst_36 = arith.constant dense<0.000000e+00> : vector<32x32xf32>
    %131 = tpu.matmul %122, %26, %cst_36 {dimension_numbers = #tpu.dot_dimension_numbers<[1], [0], [0], [1], [0, 0, 1, 1], [], []>} : vector<32x32xf32>, vector<32x32xf32>, vector<32x32xf32> -> vector<32x32xf32>
    %132 = arith.mulf %131, %28 : vector<32x32xf32>
    %cst_37 = arith.constant dense<0.000000e+00> : vector<32xf32>
    %133 = vector.multi_reduction <add>, %132, %cst_37 [1] : vector<32x32xf32> to vector<32xf32>
    %134 = vector.shape_cast %133 : vector<32xf32> to vector<32x1xf32>
    %135 = vector.extract_strided_slice %29 {offsets = [11, 0], sizes = [1, 16], strides = [1, 1]} : vector<20x16xf32> to vector<1x16xf32>
    %136 = vector.broadcast %134 : vector<32x1xf32> to vector<32x16xf32>
    %137 = vector.broadcast %135 : vector<1x16xf32> to vector<32x16xf32>
    %138 = arith.mulf %136, %137 : vector<32x16xf32>
    %139 = arith.addf %130, %138 : vector<32x16xf32>
    %cst_38 = arith.constant dense<0.000000e+00> : vector<32x32xf32>
    %140 = tpu.matmul %131, %26, %cst_38 {dimension_numbers = #tpu.dot_dimension_numbers<[1], [0], [0], [1], [0, 0, 1, 1], [], []>} : vector<32x32xf32>, vector<32x32xf32>, vector<32x32xf32> -> vector<32x32xf32>
    %141 = arith.mulf %140, %28 : vector<32x32xf32>
    %cst_39 = arith.constant dense<0.000000e+00> : vector<32xf32>
    %142 = vector.multi_reduction <add>, %141, %cst_39 [1] : vector<32x32xf32> to vector<32xf32>
    %143 = vector.shape_cast %142 : vector<32xf32> to vector<32x1xf32>
    %144 = vector.extract_strided_slice %29 {offsets = [12, 0], sizes = [1, 16], strides = [1, 1]} : vector<20x16xf32> to vector<1x16xf32>
    %145 = vector.broadcast %143 : vector<32x1xf32> to vector<32x16xf32>
    %146 = vector.broadcast %144 : vector<1x16xf32> to vector<32x16xf32>
    %147 = arith.mulf %145, %146 : vector<32x16xf32>
    %148 = arith.addf %139, %147 : vector<32x16xf32>
    %cst_40 = arith.constant dense<0.000000e+00> : vector<32x32xf32>
    %149 = tpu.matmul %140, %26, %cst_40 {dimension_numbers = #tpu.dot_dimension_numbers<[1], [0], [0], [1], [0, 0, 1, 1], [], []>} : vector<32x32xf32>, vector<32x32xf32>, vector<32x32xf32> -> vector<32x32xf32>
    %150 = arith.mulf %149, %28 : vector<32x32xf32>
    %cst_41 = arith.constant dense<0.000000e+00> : vector<32xf32>
    %151 = vector.multi_reduction <add>, %150, %cst_41 [1] : vector<32x32xf32> to vector<32xf32>
    %152 = vector.shape_cast %151 : vector<32xf32> to vector<32x1xf32>
    %153 = vector.extract_strided_slice %29 {offsets = [13, 0], sizes = [1, 16], strides = [1, 1]} : vector<20x16xf32> to vector<1x16xf32>
    %154 = vector.broadcast %152 : vector<32x1xf32> to vector<32x16xf32>
    %155 = vector.broadcast %153 : vector<1x16xf32> to vector<32x16xf32>
    %156 = arith.mulf %154, %155 : vector<32x16xf32>
    %157 = arith.addf %148, %156 : vector<32x16xf32>
    %cst_42 = arith.constant dense<0.000000e+00> : vector<32x32xf32>
    %158 = tpu.matmul %149, %26, %cst_42 {dimension_numbers = #tpu.dot_dimension_numbers<[1], [0], [0], [1], [0, 0, 1, 1], [], []>} : vector<32x32xf32>, vector<32x32xf32>, vector<32x32xf32> -> vector<32x32xf32>
    %159 = arith.mulf %158, %28 : vector<32x32xf32>
    %cst_43 = arith.constant dense<0.000000e+00> : vector<32xf32>
    %160 = vector.multi_reduction <add>, %159, %cst_43 [1] : vector<32x32xf32> to vector<32xf32>
    %161 = vector.shape_cast %160 : vector<32xf32> to vector<32x1xf32>
    %162 = vector.extract_strided_slice %29 {offsets = [14, 0], sizes = [1, 16], strides = [1, 1]} : vector<20x16xf32> to vector<1x16xf32>
    %163 = vector.broadcast %161 : vector<32x1xf32> to vector<32x16xf32>
    %164 = vector.broadcast %162 : vector<1x16xf32> to vector<32x16xf32>
    %165 = arith.mulf %163, %164 : vector<32x16xf32>
    %166 = arith.addf %157, %165 : vector<32x16xf32>
    %cst_44 = arith.constant dense<0.000000e+00> : vector<32x32xf32>
    %167 = tpu.matmul %158, %26, %cst_44 {dimension_numbers = #tpu.dot_dimension_numbers<[1], [0], [0], [1], [0, 0, 1, 1], [], []>} : vector<32x32xf32>, vector<32x32xf32>, vector<32x32xf32> -> vector<32x32xf32>
    %168 = arith.mulf %167, %28 : vector<32x32xf32>
    %cst_45 = arith.constant dense<0.000000e+00> : vector<32xf32>
    %169 = vector.multi_reduction <add>, %168, %cst_45 [1] : vector<32x32xf32> to vector<32xf32>
    %170 = vector.shape_cast %169 : vector<32xf32> to vector<32x1xf32>
    %171 = vector.extract_strided_slice %29 {offsets = [15, 0], sizes = [1, 16], strides = [1, 1]} : vector<20x16xf32> to vector<1x16xf32>
    %172 = vector.broadcast %170 : vector<32x1xf32> to vector<32x16xf32>
    %173 = vector.broadcast %171 : vector<1x16xf32> to vector<32x16xf32>
    %174 = arith.mulf %172, %173 : vector<32x16xf32>
    %175 = arith.addf %166, %174 : vector<32x16xf32>
    %cst_46 = arith.constant dense<0.000000e+00> : vector<32x32xf32>
    %176 = tpu.matmul %167, %26, %cst_46 {dimension_numbers = #tpu.dot_dimension_numbers<[1], [0], [0], [1], [0, 0, 1, 1], [], []>} : vector<32x32xf32>, vector<32x32xf32>, vector<32x32xf32> -> vector<32x32xf32>
    %177 = arith.mulf %176, %28 : vector<32x32xf32>
    %cst_47 = arith.constant dense<0.000000e+00> : vector<32xf32>
    %178 = vector.multi_reduction <add>, %177, %cst_47 [1] : vector<32x32xf32> to vector<32xf32>
    %179 = vector.shape_cast %178 : vector<32xf32> to vector<32x1xf32>
    %180 = vector.extract_strided_slice %29 {offsets = [16, 0], sizes = [1, 16], strides = [1, 1]} : vector<20x16xf32> to vector<1x16xf32>
    %181 = vector.broadcast %179 : vector<32x1xf32> to vector<32x16xf32>
    %182 = vector.broadcast %180 : vector<1x16xf32> to vector<32x16xf32>
    %183 = arith.mulf %181, %182 : vector<32x16xf32>
    %184 = arith.addf %175, %183 : vector<32x16xf32>
    %cst_48 = arith.constant dense<0.000000e+00> : vector<32x32xf32>
    %185 = tpu.matmul %176, %26, %cst_48 {dimension_numbers = #tpu.dot_dimension_numbers<[1], [0], [0], [1], [0, 0, 1, 1], [], []>} : vector<32x32xf32>, vector<32x32xf32>, vector<32x32xf32> -> vector<32x32xf32>
    %186 = arith.mulf %185, %28 : vector<32x32xf32>
    %cst_49 = arith.constant dense<0.000000e+00> : vector<32xf32>
    %187 = vector.multi_reduction <add>, %186, %cst_49 [1] : vector<32x32xf32> to vector<32xf32>
    %188 = vector.shape_cast %187 : vector<32xf32> to vector<32x1xf32>
    %189 = vector.extract_strided_slice %29 {offsets = [17, 0], sizes = [1, 16], strides = [1, 1]} : vector<20x16xf32> to vector<1x16xf32>
    %190 = vector.broadcast %188 : vector<32x1xf32> to vector<32x16xf32>
    %191 = vector.broadcast %189 : vector<1x16xf32> to vector<32x16xf32>
    %192 = arith.mulf %190, %191 : vector<32x16xf32>
    %193 = arith.addf %184, %192 : vector<32x16xf32>
    %cst_50 = arith.constant dense<0.000000e+00> : vector<32x32xf32>
    %194 = tpu.matmul %185, %26, %cst_50 {dimension_numbers = #tpu.dot_dimension_numbers<[1], [0], [0], [1], [0, 0, 1, 1], [], []>} : vector<32x32xf32>, vector<32x32xf32>, vector<32x32xf32> -> vector<32x32xf32>
    %195 = arith.mulf %194, %28 : vector<32x32xf32>
    %cst_51 = arith.constant dense<0.000000e+00> : vector<32xf32>
    %196 = vector.multi_reduction <add>, %195, %cst_51 [1] : vector<32x32xf32> to vector<32xf32>
    %197 = vector.shape_cast %196 : vector<32xf32> to vector<32x1xf32>
    %198 = vector.extract_strided_slice %29 {offsets = [18, 0], sizes = [1, 16], strides = [1, 1]} : vector<20x16xf32> to vector<1x16xf32>
    %199 = vector.broadcast %197 : vector<32x1xf32> to vector<32x16xf32>
    %200 = vector.broadcast %198 : vector<1x16xf32> to vector<32x16xf32>
    %201 = arith.mulf %199, %200 : vector<32x16xf32>
    %202 = arith.addf %193, %201 : vector<32x16xf32>
    %cst_52 = arith.constant dense<0.000000e+00> : vector<32x32xf32>
    %203 = tpu.matmul %194, %26, %cst_52 {dimension_numbers = #tpu.dot_dimension_numbers<[1], [0], [0], [1], [0, 0, 1, 1], [], []>} : vector<32x32xf32>, vector<32x32xf32>, vector<32x32xf32> -> vector<32x32xf32>
    %204 = arith.mulf %203, %28 : vector<32x32xf32>
    %cst_53 = arith.constant dense<0.000000e+00> : vector<32xf32>
    %205 = vector.multi_reduction <add>, %204, %cst_53 [1] : vector<32x32xf32> to vector<32xf32>
    %206 = vector.shape_cast %205 : vector<32xf32> to vector<32x1xf32>
    %207 = vector.extract_strided_slice %29 {offsets = [19, 0], sizes = [1, 16], strides = [1, 1]} : vector<20x16xf32> to vector<1x16xf32>
    %208 = vector.broadcast %206 : vector<32x1xf32> to vector<32x16xf32>
    %209 = vector.broadcast %207 : vector<1x16xf32> to vector<32x16xf32>
    %210 = arith.mulf %208, %209 : vector<32x16xf32>
    %211 = arith.addf %202, %210 : vector<32x16xf32>
    %c0_54 = arith.constant 0 : index
    %c0_55 = arith.constant 0 : index
    %212 = vector.load %arg6[%c0_54, %c0_55] : memref<8x16xf32, #tpu.memory_space<vmem>>, vector<8x16xf32>
    %cst_56 = arith.constant dense<0.000000e+00> : vector<64x16xf32>
    %213 = tpu.matmul %1, %212, %cst_56 {dimension_numbers = #tpu.dot_dimension_numbers<[1], [0], [0], [1], [0, 0, 1, 1], [], []>} : vector<64x8xf32>, vector<8x16xf32>, vector<64x16xf32> -> vector<64x16xf32>
    %c0_57 = arith.constant 0 : index
    %c0_58 = arith.constant 0 : index
    %214 = vector.load %arg7[%c0_57, %c0_58] : memref<1x16xf32, #tpu.memory_space<vmem>>, vector<1x16xf32>
    %215 = vector.broadcast %214 : vector<1x16xf32> to vector<64x16xf32>
    %216 = arith.addf %213, %215 : vector<64x16xf32>
    %cst_59 = arith.constant dense<0.000000e+00> : vector<64x16xf32>
    %217 = tpu.matmul %7, %211, %cst_59 {dimension_numbers = #tpu.dot_dimension_numbers<[0], [0], [1], [1], [0, 1, 1, 1], [], []>} : vector<32x64xf32>, vector<32x16xf32>, vector<64x16xf32> -> vector<64x16xf32>
    %218 = arith.addf %217, %216 : vector<64x16xf32>
    %cst_60 = arith.constant 0.000000e+00 : f32
    %219 = vector.broadcast %cst_60 : f32 to vector<64x16xf32>
    %220 = arith.maximumf %218, %219 : vector<64x16xf32>
    %cst_61 = arith.constant dense<0.000000e+00> : vector<32x16xf32>
    %221 = tpu.matmul %12, %220, %cst_61 {dimension_numbers = #tpu.dot_dimension_numbers<[1], [0], [0], [1], [0, 0, 1, 1], [], []>} : vector<32x64xf32>, vector<64x16xf32>, vector<32x16xf32> -> vector<32x16xf32>
    %cst_62 = arith.constant 1.000000e+00 : f32
    %222 = vector.broadcast %cst_62 : f32 to vector<32x16xf32>
    %223 = arith.mulf %222, %211 : vector<32x16xf32>
    %224 = arith.addf %221, %223 : vector<32x16xf32>
    %c0_63 = arith.constant 0 : index
    %c0_64 = arith.constant 0 : index
    %225 = vector.load %arg8[%c0_63, %c0_64] : memref<16x16xf32, #tpu.memory_space<vmem>>, vector<16x16xf32>
    %cst_65 = arith.constant dense<0.000000e+00> : vector<32x16xf32>
    %226 = tpu.matmul %224, %225, %cst_65 {dimension_numbers = #tpu.dot_dimension_numbers<[1], [0], [0], [1], [0, 0, 1, 1], [], []>} : vector<32x16xf32>, vector<16x16xf32>, vector<32x16xf32> -> vector<32x16xf32>
    %c0_66 = arith.constant 0 : index
    %c0_67 = arith.constant 0 : index
    %227 = vector.load %arg9[%c0_66, %c0_67] : memref<1x16xf32, #tpu.memory_space<vmem>>, vector<1x16xf32>
    %228 = vector.broadcast %227 : vector<1x16xf32> to vector<32x16xf32>
    %229 = arith.addf %226, %228 : vector<32x16xf32>
    %cst_68 = arith.constant 0.000000e+00 : f32
    %230 = vector.broadcast %cst_68 : f32 to vector<32x16xf32>
    %231 = arith.maximumf %229, %230 : vector<32x16xf32>
    %c0_69 = arith.constant 0 : index
    %c0_70 = arith.constant 0 : index
    %232 = vector.load %arg10[%c0_69, %c0_70] : memref<16x16xf32, #tpu.memory_space<vmem>>, vector<16x16xf32>
    %cst_71 = arith.constant dense<0.000000e+00> : vector<32x16xf32>
    %233 = tpu.matmul %231, %232, %cst_71 {dimension_numbers = #tpu.dot_dimension_numbers<[1], [0], [0], [1], [0, 0, 1, 1], [], []>} : vector<32x16xf32>, vector<16x16xf32>, vector<32x16xf32> -> vector<32x16xf32>
    %c0_72 = arith.constant 0 : index
    %c0_73 = arith.constant 0 : index
    %234 = vector.load %arg11[%c0_72, %c0_73] : memref<1x16xf32, #tpu.memory_space<vmem>>, vector<1x16xf32>
    %235 = vector.broadcast %234 : vector<1x16xf32> to vector<32x16xf32>
    %236 = arith.addf %233, %235 : vector<32x16xf32>
    %237 = arith.addf %236, %211 : vector<32x16xf32>
    %c0_74 = arith.constant 0 : index
    %c0_75 = arith.constant 0 : index
    %238 = vector.load %arg12[%c0_74, %c0_75] : memref<1x16xf32, #tpu.memory_space<vmem>>, vector<1x16xf32>
    %239 = vector.broadcast %238 : vector<1x16xf32> to vector<32x16xf32>
    %240 = arith.mulf %237, %239 : vector<32x16xf32>
    %c0_76 = arith.constant 0 : index
    %c0_77 = arith.constant 0 : index
    %241 = vector.load %arg13[%c0_76, %c0_77] : memref<1x16xf32, #tpu.memory_space<vmem>>, vector<1x16xf32>
    %242 = vector.broadcast %241 : vector<1x16xf32> to vector<32x16xf32>
    %243 = arith.addf %240, %242 : vector<32x16xf32>
    %c0_78 = arith.constant 0 : index
    %c0_79 = arith.constant 0 : index
    %244 = vector.load %arg14[%c0_78, %c0_79] : memref<16x48xf32, #tpu.memory_space<vmem>>, vector<16x48xf32>
    %cst_80 = arith.constant dense<0.000000e+00> : vector<32x48xf32>
    %245 = tpu.matmul %211, %244, %cst_80 {dimension_numbers = #tpu.dot_dimension_numbers<[1], [0], [0], [1], [0, 0, 1, 1], [], []>} : vector<32x16xf32>, vector<16x48xf32>, vector<32x48xf32> -> vector<32x48xf32>
    %c0_81 = arith.constant 0 : index
    %c0_82 = arith.constant 0 : index
    %246 = vector.load %arg15[%c0_81, %c0_82] : memref<1x48xf32, #tpu.memory_space<vmem>>, vector<1x48xf32>
    %247 = vector.broadcast %246 : vector<1x48xf32> to vector<32x48xf32>
    %248 = arith.addf %245, %247 : vector<32x48xf32>
    %249 = vector.extract_strided_slice %248 {offsets = [0, 0], sizes = [32, 16], strides = [1, 1]} : vector<32x48xf32> to vector<32x16xf32>
    %250 = vector.extract_strided_slice %248 {offsets = [0, 16], sizes = [32, 16], strides = [1, 1]} : vector<32x48xf32> to vector<32x16xf32>
    %251 = vector.extract_strided_slice %248 {offsets = [0, 32], sizes = [32, 16], strides = [1, 1]} : vector<32x48xf32> to vector<32x16xf32>
    %c0_83 = arith.constant 0 : index
    %c0_84 = arith.constant 0 : index
    %252 = vector.load %arg16[%c0_83, %c0_84] : memref<16x16xf32, #tpu.memory_space<vmem>>, vector<16x16xf32>
    %cst_85 = arith.constant 0.000000e+00 : f32
    %253 = vector.broadcast %cst_85 : f32 to vector<32x16xf32>
    %c0_86 = arith.constant 0 : index
    %c0_87 = arith.constant 0 : index
    %254 = vector.load %arg17[%c0_86, %c0_87] : memref<1x16xf32, #tpu.memory_space<vmem>>, vector<1x16xf32>
    %255 = vector.broadcast %254 : vector<1x16xf32> to vector<32x16xf32>
    %256 = arith.addf %253, %255 : vector<32x16xf32>
    %257 = vector.extract_strided_slice %249 {offsets = [0, 0], sizes = [32, 4], strides = [1, 1]} : vector<32x16xf32> to vector<32x4xf32>
    %258 = vector.extract_strided_slice %250 {offsets = [0, 0], sizes = [32, 4], strides = [1, 1]} : vector<32x16xf32> to vector<32x4xf32>
    %259 = vector.extract_strided_slice %251 {offsets = [0, 0], sizes = [32, 4], strides = [1, 1]} : vector<32x16xf32> to vector<32x4xf32>
    %cst_88 = arith.constant dense<0.000000e+00> : vector<32x32xf32>
    %260 = tpu.matmul %257, %258, %cst_88 {dimension_numbers = #tpu.dot_dimension_numbers<[1], [1], [0], [0], [0, 0, 1, 0], [], []>} : vector<32x4xf32>, vector<32x4xf32>, vector<32x32xf32> -> vector<32x32xf32>
    %cst_89 = arith.constant dense<0xFF800000> : vector<32xf32>
    %261 = vector.multi_reduction <maximumf>, %260, %cst_89 [1] : vector<32x32xf32> to vector<32xf32>
    %262 = vector.shape_cast %261 : vector<32xf32> to vector<32x1xf32>
    %263 = vector.broadcast %262 : vector<32x1xf32> to vector<32x32xf32>
    %264 = arith.subf %260, %263 : vector<32x32xf32>
    %265 = math.exp %264 : vector<32x32xf32>
    %cst_90 = arith.constant dense<0.000000e+00> : vector<32xf32>
    %266 = vector.multi_reduction <add>, %265, %cst_90 [1] : vector<32x32xf32> to vector<32xf32>
    %267 = vector.shape_cast %266 : vector<32xf32> to vector<32x1xf32>
    %268 = tpu.reciprocal %267 {approx = true} : vector<32x1xf32> -> vector<32x1xf32>
    %269 = vector.broadcast %268 : vector<32x1xf32> to vector<32x32xf32>
    %270 = arith.mulf %265, %269 : vector<32x32xf32>
    %cst_91 = arith.constant dense<0.000000e+00> : vector<32x4xf32>
    %271 = tpu.matmul %270, %259, %cst_91 {dimension_numbers = #tpu.dot_dimension_numbers<[1], [0], [0], [1], [0, 0, 1, 1], [], []>} : vector<32x32xf32>, vector<32x4xf32>, vector<32x4xf32> -> vector<32x4xf32>
    %272 = vector.extract_strided_slice %252 {offsets = [0, 0], sizes = [4, 16], strides = [1, 1]} : vector<16x16xf32> to vector<4x16xf32>
    %cst_92 = arith.constant dense<0.000000e+00> : vector<32x16xf32>
    %273 = tpu.matmul %271, %272, %cst_92 {dimension_numbers = #tpu.dot_dimension_numbers<[1], [0], [0], [1], [0, 0, 1, 1], [], []>} : vector<32x4xf32>, vector<4x16xf32>, vector<32x16xf32> -> vector<32x16xf32>
    %274 = arith.addf %256, %273 : vector<32x16xf32>
    %275 = vector.extract_strided_slice %249 {offsets = [0, 4], sizes = [32, 4], strides = [1, 1]} : vector<32x16xf32> to vector<32x4xf32>
    %276 = vector.extract_strided_slice %250 {offsets = [0, 4], sizes = [32, 4], strides = [1, 1]} : vector<32x16xf32> to vector<32x4xf32>
    %277 = vector.extract_strided_slice %251 {offsets = [0, 4], sizes = [32, 4], strides = [1, 1]} : vector<32x16xf32> to vector<32x4xf32>
    %cst_93 = arith.constant dense<0.000000e+00> : vector<32x32xf32>
    %278 = tpu.matmul %275, %276, %cst_93 {dimension_numbers = #tpu.dot_dimension_numbers<[1], [1], [0], [0], [0, 0, 1, 0], [], []>} : vector<32x4xf32>, vector<32x4xf32>, vector<32x32xf32> -> vector<32x32xf32>
    %cst_94 = arith.constant dense<0xFF800000> : vector<32xf32>
    %279 = vector.multi_reduction <maximumf>, %278, %cst_94 [1] : vector<32x32xf32> to vector<32xf32>
    %280 = vector.shape_cast %279 : vector<32xf32> to vector<32x1xf32>
    %281 = vector.broadcast %280 : vector<32x1xf32> to vector<32x32xf32>
    %282 = arith.subf %278, %281 : vector<32x32xf32>
    %283 = math.exp %282 : vector<32x32xf32>
    %cst_95 = arith.constant dense<0.000000e+00> : vector<32xf32>
    %284 = vector.multi_reduction <add>, %283, %cst_95 [1] : vector<32x32xf32> to vector<32xf32>
    %285 = vector.shape_cast %284 : vector<32xf32> to vector<32x1xf32>
    %286 = tpu.reciprocal %285 {approx = true} : vector<32x1xf32> -> vector<32x1xf32>
    %287 = vector.broadcast %286 : vector<32x1xf32> to vector<32x32xf32>
    %288 = arith.mulf %283, %287 : vector<32x32xf32>
    %cst_96 = arith.constant dense<0.000000e+00> : vector<32x4xf32>
    %289 = tpu.matmul %288, %277, %cst_96 {dimension_numbers = #tpu.dot_dimension_numbers<[1], [0], [0], [1], [0, 0, 1, 1], [], []>} : vector<32x32xf32>, vector<32x4xf32>, vector<32x4xf32> -> vector<32x4xf32>
    %290 = vector.extract_strided_slice %252 {offsets = [4, 0], sizes = [4, 16], strides = [1, 1]} : vector<16x16xf32> to vector<4x16xf32>
    %cst_97 = arith.constant dense<0.000000e+00> : vector<32x16xf32>
    %291 = tpu.matmul %289, %290, %cst_97 {dimension_numbers = #tpu.dot_dimension_numbers<[1], [0], [0], [1], [0, 0, 1, 1], [], []>} : vector<32x4xf32>, vector<4x16xf32>, vector<32x16xf32> -> vector<32x16xf32>
    %292 = arith.addf %274, %291 : vector<32x16xf32>
    %293 = vector.extract_strided_slice %249 {offsets = [0, 8], sizes = [32, 4], strides = [1, 1]} : vector<32x16xf32> to vector<32x4xf32>
    %294 = vector.extract_strided_slice %250 {offsets = [0, 8], sizes = [32, 4], strides = [1, 1]} : vector<32x16xf32> to vector<32x4xf32>
    %295 = vector.extract_strided_slice %251 {offsets = [0, 8], sizes = [32, 4], strides = [1, 1]} : vector<32x16xf32> to vector<32x4xf32>
    %cst_98 = arith.constant dense<0.000000e+00> : vector<32x32xf32>
    %296 = tpu.matmul %293, %294, %cst_98 {dimension_numbers = #tpu.dot_dimension_numbers<[1], [1], [0], [0], [0, 0, 1, 0], [], []>} : vector<32x4xf32>, vector<32x4xf32>, vector<32x32xf32> -> vector<32x32xf32>
    %cst_99 = arith.constant dense<0xFF800000> : vector<32xf32>
    %297 = vector.multi_reduction <maximumf>, %296, %cst_99 [1] : vector<32x32xf32> to vector<32xf32>
    %298 = vector.shape_cast %297 : vector<32xf32> to vector<32x1xf32>
    %299 = vector.broadcast %298 : vector<32x1xf32> to vector<32x32xf32>
    %300 = arith.subf %296, %299 : vector<32x32xf32>
    %301 = math.exp %300 : vector<32x32xf32>
    %cst_100 = arith.constant dense<0.000000e+00> : vector<32xf32>
    %302 = vector.multi_reduction <add>, %301, %cst_100 [1] : vector<32x32xf32> to vector<32xf32>
    %303 = vector.shape_cast %302 : vector<32xf32> to vector<32x1xf32>
    %304 = tpu.reciprocal %303 {approx = true} : vector<32x1xf32> -> vector<32x1xf32>
    %305 = vector.broadcast %304 : vector<32x1xf32> to vector<32x32xf32>
    %306 = arith.mulf %301, %305 : vector<32x32xf32>
    %cst_101 = arith.constant dense<0.000000e+00> : vector<32x4xf32>
    %307 = tpu.matmul %306, %295, %cst_101 {dimension_numbers = #tpu.dot_dimension_numbers<[1], [0], [0], [1], [0, 0, 1, 1], [], []>} : vector<32x32xf32>, vector<32x4xf32>, vector<32x4xf32> -> vector<32x4xf32>
    %308 = vector.extract_strided_slice %252 {offsets = [8, 0], sizes = [4, 16], strides = [1, 1]} : vector<16x16xf32> to vector<4x16xf32>
    %cst_102 = arith.constant dense<0.000000e+00> : vector<32x16xf32>
    %309 = tpu.matmul %307, %308, %cst_102 {dimension_numbers = #tpu.dot_dimension_numbers<[1], [0], [0], [1], [0, 0, 1, 1], [], []>} : vector<32x4xf32>, vector<4x16xf32>, vector<32x16xf32> -> vector<32x16xf32>
    %310 = arith.addf %292, %309 : vector<32x16xf32>
    %311 = vector.extract_strided_slice %249 {offsets = [0, 12], sizes = [32, 4], strides = [1, 1]} : vector<32x16xf32> to vector<32x4xf32>
    %312 = vector.extract_strided_slice %250 {offsets = [0, 12], sizes = [32, 4], strides = [1, 1]} : vector<32x16xf32> to vector<32x4xf32>
    %313 = vector.extract_strided_slice %251 {offsets = [0, 12], sizes = [32, 4], strides = [1, 1]} : vector<32x16xf32> to vector<32x4xf32>
    %cst_103 = arith.constant dense<0.000000e+00> : vector<32x32xf32>
    %314 = tpu.matmul %311, %312, %cst_103 {dimension_numbers = #tpu.dot_dimension_numbers<[1], [1], [0], [0], [0, 0, 1, 0], [], []>} : vector<32x4xf32>, vector<32x4xf32>, vector<32x32xf32> -> vector<32x32xf32>
    %cst_104 = arith.constant dense<0xFF800000> : vector<32xf32>
    %315 = vector.multi_reduction <maximumf>, %314, %cst_104 [1] : vector<32x32xf32> to vector<32xf32>
    %316 = vector.shape_cast %315 : vector<32xf32> to vector<32x1xf32>
    %317 = vector.broadcast %316 : vector<32x1xf32> to vector<32x32xf32>
    %318 = arith.subf %314, %317 : vector<32x32xf32>
    %319 = math.exp %318 : vector<32x32xf32>
    %cst_105 = arith.constant dense<0.000000e+00> : vector<32xf32>
    %320 = vector.multi_reduction <add>, %319, %cst_105 [1] : vector<32x32xf32> to vector<32xf32>
    %321 = vector.shape_cast %320 : vector<32xf32> to vector<32x1xf32>
    %322 = tpu.reciprocal %321 {approx = true} : vector<32x1xf32> -> vector<32x1xf32>
    %323 = vector.broadcast %322 : vector<32x1xf32> to vector<32x32xf32>
    %324 = arith.mulf %319, %323 : vector<32x32xf32>
    %cst_106 = arith.constant dense<0.000000e+00> : vector<32x4xf32>
    %325 = tpu.matmul %324, %313, %cst_106 {dimension_numbers = #tpu.dot_dimension_numbers<[1], [0], [0], [1], [0, 0, 1, 1], [], []>} : vector<32x32xf32>, vector<32x4xf32>, vector<32x4xf32> -> vector<32x4xf32>
    %326 = vector.extract_strided_slice %252 {offsets = [12, 0], sizes = [4, 16], strides = [1, 1]} : vector<16x16xf32> to vector<4x16xf32>
    %cst_107 = arith.constant dense<0.000000e+00> : vector<32x16xf32>
    %327 = tpu.matmul %325, %326, %cst_107 {dimension_numbers = #tpu.dot_dimension_numbers<[1], [0], [0], [1], [0, 0, 1, 1], [], []>} : vector<32x4xf32>, vector<4x16xf32>, vector<32x16xf32> -> vector<32x16xf32>
    %328 = arith.addf %310, %327 : vector<32x16xf32>
    %329 = arith.addf %328, %211 : vector<32x16xf32>
    %c0_108 = arith.constant 0 : index
    %c0_109 = arith.constant 0 : index
    %330 = vector.load %arg18[%c0_108, %c0_109] : memref<1x16xf32, #tpu.memory_space<vmem>>, vector<1x16xf32>
    %331 = vector.broadcast %330 : vector<1x16xf32> to vector<32x16xf32>
    %332 = arith.mulf %329, %331 : vector<32x16xf32>
    %c0_110 = arith.constant 0 : index
    %c0_111 = arith.constant 0 : index
    %333 = vector.load %arg19[%c0_110, %c0_111] : memref<1x16xf32, #tpu.memory_space<vmem>>, vector<1x16xf32>
    %334 = vector.broadcast %333 : vector<1x16xf32> to vector<32x16xf32>
    %335 = arith.addf %332, %334 : vector<32x16xf32>
    %336 = arith.addf %243, %335 : vector<32x16xf32>
    %c0_112 = arith.constant 0 : index
    %c0_113 = arith.constant 0 : index
    %337 = vector.load %arg20[%c0_112, %c0_113] : memref<16x32xf32, #tpu.memory_space<vmem>>, vector<16x32xf32>
    %cst_114 = arith.constant dense<0.000000e+00> : vector<32x32xf32>
    %338 = tpu.matmul %336, %337, %cst_114 {dimension_numbers = #tpu.dot_dimension_numbers<[1], [0], [0], [1], [0, 0, 1, 1], [], []>} : vector<32x16xf32>, vector<16x32xf32>, vector<32x32xf32> -> vector<32x32xf32>
    %c0_115 = arith.constant 0 : index
    %c0_116 = arith.constant 0 : index
    %339 = vector.load %arg21[%c0_115, %c0_116] : memref<1x32xf32, #tpu.memory_space<vmem>>, vector<1x32xf32>
    %340 = vector.broadcast %339 : vector<1x32xf32> to vector<32x32xf32>
    %341 = arith.addf %338, %340 : vector<32x32xf32>
    %cst_117 = arith.constant 0.000000e+00 : f32
    %342 = vector.broadcast %cst_117 : f32 to vector<32x32xf32>
    %343 = arith.maximumf %341, %342 : vector<32x32xf32>
    %c0_118 = arith.constant 0 : index
    %c0_119 = arith.constant 0 : index
    %344 = vector.load %arg22[%c0_118, %c0_119] : memref<32x16xf32, #tpu.memory_space<vmem>>, vector<32x16xf32>
    %cst_120 = arith.constant dense<0.000000e+00> : vector<32x16xf32>
    %345 = tpu.matmul %343, %344, %cst_120 {dimension_numbers = #tpu.dot_dimension_numbers<[1], [0], [0], [1], [0, 0, 1, 1], [], []>} : vector<32x32xf32>, vector<32x16xf32>, vector<32x16xf32> -> vector<32x16xf32>
    %c0_121 = arith.constant 0 : index
    %c0_122 = arith.constant 0 : index
    %346 = vector.load %arg23[%c0_121, %c0_122] : memref<1x16xf32, #tpu.memory_space<vmem>>, vector<1x16xf32>
    %347 = vector.broadcast %346 : vector<1x16xf32> to vector<32x16xf32>
    %348 = arith.addf %345, %347 : vector<32x16xf32>
    %349 = arith.addf %336, %348 : vector<32x16xf32>
    %c0_123 = arith.constant 0 : index
    %c0_124 = arith.constant 0 : index
    %350 = vector.load %arg24[%c0_123, %c0_124] : memref<1x16xf32, #tpu.memory_space<vmem>>, vector<1x16xf32>
    %351 = vector.broadcast %350 : vector<1x16xf32> to vector<32x16xf32>
    %352 = arith.mulf %349, %351 : vector<32x16xf32>
    %c0_125 = arith.constant 0 : index
    %c0_126 = arith.constant 0 : index
    %353 = vector.load %arg25[%c0_125, %c0_126] : memref<1x16xf32, #tpu.memory_space<vmem>>, vector<1x16xf32>
    %354 = vector.broadcast %353 : vector<1x16xf32> to vector<32x16xf32>
    %355 = arith.addf %352, %354 : vector<32x16xf32>
    %c0_127 = arith.constant 0 : index
    %c0_128 = arith.constant 0 : index
    %356 = vector.load %arg26[%c0_127, %c0_128] : memref<32x16xf32, #tpu.memory_space<vmem>>, vector<32x16xf32>
    tpu.vector_store %arg26[%c0_127, %c0_128], %355 {strides = array<i32>} : memref<32x16xf32, #tpu.memory_space<vmem>>, vector<32x16xf32>,
    return
  }
}

</mosaic_0001>

<llo_original>
// kernel: homo_molecule_gnn_gps_forward.1
$region0: #{homo_molecule_gnn_gps_forward.1}
  #allocation0 [shape = 'u32[]', space=smem, size = 0x4, offset = 0x4, fixed_abs, tag = 'smem constant byte address 0x4 - core index']
  #allocation1 [shape = 'u32[144,128]{1,0:T(1,128)}', space=vmem, size = 0x12000, scoped, tag = 'internal scratch']
  %s0 = inlined_call_operand.vmem [shape: f32[32,16], index: 0, kind: input, shape index: {}]
  %s1 = inlined_call_operand.vmem [shape: f32[64,8], index: 1, kind: input, shape index: {}]
  %s2 = inlined_call_operand.vmem [shape: s32[1,64], index: 2, kind: input, shape index: {}]
  %s3 = inlined_call_operand.vmem [shape: s32[1,64], index: 3, kind: input, shape index: {}]
  %s4 = inlined_call_operand.vmem [shape: f32[20,16], index: 4, kind: input, shape index: {}]
  %s5 = inlined_call_operand.vmem [shape: f32[1,16], index: 5, kind: input, shape index: {}]
  %s6 = inlined_call_operand.vmem [shape: f32[8,16], index: 6, kind: input, shape index: {}]
  %s7 = inlined_call_operand.vmem [shape: f32[1,16], index: 7, kind: input, shape index: {}]
  %s8 = inlined_call_operand.vmem [shape: f32[16,16], index: 8, kind: input, shape index: {}]
  %s9 = inlined_call_operand.vmem [shape: f32[1,16], index: 9, kind: input, shape index: {}]
  %s10 = inlined_call_operand.vmem [shape: f32[16,16], index: 10, kind: input, shape index: {}]
  %s11 = inlined_call_operand.vmem [shape: f32[1,16], index: 11, kind: input, shape index: {}]
  %s12 = inlined_call_operand.vmem [shape: f32[1,16], index: 12, kind: input, shape index: {}]
  %s13 = inlined_call_operand.vmem [shape: f32[1,16], index: 13, kind: input, shape index: {}]
  %s14 = inlined_call_operand.vmem [shape: f32[16,48], index: 14, kind: input, shape index: {}]
  %s15 = inlined_call_operand.vmem [shape: f32[1,48], index: 15, kind: input, shape index: {}]
  %s16 = inlined_call_operand.vmem [shape: f32[16,16], index: 16, kind: input, shape index: {}]
  %s17 = inlined_call_operand.vmem [shape: f32[1,16], index: 17, kind: input, shape index: {}]
  %s18 = inlined_call_operand.vmem [shape: f32[1,16], index: 18, kind: input, shape index: {}]
  %s19 = inlined_call_operand.vmem [shape: f32[1,16], index: 19, kind: input, shape index: {}]
  %s20 = inlined_call_operand.vmem [shape: f32[16,32], index: 20, kind: input, shape index: {}]
  %s21 = inlined_call_operand.vmem [shape: f32[1,32], index: 21, kind: input, shape index: {}]
  %s22 = inlined_call_operand.vmem [shape: f32[32,16], index: 22, kind: input, shape index: {}]
  %s23 = inlined_call_operand.vmem [shape: f32[1,16], index: 23, kind: input, shape index: {}]
  %s24 = inlined_call_operand.vmem [shape: f32[1,16], index: 24, kind: input, shape index: {}]
  %s25 = inlined_call_operand.vmem [shape: f32[1,16], index: 25, kind: input, shape index: {}]
  %s26 = inlined_call_operand.vmem [shape: f32[32,16], index: 26, kind: output, shape index: {}]
  %s27 = sld [smem:[#allocation0]]
  $region114: #{homo_molecule_gnn_gps_forward.1} parent=0
    _
  %s29 = ssub.s32 1, %s27
  %s30 = scalar_select 0, %s29, %s27
  // Predicated region
  $region2: #{homo_molecule_gnn_gps_forward.1} parent=0 // pred_check
    _
  $region3: #{homo_molecule_gnn_gps_forward.1} parent=0 // pred_check_branch
    %32 = sbr.rel (0) target = $region5
  $region4: #{homo_molecule_gnn_gps_forward.1} parent=0 // pred_region
    _
  $region5: #{homo_molecule_gnn_gps_forward.1} parent=0 // pred_fallthru
    _
  // Predicated region
  $region6: #{homo_molecule_gnn_gps_forward.1} parent=0 // pred_check
    _
  $region7: #{homo_molecule_gnn_gps_forward.1} parent=0 // pred_check_branch
    %34 = sbr.rel (0) target = $region9
  $region8: #{homo_molecule_gnn_gps_forward.1} parent=0 // pred_region
    _
  $region9: #{homo_molecule_gnn_gps_forward.1} parent=0 // pred_fallthru
    _
  // Predicated region
  $region10: #{homo_molecule_gnn_gps_forward.1} parent=0 // pred_check
    _
  $region11: #{homo_molecule_gnn_gps_forward.1} parent=0 // pred_check_branch
    %36 = sbr.rel (0) target = $region13
  $region12: #{homo_molecule_gnn_gps_forward.1} parent=0 // pred_region
    _
  $region13: #{homo_molecule_gnn_gps_forward.1} parent=0 // pred_fallthru
    _
  // Predicated region
  $region14: #{homo_molecule_gnn_gps_forward.1} parent=0 // pred_check
    _
  $region15: #{homo_molecule_gnn_gps_forward.1} parent=0 // pred_check_branch
    %38 = sbr.rel (0) target = $region17
  $region16: #{homo_molecule_gnn_gps_forward.1} parent=0 // pred_region
    _
  $region17: #{homo_molecule_gnn_gps_forward.1} parent=0 // pred_fallthru
    _
  // Predicated region
  $region18: #{homo_molecule_gnn_gps_forward.1} parent=0 // pred_check
    _
  $region19: #{homo_molecule_gnn_gps_forward.1} parent=0 // pred_check_branch
    %40 = sbr.rel (0) target = $region21
  $region20: #{homo_molecule_gnn_gps_forward.1} parent=0 // pred_region
    _
  $region21: #{homo_molecule_gnn_gps_forward.1} parent=0 // pred_fallthru
    _
  // Predicated region
  $region22: #{homo_molecule_gnn_gps_forward.1} parent=0 // pred_check
    _
  $region23: #{homo_molecule_gnn_gps_forward.1} parent=0 // pred_check_branch
    %42 = sbr.rel (0) target = $region25
  $region24: #{homo_molecule_gnn_gps_forward.1} parent=0 // pred_region
    _
  $region25: #{homo_molecule_gnn_gps_forward.1} parent=0 // pred_fallthru
    _
  // Predicated region
  $region26: #{homo_molecule_gnn_gps_forward.1} parent=0 // pred_check
    _
  $region27: #{homo_molecule_gnn_gps_forward.1} parent=0 // pred_check_branch
    %44 = sbr.rel (0) target = $region29
  $region28: #{homo_molecule_gnn_gps_forward.1} parent=0 // pred_region
    _
  $region29: #{homo_molecule_gnn_gps_forward.1} parent=0 // pred_fallthru
    _
  // Predicated region
  $region30: #{homo_molecule_gnn_gps_forward.1} parent=0 // pred_check
    _
  $region31: #{homo_molecule_gnn_gps_forward.1} parent=0 // pred_check_branch
    %46 = sbr.rel (0) target = $region33
  $region32: #{homo_molecule_gnn_gps_forward.1} parent=0 // pred_region
    _
  $region33: #{homo_molecule_gnn_gps_forward.1} parent=0 // pred_fallthru
    _
  // Predicated region
  $region34: #{homo_molecule_gnn_gps_forward.1} parent=0 // pred_check
    _
  $region35: #{homo_molecule_gnn_gps_forward.1} parent=0 // pred_check_branch
    %48 = sbr.rel (0) target = $region37
  $region36: #{homo_molecule_gnn_gps_forward.1} parent=0 // pred_region
    _
  $region37: #{homo_molecule_gnn_gps_forward.1} parent=0 // pred_fallthru
    _
  // Predicated region
  $region38: #{homo_molecule_gnn_gps_forward.1} parent=0 // pred_check
    _
  $region39: #{homo_molecule_gnn_gps_forward.1} parent=0 // pred_check_branch
    %50 = sbr.rel (0) target = $region41
  $region40: #{homo_molecule_gnn_gps_forward.1} parent=0 // pred_region
    _
  $region41: #{homo_molecule_gnn_gps_forward.1} parent=0 // pred_fallthru
    _
  // Predicated region
  $region42: #{homo_molecule_gnn_gps_forward.1} parent=0 // pred_check
    _
  $region43: #{homo_molecule_gnn_gps_forward.1} parent=0 // pred_check_branch
    %52 = sbr.rel (0) target = $region45
  $region44: #{homo_molecule_gnn_gps_forward.1} parent=0 // pred_region
    _
  $region45: #{homo_molecule_gnn_gps_forward.1} parent=0 // pred_fallthru
    _
  // Predicated region
  $region46: #{homo_molecule_gnn_gps_forward.1} parent=0 // pred_check
    _
  $region47: #{homo_molecule_gnn_gps_forward.1} parent=0 // pred_check_branch
    %54 = sbr.rel (0) target = $region49
  $region48: #{homo_molecule_gnn_gps_forward.1} parent=0 // pred_region
    _
  $region49: #{homo_molecule_gnn_gps_forward.1} parent=0 // pred_fallthru
    _
  // Predicated region
  $region50: #{homo_molecule_gnn_gps_forward.1} parent=0 // pred_check
    _
  $region51: #{homo_molecule_gnn_gps_forward.1} parent=0 // pred_check_branch
    %56 = sbr.rel (0) target = $region53
  $region52: #{homo_molecule_gnn_gps_forward.1} parent=0 // pred_region
    _
  $region53: #{homo_molecule_gnn_gps_forward.1} parent=0 // pred_fallthru
    _
  // Predicated region
  $region54: #{homo_molecule_gnn_gps_forward.1} parent=0 // pred_check
    _
  $region55: #{homo_molecule_gnn_gps_forward.1} parent=0 // pred_check_branch
    %58 = sbr.rel (0) target = $region57
  $region56: #{homo_molecule_gnn_gps_forward.1} parent=0 // pred_region
    _
  $region57: #{homo_molecule_gnn_gps_forward.1} parent=0 // pred_fallthru
    _
  // Predicated region
  $region58: #{homo_molecule_gnn_gps_forward.1} parent=0 // pred_check
    _
  $region59: #{homo_molecule_gnn_gps_forward.1} parent=0 // pred_check_branch
    %60 = sbr.rel (0) target = $region61
  $region60: #{homo_molecule_gnn_gps_forward.1} parent=0 // pred_region
    _
  $region61: #{homo_molecule_gnn_gps_forward.1} parent=0 // pred_fallthru
    _
  // Predicated region
  $region62: #{homo_molecule_gnn_gps_forward.1} parent=0 // pred_check
    _
  $region63: #{homo_molecule_gnn_gps_forward.1} parent=0 // pred_check_branch
    %62 = sbr.rel (0) target = $region65
  $region64: #{homo_molecule_gnn_gps_forward.1} parent=0 // pred_region
    _
  $region65: #{homo_molecule_gnn_gps_forward.1} parent=0 // pred_fallthru
    _
  // Predicated region
  $region66: #{homo_molecule_gnn_gps_forward.1} parent=0 // pred_check
    _
  $region67: #{homo_molecule_gnn_gps_forward.1} parent=0 // pred_check_branch
    %64 = sbr.rel (0) target = $region69
  $region68: #{homo_molecule_gnn_gps_forward.1} parent=0 // pred_region
    _
  $region69: #{homo_molecule_gnn_gps_forward.1} parent=0 // pred_fallthru
    _
  // Predicated region
  $region70: #{homo_molecule_gnn_gps_forward.1} parent=0 // pred_check
    _
  $region71: #{homo_molecule_gnn_gps_forward.1} parent=0 // pred_check_branch
    %66 = sbr.rel (0) target = $region73
  $region72: #{homo_molecule_gnn_gps_forward.1} parent=0 // pred_region
    _
  $region73: #{homo_molecule_gnn_gps_forward.1} parent=0 // pred_fallthru
    _
  // Predicated region
  $region74: #{homo_molecule_gnn_gps_forward.1} parent=0 // pred_check
    _
  $region75: #{homo_molecule_gnn_gps_forward.1} parent=0 // pred_check_branch
    %68 = sbr.rel (0) target = $region77
  $region76: #{homo_molecule_gnn_gps_forward.1} parent=0 // pred_region
    _
  $region77: #{homo_molecule_gnn_gps_forward.1} parent=0 // pred_fallthru
    _
  // Predicated region
  $region78: #{homo_molecule_gnn_gps_forward.1} parent=0 // pred_check
    _
  $region79: #{homo_molecule_gnn_gps_forward.1} parent=0 // pred_check_branch
    %70 = sbr.rel (0) target = $region81
  $region80: #{homo_molecule_gnn_gps_forward.1} parent=0 // pred_region
    _
  $region81: #{homo_molecule_gnn_gps_forward.1} parent=0 // pred_fallthru
    _
  // Predicated region
  $region82: #{homo_molecule_gnn_gps_forward.1} parent=0 // pred_check
    _
  $region83: #{homo_molecule_gnn_gps_forward.1} parent=0 // pred_check_branch
    %72 = sbr.rel (0) target = $region85
  $region84: #{homo_molecule_gnn_gps_forward.1} parent=0 // pred_region
    _
  $region85: #{homo_molecule_gnn_gps_forward.1} parent=0 // pred_fallthru
    _
  // Predicated region
  $region86: #{homo_molecule_gnn_gps_forward.1} parent=0 // pred_check
    _
  $region87: #{homo_molecule_gnn_gps_forward.1} parent=0 // pred_check_branch
    %74 = sbr.rel (0) target = $region89
  $region88: #{homo_molecule_gnn_gps_forward.1} parent=0 // pred_region
    _
  $region89: #{homo_molecule_gnn_gps_forward.1} parent=0 // pred_fallthru
    _
  // Predicated region
  $region90: #{homo_molecule_gnn_gps_forward.1} parent=0 // pred_check
    _
  $region91: #{homo_molecule_gnn_gps_forward.1} parent=0 // pred_check_branch
    %76 = sbr.rel (0) target = $region93
  $region92: #{homo_molecule_gnn_gps_forward.1} parent=0 // pred_region
    _
  $region93: #{homo_molecule_gnn_gps_forward.1} parent=0 // pred_fallthru
    _
  // Predicated region
  $region94: #{homo_molecule_gnn_gps_forward.1} parent=0 // pred_check
    _
  $region95: #{homo_molecule_gnn_gps_forward.1} parent=0 // pred_check_branch
    %78 = sbr.rel (0) target = $region97
  $region96: #{homo_molecule_gnn_gps_forward.1} parent=0 // pred_region
    _
  $region97: #{homo_molecule_gnn_gps_forward.1} parent=0 // pred_fallthru
    _
  // Predicated region
  $region98: #{homo_molecule_gnn_gps_forward.1} parent=0 // pred_check
    _
  $region99: #{homo_molecule_gnn_gps_forward.1} parent=0 // pred_check_branch
    %80 = sbr.rel (0) target = $region101
  $region100: #{homo_molecule_gnn_gps_forward.1} parent=0 // pred_region
    _
  $region101: #{homo_molecule_gnn_gps_forward.1} parent=0 // pred_fallthru
    _
  // Predicated region
  $region102: #{homo_molecule_gnn_gps_forward.1} parent=0 // pred_check
    _
  $region103: #{homo_molecule_gnn_gps_forward.1} parent=0 // pred_check_branch
    %82 = sbr.rel (0) target = $region105
  $region104: #{homo_molecule_gnn_gps_forward.1} parent=0 // pred_region
    _
  $region105: #{homo_molecule_gnn_gps_forward.1} parent=0 // pred_fallthru
    _
  %v83 = vld [vmem:[%s0] sm:$0xff]
  %v84 = vld [vmem:[%s0 + $0x8] sm:$0xff]
  %v85 = vld [vmem:[%s0 + $0x10] sm:$0xff]
  %v86 = vld [vmem:[%s0 + $0x18] sm:$0xff]
  %v87 = vld [vmem:[%s1] sm:$0xff]
  %v88 = vld [vmem:[%s1 + $0x8] sm:$0xff]
  %v89 = vld [vmem:[%s1 + $0x10] sm:$0xff]
  %v90 = vld [vmem:[%s1 + $0x18] sm:$0xff]
  %v91 = vld [vmem:[%s1 + $0x20] sm:$0xff]
  %v92 = vld [vmem:[%s1 + $0x28] sm:$0xff]
  %v93 = vld [vmem:[%s1 + $0x30] sm:$0xff]
  %v94 = vld [vmem:[%s1 + $0x38] sm:$0xff]
  %v95 = vlaneseq
  %v96 = vshrl.u32 %v95, 7
  %v97 = vadd.s32 %v96, 8
  %v98 = vadd.s32 %v96, 16
  %v99 = vadd.s32 %v96, 24
  %v100 = vld [vmem:[%s2] sm:$0x1]
  %v101 = vlaneseq
  %v102 = vshrl.u32 %v101, 7
  %v103 = vsub.s32 0, %v102
  %v104 = vrot.slane %v100, %v103
  %vm105 = vcmp.eq.s32.totalorder %v96, %v104
  %vm106 = vcmp.eq.s32.totalorder %v97, %v104
  %vm107 = vcmp.eq.s32.totalorder %v98, %v104
  %vm108 = vcmp.eq.s32.totalorder %v99, %v104
  %v109 = vsel %vm105, 1, 0
  %v110 = vsel %vm106, 1, 0
  %v111 = vsel %vm107, 1, 0
  %v112 = vsel %vm108, 1, 0
  %v113 = vcvt.s32.f32 %v109
  %v114 = vcvt.s32.f32 %v110
  %v115 = vcvt.s32.f32 %v111
  %v116 = vcvt.s32.f32 %v112
  %v117 = vld [vmem:[%s3] sm:$0x1]
  %v118 = vlaneseq
  %v119 = vshrl.u32 %v118, 7
  %v120 = vsub.s32 0, %v119
  %v121 = vrot.slane %v117, %v120
  %vm122 = vcmp.eq.s32.totalorder %v96, %v121
  %vm123 = vcmp.eq.s32.totalorder %v97, %v121
  %vm124 = vcmp.eq.s32.totalorder %v98, %v121
  %vm125 = vcmp.eq.s32.totalorder %v99, %v121
  %v126 = vsel %vm122, 1, 0
  %v127 = vsel %vm123, 1, 0
  %v128 = vsel %vm124, 1, 0
  %v129 = vsel %vm125, 1, 0
  %v130 = vcvt.s32.f32 %v126
  %v131 = vcvt.s32.f32 %v127
  %v132 = vcvt.s32.f32 %v128
  %v133 = vcvt.s32.f32 %v129
  %vm134 = vcmask 523264
  %v136 = vsel %vm134, %v113, 0
  %v139 = vsel %vm134, %v114, 0
  %v142 = vsel %vm134, %v115, 0
  %v145 = vsel %vm134, %v116, 0
  %v148 = vsel %vm134, %v130, 0
  %v151 = vsel %vm134, %v131, 0
  %v154 = vsel %vm134, %v132, 0
  %v157 = vsel %vm134, %v133, 0
  %159 = vmatprep.subr.mxu0 0.0
  %160 = vmatpush1.xpose.msra.mxu0 0.0
  %161 = vmatprep.subr.mxu0 0.0
  %162 = vmatpush1.xpose.msra.mxu0 0.0
  %163 = vmatprep.subr.mxu0 0.0
  %164 = vmatpush1.xpose.msra.mxu0 0.0
  %165 = vmatprep.subr.mxu0 0.0
  %166 = vmatpush1.xpose.msra.mxu0 0.0
  %167 = vmatprep.subr.mxu0 0.0
  %168 = vmatpush1.xpose.msra.mxu0 0.0
  %169 = vmatprep.subr.mxu0 0.0
  %170 = vmatpush1.xpose.msra.mxu0 0.0
  %171 = vmatprep.subr.mxu0 0.0
  %172 = vmatpush1.xpose.msra.mxu0 0.0
  %173 = vmatprep.subr.mxu0 0.0
  %174 = vmatpush1.xpose.msra.mxu0 0.0
  %175 = vmatprep.subr.mxu0 0.0
  %176 = vmatpush1.xpose.msra.mxu0 0.0
  %177 = vmatprep.subr.mxu0 0.0
  %178 = vmatpush1.xpose.msra.mxu0 0.0
  %179 = vmatprep.subr.mxu0 0.0
  %180 = vmatpush1.xpose.msra.mxu0 0.0
  %181 = vmatprep.subr.mxu0 0.0
  %182 = vmatpush1.xpose.msra.mxu0 0.0
  %183 = vmatprep.subr.mxu0 0.0
  %184 = vmatpush1.xpose.msra.mxu0 %v157
  %185 = vmatprep.subr.mxu0 0.0
  %186 = vmatpush1.xpose.msra.mxu0 %v154
  %187 = vmatprep.subr.mxu0 0.0
  %188 = vmatpush1.xpose.msra.mxu0 %v151
  %189 = vmatprep.subr.mxu0 0.0
  %190 = vmatpush1.xpose.msra.mxu0 %v148
  %191 = vmatprep.subr.mxu0 0.0
  %192 = vmatpush2.xpose.msra.mxu0 0.0
  %193 = vmatprep.subr.mxu0 0.0
  %194 = vmatpush2.xpose.msra.mxu0 0.0
  %195 = vmatprep.subr.mxu0 0.0
  %196 = vmatpush2.xpose.msra.mxu0 0.0
  %197 = vmatprep.subr.mxu0 0.0
  %198 = vmatpush2.xpose.msra.mxu0 0.0
  %199 = vmatprep.subr.mxu0 0.0
  %200 = vmatpush2.xpose.msra.mxu0 0.0
  %201 = vmatprep.subr.mxu0 0.0
  %202 = vmatpush2.xpose.msra.mxu0 0.0
  %203 = vmatprep.subr.mxu0 0.0
  %204 = vmatpush2.xpose.msra.mxu0 0.0
  %205 = vmatprep.subr.mxu0 0.0
  %206 = vmatpush2.xpose.msra.mxu0 0.0
  %207 = vmatprep.subr.mxu0 0.0
  %208 = vmatpush2.xpose.msra.mxu0 0.0
  %209 = vmatprep.subr.mxu0 0.0
  %210 = vmatpush2.xpose.msra.mxu0 0.0
  %211 = vmatprep.subr.mxu0 0.0
  %212 = vmatpush2.xpose.msra.mxu0 0.0
  %213 = vmatprep.subr.mxu0 0.0
  %214 = vmatpush2.xpose.msra.mxu0 0.0
  %215 = vmatprep.subr.mxu0 0.0
  %216 = vmatpush2.xpose.msra.mxu0 0.0
  %217 = vmatprep.subr.mxu0 0.0
  %218 = vmatpush2.xpose.msra.mxu0 0.0
  %219 = vmatprep.subr.mxu0 0.0
  %220 = vmatpush2.xpose.msra.mxu0 0.0
  %221 = vmatprep.subr.mxu0 0.0
  %222 = vmatpush2.xpose.msra.mxu0 0.0
  %223 = vmatprep.mubr.f32.mxu0 0.0
  %224 = vmatmul.mubr.f32.gmra.mxu0 %v136
  %v225 = vpop.f32.mrf.mxu0
  %v226 = vadd.f32 0.0, %v225
  %v227 = vpop.f32.mrf.mxu0
  %228 = vmatprep.mubr.f32.mxu0 0.0
  %229 = vmatmul.mubr.f32.gmra.mxu0 %v139
  %v230 = vpop.f32.mrf.mxu0
  %v231 = vadd.f32 0.0, %v230
  %v232 = vpop.f32.mrf.mxu0
  %233 = vmatprep.mubr.f32.mxu0 0.0
  %234 = vmatmul.mubr.f32.gmra.mxu0 %v142
  %v235 = vpop.f32.mrf.mxu0
  %v236 = vadd.f32 0.0, %v235
  %v237 = vpop.f32.mrf.mxu0
  %238 = vmatprep.mubr.f32.mxu0 0.0
  %239 = vmatmul.mubr.f32.gmra.mxu0 %v145
  %v240 = vpop.f32.mrf.mxu0
  %v241 = vadd.f32 0.0, %v240
  %v242 = vpop.f32.mrf.mxu0
  %243 = vdwg.mxu0
  %244 = vmatprep.subr.mxu0 0.0
  %245 = vmatpush1.xpose.msra.mxu0 0.0
  %246 = vmatprep.subr.mxu0 0.0
  %247 = vmatpush1.xpose.msra.mxu0 0.0
  %248 = vmatprep.subr.mxu0 0.0
  %249 = vmatpush1.xpose.msra.mxu0 0.0
  %250 = vmatprep.subr.mxu0 0.0
  %251 = vmatpush1.xpose.msra.mxu0 0.0
  %252 = vmatprep.subr.mxu0 0.0
  %253 = vmatpush1.xpose.msra.mxu0 0.0
  %254 = vmatprep.subr.mxu0 0.0
  %255 = vmatpush1.xpose.msra.mxu0 0.0
  %256 = vmatprep.subr.mxu0 0.0
  %257 = vmatpush1.xpose.msra.mxu0 0.0
  %258 = vmatprep.subr.mxu0 0.0
  %259 = vmatpush1.xpose.msra.mxu0 0.0
  %260 = vmatprep.subr.mxu0 0.0
  %261 = vmatpush1.xpose.msra.mxu0 0.0
  %262 = vmatprep.subr.mxu0 0.0
  %263 = vmatpush1.xpose.msra.mxu0 0.0
  %264 = vmatprep.subr.mxu0 0.0
  %265 = vmatpush1.xpose.msra.mxu0 0.0
  %266 = vmatprep.subr.mxu0 0.0
  %267 = vmatpush1.xpose.msra.mxu0 0.0
  %268 = vmatprep.subr.mxu0 0.0
  %269 = vmatpush1.xpose.msra.mxu0 %v145
  %270 = vmatprep.subr.mxu0 0.0
  %271 = vmatpush1.xpose.msra.mxu0 %v142
  %272 = vmatprep.subr.mxu0 0.0
  %273 = vmatpush1.xpose.msra.mxu0 %v139
  %274 = vmatprep.subr.mxu0 0.0
  %275 = vmatpush1.xpose.msra.mxu0 %v136
  %276 = vmatprep.subr.mxu0 0.0
  %277 = vmatpush2.xpose.msra.mxu0 0.0
  %278 = vmatprep.subr.mxu0 0.0
  %279 = vmatpush2.xpose.msra.mxu0 0.0
  %280 = vmatprep.subr.mxu0 0.0
  %281 = vmatpush2.xpose.msra.mxu0 0.0
  %282 = vmatprep.subr.mxu0 0.0
  %283 = vmatpush2.xpose.msra.mxu0 0.0
  %284 = vmatprep.subr.mxu0 0.0
  %285 = vmatpush2.xpose.msra.mxu0 0.0
  %286 = vmatprep.subr.mxu0 0.0
  %287 = vmatpush2.xpose.msra.mxu0 0.0
  %288 = vmatprep.subr.mxu0 0.0
  %289 = vmatpush2.xpose.msra.mxu0 0.0
  %290 = vmatprep.subr.mxu0 0.0
  %291 = vmatpush2.xpose.msra.mxu0 0.0
  %292 = vmatprep.subr.mxu0 0.0
  %293 = vmatpush2.xpose.msra.mxu0 0.0
  %294 = vmatprep.subr.mxu0 0.0
  %295 = vmatpush2.xpose.msra.mxu0 0.0
  %296 = vmatprep.subr.mxu0 0.0
  %297 = vmatpush2.xpose.msra.mxu0 0.0
  %298 = vmatprep.subr.mxu0 0.0
  %299 = vmatpush2.xpose.msra.mxu0 0.0
  %300 = vmatprep.subr.mxu0 0.0
  %301 = vmatpush2.xpose.msra.mxu0 0.0
  %302 = vmatprep.subr.mxu0 0.0
  %303 = vmatpush2.xpose.msra.mxu0 0.0
  %304 = vmatprep.subr.mxu0 0.0
  %305 = vmatpush2.xpose.msra.mxu0 0.0
  %306 = vmatprep.subr.mxu0 0.0
  %307 = vmatpush2.xpose.msra.mxu0 0.0
  %308 = vmatprep.mubr.f32.mxu0 0.0
  %309 = vmatmul.mubr.f32.gmra.mxu0 %v148
  %v310 = vpop.f32.mrf.mxu0
  %v311 = vadd.f32 0.0, %v310
  %v312 = vpop.f32.mrf.mxu0
  %313 = vmatprep.mubr.f32.mxu0 0.0
  %314 = vmatmul.mubr.f32.gmra.mxu0 %v151
  %v315 = vpop.f32.mrf.mxu0
  %v316 = vadd.f32 0.0, %v315
  %v317 = vpop.f32.mrf.mxu0
  %318 = vmatprep.mubr.f32.mxu0 0.0
  %319 = vmatmul.mubr.f32.gmra.mxu0 %v154
  %v320 = vpop.f32.mrf.mxu0
  %v321 = vadd.f32 0.0, %v320
  %v322 = vpop.f32.mrf.mxu0
  %323 = vmatprep.mubr.f32.mxu0 0.0
  %324 = vmatmul.mubr.f32.gmra.mxu0 %v157
  %v325 = vpop.f32.mrf.mxu0
  %v326 = vadd.f32 0.0, %v325
  %v327 = vpop.f32.mrf.mxu0
  %328 = vdwg.mxu0
  %vm329 = vcmask 261120
  %v330 = vsel %vm329, %v226, 0.0
  %331 = vadd.xlane.f32.xlu0 %v330
  %v332 = vpop.xlane.xlu0 %331
  %v333 = vsel %vm329, %v231, 0.0
  %334 = vadd.xlane.f32.xlu0 %v333
  %v335 = vpop.xlane.xlu0 %334
  %v336 = vsel %vm329, %v236, 0.0
  %337 = vadd.xlane.f32.xlu0 %v336
  %v338 = vpop.xlane.xlu0 %337
  %v339 = vsel %vm329, %v241, 0.0
  %340 = vadd.xlane.f32.xlu0 %v339
  %v341 = vpop.xlane.xlu0 %340
  %v342 = vmax.f32 %v332, 1.0
  %v343 = vmax.f32 %v335, 1.0
  %v344 = vmax.f32 %v338, 1.0
  %v345 = vmax.f32 %v341, 1.0
  %v346 = vrcp.pop %v342
  %v347 = vrcp.pop %v343
  %v348 = vrcp.pop %v344
  %v349 = vrcp.pop %v345
  %v350 = vsel %vm329, %v311, 0.0
  %v351 = vsel %vm329, %v316, 0.0
  %v352 = vadd.f32 %v350, %v351
  %v353 = vsel %vm329, %v321, 0.0
  %v354 = vadd.f32 %v352, %v353
  %v355 = vsel %vm329, %v326, 0.0
  %v356 = vadd.f32 %v354, %v355
  %v357 = vrot.slane %v356, 4
  %v358 = vadd.f32 %v356, %v357
  %v359 = vrot.slane %v358, 2
  %v360 = vadd.f32 %v358, %v359
  %v361 = vrot.slane %v360, 1
  %v362 = vadd.f32 %v360, %v361
  %v363 = vmax.f32 %v362, 1.0
  %v364 = vrcp.pop %v363
  %v365 = vmul.f32 %v226, %v346
  %v366 = vmul.f32 %v231, %v347
  %v367 = vmul.f32 %v236, %v348
  %v368 = vmul.f32 %v241, %v349
  %v369 = vmul.f32 %v311, %v364
  %v370 = vmul.f32 %v316, %v364
  %v371 = vmul.f32 %v321, %v364
  %v372 = vmul.f32 %v326, %v364
  %v373 = vld [vmem:[%s4] sm:$0xff]
  %v374 = vld [vmem:[%s4 + $0x8] sm:$0xff]
  %v375 = vld [vmem:[%s4 + $0x10] sm:$0xf]
  %v376 = vld [vmem:[%s5] sm:$0x1]
  %v378 = vlaneseq
  %v379 = vshrl.u32 %v378, 7
  %v380 = vsub.s32 0, %v379
  %v381 = vrot.slane %v376, %v380
  %v383 = vadd.f32 %v83, %v381
  %v384 = vadd.f32 %v84, %v381
  %v385 = vadd.f32 %v85, %v381
  %v386 = vadd.f32 %v86, %v381
  %v387 = vmul.f32 %v113, %v130
  %v388 = vmul.f32 %v114, %v131
  %v389 = vmul.f32 %v115, %v132
  %v390 = vmul.f32 %v116, %v133
  %v391 = vsel %vm134, %v387, 0.0
  %392 = vadd.xlane.f32.xlu0 %v391
  %v393 = vpop.xlane.xlu0 %392
  %v394 = vsel %vm134, %v388, 0.0
  %395 = vadd.xlane.f32.xlu0 %v394
  %v396 = vpop.xlane.xlu0 %395
  %v397 = vsel %vm134, %v389, 0.0
  %398 = vadd.xlane.f32.xlu0 %v397
  %v399 = vpop.xlane.xlu0 %398
  %v400 = vsel %vm134, %v390, 0.0
  %401 = vadd.xlane.f32.xlu0 %v400
  %v402 = vpop.xlane.xlu0 %401
  %v403 = vmul.f32 %v393, %v346
  %v404 = vmul.f32 %v396, %v347
  %v405 = vmul.f32 %v399, %v348
  %v406 = vmul.f32 %v402, %v349
  %v407 = vlaneseq
  %v408 = vshrl.u32 %v407, 7
  %v409 = vsub.s32 0, %v408
  %v410 = vrot.slane %v373, %v409
  %v411 = vmul.f32 %v403, %v410
  %v412 = vmul.f32 %v404, %v410
  %v413 = vmul.f32 %v405, %v410
  %v414 = vmul.f32 %v406, %v410
  %v415 = vadd.f32 %v383, %v411
  %v416 = vadd.f32 %v384, %v412
  %v417 = vadd.f32 %v385, %v413
  %v418 = vadd.f32 %v386, %v414
  %v419 = vmul.f32 %v365, %v369
  %v420 = vmul.f32 %v366, %v370
  %v421 = vmul.f32 %v367, %v371
  %v422 = vmul.f32 %v368, %v372
  %v423 = vsel %vm329, %v419, 0.0
  %424 = vadd.xlane.f32.xlu0 %v423
  %v425 = vpop.xlane.xlu0 %424
  %v426 = vsel %vm329, %v420, 0.0
  %427 = vadd.xlane.f32.xlu0 %v426
  %v428 = vpop.xlane.xlu0 %427
  %v429 = vsel %vm329, %v421, 0.0
  %430 = vadd.xlane.f32.xlu0 %v429
  %v431 = vpop.xlane.xlu0 %430
  %v432 = vsel %vm329, %v422, 0.0
  %433 = vadd.xlane.f32.xlu0 %v432
  %v434 = vpop.xlane.xlu0 %433
  %v435 = vlaneseq
  %v436 = vshrl.u32 %v435, 7
  %v437 = vsub.s32 1, %v436
  %v438 = vrot.slane %v373, %v437
  %v439 = vmul.f32 %v425, %v438
  %v440 = vmul.f32 %v428, %v438
  %v441 = vmul.f32 %v431, %v438
  %v442 = vmul.f32 %v434, %v438
  %v443 = vadd.f32 %v415, %v439
  %v444 = vadd.f32 %v416, %v440
  %v445 = vadd.f32 %v417, %v441
  %v446 = vadd.f32 %v418, %v442
  %v448 = vsel %vm329, %v365, 0
  %v451 = vsel %vm329, %v366, 0
  %v454 = vsel %vm329, %v367, 0
  %v457 = vsel %vm329, %v368, 0
  %459 = vmatprep.subr.mxu0 0.0
  %460 = vmatpush1.msra.mxu0 0.0
  %461 = vmatprep.subr.mxu0 0.0
  %462 = vmatpush1.msra.mxu0 0.0
  %463 = vmatprep.subr.mxu0 0.0
  %464 = vmatpush1.msra.mxu0 0.0
  %465 = vmatprep.subr.mxu0 0.0
  %466 = vmatpush1.msra.mxu0 0.0
  %467 = vmatprep.subr.mxu0 0.0
  %468 = vmatpush1.msra.mxu0 0.0
  %469 = vmatprep.subr.mxu0 0.0
  %470 = vmatpush1.msra.mxu0 0.0
  %471 = vmatprep.subr.mxu0 0.0
  %472 = vmatpush1.msra.mxu0 0.0
  %473 = vmatprep.subr.mxu0 0.0
  %474 = vmatpush1.msra.mxu0 0.0
  %475 = vmatprep.subr.mxu0 0.0
  %476 = vmatpush1.msra.mxu0 0.0
  %477 = vmatprep.subr.mxu0 0.0
  %478 = vmatpush1.msra.mxu0 0.0
  %479 = vmatprep.subr.mxu0 0.0
  %480 = vmatpush1.msra.mxu0 0.0
  %481 = vmatprep.subr.mxu0 0.0
  %482 = vmatpush1.msra.mxu0 0.0
  %483 = vmatprep.subr.mxu0 0.0
  %484 = vmatpush1.msra.mxu0 %v368
  %485 = vmatprep.subr.mxu0 0.0
  %486 = vmatpush1.msra.mxu0 %v367
  %487 = vmatprep.subr.mxu0 0.0
  %488 = vmatpush1.msra.mxu0 %v366
  %489 = vmatprep.subr.mxu0 0.0
  %490 = vmatpush1.msra.mxu0 %v365
  %491 = vmatprep.subr.mxu0 0.0
  %492 = vmatpush2.msra.mxu0 0.0
  %493 = vmatprep.subr.mxu0 0.0
  %494 = vmatpush2.msra.mxu0 0.0
  %495 = vmatprep.subr.mxu0 0.0
  %496 = vmatpush2.msra.mxu0 0.0
  %497 = vmatprep.subr.mxu0 0.0
  %498 = vmatpush2.msra.mxu0 0.0
  %499 = vmatprep.subr.mxu0 0.0
  %500 = vmatpush2.msra.mxu0 0.0
  %501 = vmatprep.subr.mxu0 0.0
  %502 = vmatpush2.msra.mxu0 0.0
  %503 = vmatprep.subr.mxu0 0.0
  %504 = vmatpush2.msra.mxu0 0.0
  %505 = vmatprep.subr.mxu0 0.0
  %506 = vmatpush2.msra.mxu0 0.0
  %507 = vmatprep.subr.mxu0 0.0
  %508 = vmatpush2.msra.mxu0 0.0
  %509 = vmatprep.subr.mxu0 0.0
  %510 = vmatpush2.msra.mxu0 0.0
  %511 = vmatprep.subr.mxu0 0.0
  %512 = vmatpush2.msra.mxu0 0.0
  %513 = vmatprep.subr.mxu0 0.0
  %514 = vmatpush2.msra.mxu0 0.0
  %515 = vmatprep.subr.mxu0 0.0
  %516 = vmatpush2.msra.mxu0 0.0
  %517 = vmatprep.subr.mxu0 0.0
  %518 = vmatpush2.msra.mxu0 0.0
  %519 = vmatprep.subr.mxu0 0.0
  %520 = vmatpush2.msra.mxu0 0.0
  %521 = vmatprep.subr.mxu0 0.0
  %522 = vmatpush2.msra.mxu0 0.0
  %523 = vmatprep.mubr.f32.mxu0 0.0
  %524 = vmatmul.mubr.f32.gmra.mxu0 %v448
  %v525 = vpop.f32.mrf.mxu0
  %v526 = vadd.f32 0.0, %v525
  %v527 = vpop.f32.mrf.mxu0
  %528 = vmatprep.mubr.f32.mxu0 0.0
  %529 = vmatmul.mubr.f32.gmra.mxu0 %v451
  %v530 = vpop.f32.mrf.mxu0
  %v531 = vadd.f32 0.0, %v530
  %v532 = vpop.f32.mrf.mxu0
  %533 = vmatprep.mubr.f32.mxu0 0.0
  %534 = vmatmul.mubr.f32.gmra.mxu0 %v454
  %v535 = vpop.f32.mrf.mxu0
  %v536 = vadd.f32 0.0, %v535
  %v537 = vpop.f32.mrf.mxu0
  %538 = vmatprep.mubr.f32.mxu0 0.0
  %539 = vmatmul.mubr.f32.gmra.mxu0 %v457
  %v540 = vpop.f32.mrf.mxu0
  %v541 = vadd.f32 0.0, %v540
  %v542 = vpop.f32.mrf.mxu0
  %543 = vdwg.mxu0
  %v544 = vmul.f32 %v526, %v369
  %v545 = vmul.f32 %v531, %v370
  %v546 = vmul.f32 %v536, %v371
  %v547 = vmul.f32 %v541, %v372
  %v548 = vsel %vm329, %v544, 0.0
  %549 = vadd.xlane.f32.xlu0 %v548
  %v550 = vpop.xlane.xlu0 %549
  %v551 = vsel %vm329, %v545, 0.0
  %552 = vadd.xlane.f32.xlu0 %v551
  %v553 = vpop.xlane.xlu0 %552
  %v554 = vsel %vm329, %v546, 0.0
  %555 = vadd.xlane.f32.xlu0 %v554
  %v556 = vpop.xlane.xlu0 %555
  %v557 = vsel %vm329, %v547, 0.0
  %558 = vadd.xlane.f32.xlu0 %v557
  %v559 = vpop.xlane.xlu0 %558
  %v560 = vlaneseq
  %v561 = vshrl.u32 %v560, 7
  %v562 = vsub.s32 2, %v561
  %v563 = vrot.slane %v373, %v562
  %v564 = vmul.f32 %v550, %v563
  %v565 = vmul.f32 %v553, %v563
  %v566 = vmul.f32 %v556, %v563
  %v567 = vmul.f32 %v559, %v563
  %v568 = vadd.f32 %v443, %v564
  %v569 = vadd.f32 %v444, %v565
  %v570 = vadd.f32 %v445, %v566
  %v571 = vadd.f32 %v446, %v567
  %v573 = vsel %vm329, %v526, 0
  %v576 = vsel %vm329, %v531, 0
  %v579 = vsel %vm329, %v536, 0
  %v582 = vsel %vm329, %v541, 0
  %584 = vmatprep.subr.mxu0 0.0
  %585 = vmatpush1.msra.mxu0 0.0
  %586 = vmatprep.subr.mxu0 0.0
  %587 = vmatpush1.msra.mxu0 0.0
  %588 = vmatprep.subr.mxu0 0.0
  %589 = vmatpush1.msra.mxu0 0.0
  %590 = vmatprep.subr.mxu0 0.0
  %591 = vmatpush1.msra.mxu0 0.0
  %592 = vmatprep.subr.mxu0 0.0
  %593 = vmatpush1.msra.mxu0 0.0
  %594 = vmatprep.subr.mxu0 0.0
  %595 = vmatpush1.msra.mxu0 0.0
  %596 = vmatprep.subr.mxu0 0.0
  %597 = vmatpush1.msra.mxu0 0.0
  %598 = vmatprep.subr.mxu0 0.0
  %599 = vmatpush1.msra.mxu0 0.0
  %600 = vmatprep.subr.mxu0 0.0
  %601 = vmatpush1.msra.mxu0 0.0
  %602 = vmatprep.subr.mxu0 0.0
  %603 = vmatpush1.msra.mxu0 0.0
  %604 = vmatprep.subr.mxu0 0.0
  %605 = vmatpush1.msra.mxu0 0.0
  %606 = vmatprep.subr.mxu0 0.0
  %607 = vmatpush1.msra.mxu0 0.0
  %608 = vmatprep.subr.mxu0 0.0
  %609 = vmatpush1.msra.mxu0 %v368
  %610 = vmatprep.subr.mxu0 0.0
  %611 = vmatpush1.msra.mxu0 %v367
  %612 = vmatprep.subr.mxu0 0.0
  %613 = vmatpush1.msra.mxu0 %v366
  %614 = vmatprep.subr.mxu0 0.0
  %615 = vmatpush1.msra.mxu0 %v365
  %616 = vmatprep.subr.mxu0 0.0
  %617 = vmatpush2.msra.mxu0 0.0
  %618 = vmatprep.subr.mxu0 0.0
  %619 = vmatpush2.msra.mxu0 0.0
  %620 = vmatprep.subr.mxu0 0.0
  %621 = vmatpush2.msra.mxu0 0.0
  %622 = vmatprep.subr.mxu0 0.0
  %623 = vmatpush2.msra.mxu0 0.0
  %624 = vmatprep.subr.mxu0 0.0
  %625 = vmatpush2.msra.mxu0 0.0
  %626 = vmatprep.subr.mxu0 0.0
  %627 = vmatpush2.msra.mxu0 0.0
  %628 = vmatprep.subr.mxu0 0.0
  %629 = vmatpush2.msra.mxu0 0.0
  %630 = vmatprep.subr.mxu0 0.0
  %631 = vmatpush2.msra.mxu0 0.0
  %632 = vmatprep.subr.mxu0 0.0
  %633 = vmatpush2.msra.mxu0 0.0
  %634 = vmatprep.subr.mxu0 0.0
  %635 = vmatpush2.msra.mxu0 0.0
  %636 = vmatprep.subr.mxu0 0.0
  %637 = vmatpush2.msra.mxu0 0.0
  %638 = vmatprep.subr.mxu0 0.0
  %639 = vmatpush2.msra.mxu0 0.0
  %640 = vmatprep.subr.mxu0 0.0
  %641 = vmatpush2.msra.mxu0 0.0
  %642 = vmatprep.subr.mxu0 0.0
  %643 = vmatpush2.msra.mxu0 0.0
  %644 = vmatprep.subr.mxu0 0.0
  %645 = vmatpush2.msra.mxu0 0.0
  %646 = vmatprep.subr.mxu0 0.0
  %647 = vmatpush2.msra.mxu0 0.0
  %648 = vmatprep.mubr.f32.mxu0 0.0
  %649 = vmatmul.mubr.f32.gmra.mxu0 %v573
  %v650 = vpop.f32.mrf.mxu0
  %v651 = vadd.f32 0.0, %v650
  %v652 = vpop.f32.mrf.mxu0
  %653 = vmatprep.mubr.f32.mxu0 0.0
  %654 = vmatmul.mubr.f32.gmra.mxu0 %v576
  %v655 = vpop.f32.mrf.mxu0
  %v656 = vadd.f32 0.0, %v655
  %v657 = vpop.f32.mrf.mxu0
  %658 = vmatprep.mubr.f32.mxu0 0.0
  %659 = vmatmul.mubr.f32.gmra.mxu0 %v579
  %v660 = vpop.f32.mrf.mxu0
  %v661 = vadd.f32 0.0, %v660
  %v662 = vpop.f32.mrf.mxu0
  %663 = vmatprep.mubr.f32.mxu0 0.0
  %664 = vmatmul.mubr.f32.gmra.mxu0 %v582
  %v665 = vpop.f32.mrf.mxu0
  %v666 = vadd.f32 0.0, %v665
  %v667 = vpop.f32.mrf.mxu0
  %668 = vdwg.mxu0
  %v669 = vmul.f32 %v651, %v369
  %v670 = vmul.f32 %v656, %v370
  %v671 = vmul.f32 %v661, %v371
  %v672 = vmul.f32 %v666, %v372
  %v673 = vsel %vm329, %v669, 0.0
  %674 = vadd.xlane.f32.xlu0 %v673
  %v675 = vpop.xlane.xlu0 %674
  %v676 = vsel %vm329, %v670, 0.0
  %677 = vadd.xlane.f32.xlu0 %v676
  %v678 = vpop.xlane.xlu0 %677
  %v679 = vsel %vm329, %v671, 0.0
  %680 = vadd.xlane.f32.xlu0 %v679
  %v681 = vpop.xlane.xlu0 %680
  %v682 = vsel %vm329, %v672, 0.0
  %683 = vadd.xlane.f32.xlu0 %v682
  %v684 = vpop.xlane.xlu0 %683
  %v685 = vlaneseq
  %v686 = vshrl.u32 %v685, 7
  %v687 = vsub.s32 3, %v686
  %v688 = vrot.slane %v373, %v687
  %v689 = vmul.f32 %v675, %v688
  %v690 = vmul.f32 %v678, %v688
  %v691 = vmul.f32 %v681, %v688
  %v692 = vmul.f32 %v684, %v688
  %v693 = vadd.f32 %v568, %v689
  %v694 = vadd.f32 %v569, %v690
  %v695 = vadd.f32 %v570, %v691
  %v696 = vadd.f32 %v571, %v692
  %v698 = vsel %vm329, %v651, 0
  %v701 = vsel %vm329, %v656, 0
  %v704 = vsel %vm329, %v661, 0
  %v707 = vsel %vm329, %v666, 0
  %709 = vmatprep.subr.mxu0 0.0
  %710 = vmatpush1.msra.mxu0 0.0
  %711 = vmatprep.subr.mxu0 0.0
  %712 = vmatpush1.msra.mxu0 0.0
  %713 = vmatprep.subr.mxu0 0.0
  %714 = vmatpush1.msra.mxu0 0.0
  %715 = vmatprep.subr.mxu0 0.0
  %716 = vmatpush1.msra.mxu0 0.0
  %717 = vmatprep.subr.mxu0 0.0
  %718 = vmatpush1.msra.mxu0 0.0
  %719 = vmatprep.subr.mxu0 0.0
  %720 = vmatpush1.msra.mxu0 0.0
  %721 = vmatprep.subr.mxu0 0.0
  %722 = vmatpush1.msra.mxu0 0.0
  %723 = vmatprep.subr.mxu0 0.0
  %724 = vmatpush1.msra.mxu0 0.0
  %725 = vmatprep.subr.mxu0 0.0
  %726 = vmatpush1.msra.mxu0 0.0
  %727 = vmatprep.subr.mxu0 0.0
  %728 = vmatpush1.msra.mxu0 0.0
  %729 = vmatprep.subr.mxu0 0.0
  %730 = vmatpush1.msra.mxu0 0.0
  %731 = vmatprep.subr.mxu0 0.0
  %732 = vmatpush1.msra.mxu0 0.0
  %733 = vmatprep.subr.mxu0 0.0
  %734 = vmatpush1.msra.mxu0 %v368
  %735 = vmatprep.subr.mxu0 0.0
  %736 = vmatpush1.msra.mxu0 %v367
  %737 = vmatprep.subr.mxu0 0.0
  %738 = vmatpush1.msra.mxu0 %v366
  %739 = vmatprep.subr.mxu0 0.0
  %740 = vmatpush1.msra.mxu0 %v365
  %741 = vmatprep.subr.mxu0 0.0
  %742 = vmatpush2.msra.mxu0 0.0
  %743 = vmatprep.subr.mxu0 0.0
  %744 = vmatpush2.msra.mxu0 0.0
  %745 = vmatprep.subr.mxu0 0.0
  %746 = vmatpush2.msra.mxu0 0.0
  %747 = vmatprep.subr.mxu0 0.0
  %748 = vmatpush2.msra.mxu0 0.0
  %749 = vmatprep.subr.mxu0 0.0
  %750 = vmatpush2.msra.mxu0 0.0
  %751 = vmatprep.subr.mxu0 0.0
  %752 = vmatpush2.msra.mxu0 0.0
  %753 = vmatprep.subr.mxu0 0.0
  %754 = vmatpush2.msra.mxu0 0.0
  %755 = vmatprep.subr.mxu0 0.0
  %756 = vmatpush2.msra.mxu0 0.0
  %757 = vmatprep.subr.mxu0 0.0
  %758 = vmatpush2.msra.mxu0 0.0
  %759 = vmatprep.subr.mxu0 0.0
  %760 = vmatpush2.msra.mxu0 0.0
  %761 = vmatprep.subr.mxu0 0.0
  %762 = vmatpush2.msra.mxu0 0.0
  %763 = vmatprep.subr.mxu0 0.0
  %764 = vmatpush2.msra.mxu0 0.0
  %765 = vmatprep.subr.mxu0 0.0
  %766 = vmatpush2.msra.mxu0 0.0
  %767 = vmatprep.subr.mxu0 0.0
  %768 = vmatpush2.msra.mxu0 0.0
  %769 = vmatprep.subr.mxu0 0.0
  %770 = vmatpush2.msra.mxu0 0.0
  %771 = vmatprep.subr.mxu0 0.0
  %772 = vmatpush2.msra.mxu0 0.0
  %773 = vmatprep.mubr.f32.mxu0 0.0
  %774 = vmatmul.mubr.f32.gmra.mxu0 %v698
  %v775 = vpop.f32.mrf.mxu0
  %v776 = vadd.f32 0.0, %v775
  %v777 = vpop.f32.mrf.mxu0
  %778 = vmatprep.mubr.f32.mxu0 0.0
  %779 = vmatmul.mubr.f32.gmra.mxu0 %v701
  %v780 = vpop.f32.mrf.mxu0
  %v781 = vadd.f32 0.0, %v780
  %v782 = vpop.f32.mrf.mxu0
  %783 = vmatprep.mubr.f32.mxu0 0.0
  %784 = vmatmul.mubr.f32.gmra.mxu0 %v704
  %v785 = vpop.f32.mrf.mxu0
  %v786 = vadd.f32 0.0, %v785
  %v787 = vpop.f32.mrf.mxu0
  %788 = vmatprep.mubr.f32.mxu0 0.0
  %789 = vmatmul.mubr.f32.gmra.mxu0 %v707
  %v790 = vpop.f32.mrf.mxu0
  %v791 = vadd.f32 0.0, %v790
  %v792 = vpop.f32.mrf.mxu0
  %793 = vdwg.mxu0
  %v794 = vmul.f32 %v776, %v369
  %v795 = vmul.f32 %v781, %v370
  %v796 = vmul.f32 %v786, %v371
  %v797 = vmul.f32 %v791, %v372
  %v798 = vsel %vm329, %v794, 0.0
  %799 = vadd.xlane.f32.xlu0 %v798
  %v800 = vpop.xlane.xlu0 %799
  %v801 = vsel %vm329, %v795, 0.0
  %802 = vadd.xlane.f32.xlu0 %v801
  %v803 = vpop.xlane.xlu0 %802
  %v804 = vsel %vm329, %v796, 0.0
  %805 = vadd.xlane.f32.xlu0 %v804
  %v806 = vpop.xlane.xlu0 %805
  %v807 = vsel %vm329, %v797, 0.0
  %808 = vadd.xlane.f32.xlu0 %v807
  %v809 = vpop.xlane.xlu0 %808
  %v810 = vlaneseq
  %v811 = vshrl.u32 %v810, 7
  %v812 = vsub.s32 4, %v811
  %v813 = vrot.slane %v373, %v812
  %v814 = vmul.f32 %v800, %v813
  %v815 = vmul.f32 %v803, %v813
  %v816 = vmul.f32 %v806, %v813
  %v817 = vmul.f32 %v809, %v813
  %v818 = vadd.f32 %v693, %v814
  %v819 = vadd.f32 %v694, %v815
  %v820 = vadd.f32 %v695, %v816
  %v821 = vadd.f32 %v696, %v817
  %v823 = vsel %vm329, %v776, 0
  %v826 = vsel %vm329, %v781, 0
  %v829 = vsel %vm329, %v786, 0
  %v832 = vsel %vm329, %v791, 0
  %834 = vmatprep.subr.mxu0 0.0
  %835 = vmatpush1.msra.mxu0 0.0
  %836 = vmatprep.subr.mxu0 0.0
  %837 = vmatpush1.msra.mxu0 0.0
  %838 = vmatprep.subr.mxu0 0.0
  %839 = vmatpush1.msra.mxu0 0.0
  %840 = vmatprep.subr.mxu0 0.0
  %841 = vmatpush1.msra.mxu0 0.0
  %842 = vmatprep.subr.mxu0 0.0
  %843 = vmatpush1.msra.mxu0 0.0
  %844 = vmatprep.subr.mxu0 0.0
  %845 = vmatpush1.msra.mxu0 0.0
  %846 = vmatprep.subr.mxu0 0.0
  %847 = vmatpush1.msra.mxu0 0.0
  %848 = vmatprep.subr.mxu0 0.0
  %849 = vmatpush1.msra.mxu0 0.0
  %850 = vmatprep.subr.mxu0 0.0
  %851 = vmatpush1.msra.mxu0 0.0
  %852 = vmatprep.subr.mxu0 0.0
  %853 = vmatpush1.msra.mxu0 0.0
  %854 = vmatprep.subr.mxu0 0.0
  %855 = vmatpush1.msra.mxu0 0.0
  %856 = vmatprep.subr.mxu0 0.0
  %857 = vmatpush1.msra.mxu0 0.0
  %858 = vmatprep.subr.mxu0 0.0
  %859 = vmatpush1.msra.mxu0 %v368
  %860 = vmatprep.subr.mxu0 0.0
  %861 = vmatpush1.msra.mxu0 %v367
  %862 = vmatprep.subr.mxu0 0.0
  %863 = vmatpush1.msra.mxu0 %v366
  %864 = vmatprep.subr.mxu0 0.0
  %865 = vmatpush1.msra.mxu0 %v365
  %866 = vmatprep.subr.mxu0 0.0
  %867 = vmatpush2.msra.mxu0 0.0
  %868 = vmatprep.subr.mxu0 0.0
  %869 = vmatpush2.msra.mxu0 0.0
  %870 = vmatprep.subr.mxu0 0.0
  %871 = vmatpush2.msra.mxu0 0.0
  %872 = vmatprep.subr.mxu0 0.0
  %873 = vmatpush2.msra.mxu0 0.0
  %874 = vmatprep.subr.mxu0 0.0
  %875 = vmatpush2.msra.mxu0 0.0
  %876 = vmatprep.subr.mxu0 0.0
  %877 = vmatpush2.msra.mxu0 0.0
  %878 = vmatprep.subr.mxu0 0.0
  %879 = vmatpush2.msra.mxu0 0.0
  %880 = vmatprep.subr.mxu0 0.0
  %881 = vmatpush2.msra.mxu0 0.0
  %882 = vmatprep.subr.mxu0 0.0
  %883 = vmatpush2.msra.mxu0 0.0
  %884 = vmatprep.subr.mxu0 0.0
  %885 = vmatpush2.msra.mxu0 0.0
  %886 = vmatprep.subr.mxu0 0.0
  %887 = vmatpush2.msra.mxu0 0.0
  %888 = vmatprep.subr.mxu0 0.0
  %889 = vmatpush2.msra.mxu0 0.0
  %890 = vmatprep.subr.mxu0 0.0
  %891 = vmatpush2.msra.mxu0 0.0
  %892 = vmatprep.subr.mxu0 0.0
  %893 = vmatpush2.msra.mxu0 0.0
  %894 = vmatprep.subr.mxu0 0.0
  %895 = vmatpush2.msra.mxu0 0.0
  %896 = vmatprep.subr.mxu0 0.0
  %897 = vmatpush2.msra.mxu0 0.0
  %898 = vmatprep.mubr.f32.mxu0 0.0
  %899 = vmatmul.mubr.f32.gmra.mxu0 %v823
  %v900 = vpop.f32.mrf.mxu0
  %v901 = vadd.f32 0.0, %v900
  %v902 = vpop.f32.mrf.mxu0
  %903 = vmatprep.mubr.f32.mxu0 0.0
  %904 = vmatmul.mubr.f32.gmra.mxu0 %v826
  %v905 = vpop.f32.mrf.mxu0
  %v906 = vadd.f32 0.0, %v905
  %v907 = vpop.f32.mrf.mxu0
  %908 = vmatprep.mubr.f32.mxu0 0.0
  %909 = vmatmul.mubr.f32.gmra.mxu0 %v829
  %v910 = vpop.f32.mrf.mxu0
  %v911 = vadd.f32 0.0, %v910
  %v912 = vpop.f32.mrf.mxu0
  %913 = vmatprep.mubr.f32.mxu0 0.0
  %914 = vmatmul.mubr.f32.gmra.mxu0 %v832
  %v915 = vpop.f32.mrf.mxu0
  %v916 = vadd.f32 0.0, %v915
  %v917 = vpop.f32.mrf.mxu0
  %918 = vdwg.mxu0
  %v919 = vmul.f32 %v901, %v369
  %v920 = vmul.f32 %v906, %v370
  %v921 = vmul.f32 %v911, %v371
  %v922 = vmul.f32 %v916, %v372
  %v923 = vsel %vm329, %v919, 0.0
  %924 = vadd.xlane.f32.xlu0 %v923
  %v925 = vpop.xlane.xlu0 %924
  %v926 = vsel %vm329, %v920, 0.0
  %927 = vadd.xlane.f32.xlu0 %v926
  %v928 = vpop.xlane.xlu0 %927
  %v929 = vsel %vm329, %v921, 0.0
  %930 = vadd.xlane.f32.xlu0 %v929
  %v931 = vpop.xlane.xlu0 %930
  %v932 = vsel %vm329, %v922, 0.0
  %933 = vadd.xlane.f32.xlu0 %v932
  %v934 = vpop.xlane.xlu0 %933
  %v935 = vlaneseq
  %v936 = vshrl.u32 %v935, 7
  %v937 = vsub.s32 5, %v936
  %v938 = vrot.slane %v373, %v937
  %v939 = vmul.f32 %v925, %v938
  %v940 = vmul.f32 %v928, %v938
  %v941 = vmul.f32 %v931, %v938
  %v942 = vmul.f32 %v934, %v938
  %v943 = vadd.f32 %v818, %v939
  %v944 = vadd.f32 %v819, %v940
  %v945 = vadd.f32 %v820, %v941
  %v946 = vadd.f32 %v821, %v942
  %v948 = vsel %vm329, %v901, 0
  %v951 = vsel %vm329, %v906, 0
  %v954 = vsel %vm329, %v911, 0
  %v957 = vsel %vm329, %v916, 0
  %959 = vmatprep.subr.mxu0 0.0
  %960 = vmatpush1.msra.mxu0 0.0
  %961 = vmatprep.subr.mxu0 0.0
  %962 = vmatpush1.msra.mxu0 0.0
  %963 = vmatprep.subr.mxu0 0.0
  %964 = vmatpush1.msra.mxu0 0.0
  %965 = vmatprep.subr.mxu0 0.0
  %966 = vmatpush1.msra.mxu0 0.0
  %967 = vmatprep.subr.mxu0 0.0
  %968 = vmatpush1.msra.mxu0 0.0
  %969 = vmatprep.subr.mxu0 0.0
  %970 = vmatpush1.msra.mxu0 0.0
  %971 = vmatprep.subr.mxu0 0.0
  %972 = vmatpush1.msra.mxu0 0.0
  %973 = vmatprep.subr.mxu0 0.0
  %974 = vmatpush1.msra.mxu0 0.0
  %975 = vmatprep.subr.mxu0 0.0
  %976 = vmatpush1.msra.mxu0 0.0
  %977 = vmatprep.subr.mxu0 0.0
  %978 = vmatpush1.msra.mxu0 0.0
  %979 = vmatprep.subr.mxu0 0.0
  %980 = vmatpush1.msra.mxu0 0.0
  %981 = vmatprep.subr.mxu0 0.0
  %982 = vmatpush1.msra.mxu0 0.0
  %983 = vmatprep.subr.mxu0 0.0
  %984 = vmatpush1.msra.mxu0 %v368
  %985 = vmatprep.subr.mxu0 0.0
  %986 = vmatpush1.msra.mxu0 %v367
  %987 = vmatprep.subr.mxu0 0.0
  %988 = vmatpush1.msra.mxu0 %v366
  %989 = vmatprep.subr.mxu0 0.0
  %990 = vmatpush1.msra.mxu0 %v365
  %991 = vmatprep.subr.mxu0 0.0
  %992 = vmatpush2.msra.mxu0 0.0
  %993 = vmatprep.subr.mxu0 0.0
  %994 = vmatpush2.msra.mxu0 0.0
  %995 = vmatprep.subr.mxu0 0.0
  %996 = vmatpush2.msra.mxu0 0.0
  %997 = vmatprep.subr.mxu0 0.0
  %998 = vmatpush2.msra.mxu0 0.0
  %999 = vmatprep.subr.mxu0 0.0
  %1000 = vmatpush2.msra.mxu0 0.0
  %1001 = vmatprep.subr.mxu0 0.0
  %1002 = vmatpush2.msra.mxu0 0.0
  %1003 = vmatprep.subr.mxu0 0.0
  %1004 = vmatpush2.msra.mxu0 0.0
  %1005 = vmatprep.subr.mxu0 0.0
  %1006 = vmatpush2.msra.mxu0 0.0
  %1007 = vmatprep.subr.mxu0 0.0
  %1008 = vmatpush2.msra.mxu0 0.0
  %1009 = vmatprep.subr.mxu0 0.0
  %1010 = vmatpush2.msra.mxu0 0.0
  %1011 = vmatprep.subr.mxu0 0.0
  %1012 = vmatpush2.msra.mxu0 0.0
  %1013 = vmatprep.subr.mxu0 0.0
  %1014 = vmatpush2.msra.mxu0 0.0
  %1015 = vmatprep.subr.mxu0 0.0
  %1016 = vmatpush2.msra.mxu0 0.0
  %1017 = vmatprep.subr.mxu0 0.0
  %1018 = vmatpush2.msra.mxu0 0.0
  %1019 = vmatprep.subr.mxu0 0.0
  %1020 = vmatpush2.msra.mxu0 0.0
  %1021 = vmatprep.subr.mxu0 0.0
  %1022 = vmatpush2.msra.mxu0 0.0
  %1023 = vmatprep.mubr.f32.mxu0 0.0
  %1024 = vmatmul.mubr.f32.gmra.mxu0 %v948
  %v1025 = vpop.f32.mrf.mxu0
  %v1026 = vadd.f32 0.0, %v1025
  %v1027 = vpop.f32.mrf.mxu0
  %1028 = vmatprep.mubr.f32.mxu0 0.0
  %1029 = vmatmul.mubr.f32.gmra.mxu0 %v951
  %v1030 = vpop.f32.mrf.mxu0
  %v1031 = vadd.f32 0.0, %v1030
  %v1032 = vpop.f32.mrf.mxu0
  %1033 = vmatprep.mubr.f32.mxu0 0.0
  %1034 = vmatmul.mubr.f32.gmra.mxu0 %v954
  %v1035 = vpop.f32.mrf.mxu0
  %v1036 = vadd.f32 0.0, %v1035
  %v1037 = vpop.f32.mrf.mxu0
  %1038 = vmatprep.mubr.f32.mxu0 0.0
  %1039 = vmatmul.mubr.f32.gmra.mxu0 %v957
  %v1040 = vpop.f32.mrf.mxu0
  %v1041 = vadd.f32 0.0, %v1040
  %v1042 = vpop.f32.mrf.mxu0
  %1043 = vdwg.mxu0
  %v1044 = vmul.f32 %v1026, %v369
  %v1045 = vmul.f32 %v1031, %v370
  %v1046 = vmul.f32 %v1036, %v371
  %v1047 = vmul.f32 %v1041, %v372
  %v1048 = vsel %vm329, %v1044, 0.0
  %1049 = vadd.xlane.f32.xlu0 %v1048
  %v1050 = vpop.xlane.xlu0 %1049
  %v1051 = vsel %vm329, %v1045, 0.0
  %1052 = vadd.xlane.f32.xlu0 %v1051
  %v1053 = vpop.xlane.xlu0 %1052
  %v1054 = vsel %vm329, %v1046, 0.0
  %1055 = vadd.xlane.f32.xlu0 %v1054
  %v1056 = vpop.xlane.xlu0 %1055
  %v1057 = vsel %vm329, %v1047, 0.0
  %1058 = vadd.xlane.f32.xlu0 %v1057
  %v1059 = vpop.xlane.xlu0 %1058
  %v1060 = vlaneseq
  %v1061 = vshrl.u32 %v1060, 7
  %v1062 = vsub.s32 6, %v1061
  %v1063 = vrot.slane %v373, %v1062
  %v1064 = vmul.f32 %v1050, %v1063
  %v1065 = vmul.f32 %v1053, %v1063
  %v1066 = vmul.f32 %v1056, %v1063
  %v1067 = vmul.f32 %v1059, %v1063
  %v1068 = vadd.f32 %v943, %v1064
  %v1069 = vadd.f32 %v944, %v1065
  %v1070 = vadd.f32 %v945, %v1066
  %v1071 = vadd.f32 %v946, %v1067
  %v1073 = vsel %vm329, %v1026, 0
  %v1076 = vsel %vm329, %v1031, 0
  %v1079 = vsel %vm329, %v1036, 0
  %v1082 = vsel %vm329, %v1041, 0
  %1084 = vmatprep.subr.mxu0 0.0
  %1085 = vmatpush1.msra.mxu0 0.0
  %1086 = vmatprep.subr.mxu0 0.0
  %1087 = vmatpush1.msra.mxu0 0.0
  %1088 = vmatprep.subr.mxu0 0.0
  %1089 = vmatpush1.msra.mxu0 0.0
  %1090 = vmatprep.subr.mxu0 0.0
  %1091 = vmatpush1.msra.mxu0 0.0
  %1092 = vmatprep.subr.mxu0 0.0
  %1093 = vmatpush1.msra.mxu0 0.0
  %1094 = vmatprep.subr.mxu0 0.0
  %1095 = vmatpush1.msra.mxu0 0.0
  %1096 = vmatprep.subr.mxu0 0.0
  %1097 = vmatpush1.msra.mxu0 0.0
  %1098 = vmatprep.subr.mxu0 0.0
  %1099 = vmatpush1.msra.mxu0 0.0
  %1100 = vmatprep.subr.mxu0 0.0
  %1101 = vmatpush1.msra.mxu0 0.0
  %1102 = vmatprep.subr.mxu0 0.0
  %1103 = vmatpush1.msra.mxu0 0.0
  %1104 = vmatprep.subr.mxu0 0.0
  %1105 = vmatpush1.msra.mxu0 0.0
  %1106 = vmatprep.subr.mxu0 0.0
  %1107 = vmatpush1.msra.mxu0 0.0
  %1108 = vmatprep.subr.mxu0 0.0
  %1109 = vmatpush1.msra.mxu0 %v368
  %1110 = vmatprep.subr.mxu0 0.0
  %1111 = vmatpush1.msra.mxu0 %v367
  %1112 = vmatprep.subr.mxu0 0.0
  %1113 = vmatpush1.msra.mxu0 %v366
  %1114 = vmatprep.subr.mxu0 0.0
  %1115 = vmatpush1.msra.mxu0 %v365
  %1116 = vmatprep.subr.mxu0 0.0
  %1117 = vmatpush2.msra.mxu0 0.0
  %1118 = vmatprep.subr.mxu0 0.0
  %1119 = vmatpush2.msra.mxu0 0.0
  %1120 = vmatprep.subr.mxu0 0.0
  %1121 = vmatpush2.msra.mxu0 0.0
  %1122 = vmatprep.subr.mxu0 0.0
  %1123 = vmatpush2.msra.mxu0 0.0
  %1124 = vmatprep.subr.mxu0 0.0
  %1125 = vmatpush2.msra.mxu0 0.0
  %1126 = vmatprep.subr.mxu0 0.0
  %1127 = vmatpush2.msra.mxu0 0.0
  %1128 = vmatprep.subr.mxu0 0.0
  %1129 = vmatpush2.msra.mxu0 0.0
  %1130 = vmatprep.subr.mxu0 0.0
  %1131 = vmatpush2.msra.mxu0 0.0
  %1132 = vmatprep.subr.mxu0 0.0
  %1133 = vmatpush2.msra.mxu0 0.0
  %1134 = vmatprep.subr.mxu0 0.0
  %1135 = vmatpush2.msra.mxu0 0.0
  %1136 = vmatprep.subr.mxu0 0.0
  %1137 = vmatpush2.msra.mxu0 0.0
  %1138 = vmatprep.subr.mxu0 0.0
  %1139 = vmatpush2.msra.mxu0 0.0
  %1140 = vmatprep.subr.mxu0 0.0
  %1141 = vmatpush2.msra.mxu0 0.0
  %1142 = vmatprep.subr.mxu0 0.0
  %1143 = vmatpush2.msra.mxu0 0.0
  %1144 = vmatprep.subr.mxu0 0.0
  %1145 = vmatpush2.msra.mxu0 0.0
  %1146 = vmatprep.subr.mxu0 0.0
  %1147 = vmatpush2.msra.mxu0 0.0
  %1148 = vmatprep.mubr.f32.mxu0 0.0
  %1149 = vmatmul.mubr.f32.gmra.mxu0 %v1073
  %v1150 = vpop.f32.mrf.mxu0
  %v1151 = vadd.f32 0.0, %v1150
  %v1152 = vpop.f32.mrf.mxu0
  %1153 = vmatprep.mubr.f32.mxu0 0.0
  %1154 = vmatmul.mubr.f32.gmra.mxu0 %v1076
  %v1155 = vpop.f32.mrf.mxu0
  %v1156 = vadd.f32 0.0, %v1155
  %v1157 = vpop.f32.mrf.mxu0
  %1158 = vmatprep.mubr.f32.mxu0 0.0
  %1159 = vmatmul.mubr.f32.gmra.mxu0 %v1079
  %v1160 = vpop.f32.mrf.mxu0
  %v1161 = vadd.f32 0.0, %v1160
  %v1162 = vpop.f32.mrf.mxu0
  %1163 = vmatprep.mubr.f32.mxu0 0.0
  %1164 = vmatmul.mubr.f32.gmra.mxu0 %v1082
  %v1165 = vpop.f32.mrf.mxu0
  %v1166 = vadd.f32 0.0, %v1165
  %v1167 = vpop.f32.mrf.mxu0
  %1168 = vdwg.mxu0
  %v1169 = vmul.f32 %v1151, %v369
  %v1170 = vmul.f32 %v1156, %v370
  %v1171 = vmul.f32 %v1161, %v371
  %v1172 = vmul.f32 %v1166, %v372
  %v1173 = vsel %vm329, %v1169, 0.0
  %1174 = vadd.xlane.f32.xlu0 %v1173
  %v1175 = vpop.xlane.xlu0 %1174
  %v1176 = vsel %vm329, %v1170, 0.0
  %1177 = vadd.xlane.f32.xlu0 %v1176
  %v1178 = vpop.xlane.xlu0 %1177
  %v1179 = vsel %vm329, %v1171, 0.0
  %1180 = vadd.xlane.f32.xlu0 %v1179
  %v1181 = vpop.xlane.xlu0 %1180
  %v1182 = vsel %vm329, %v1172, 0.0
  %1183 = vadd.xlane.f32.xlu0 %v1182
  %v1184 = vpop.xlane.xlu0 %1183
  %v1185 = vlaneseq
  %v1186 = vshrl.u32 %v1185, 7
  %v1187 = vsub.s32 7, %v1186
  %v1188 = vrot.slane %v373, %v1187
  %v1189 = vmul.f32 %v1175, %v1188
  %v1190 = vmul.f32 %v1178, %v1188
  %v1191 = vmul.f32 %v1181, %v1188
  %v1192 = vmul.f32 %v1184, %v1188
  %v1193 = vadd.f32 %v1068, %v1189
  %v1194 = vadd.f32 %v1069, %v1190
  %v1195 = vadd.f32 %v1070, %v1191
  %v1196 = vadd.f32 %v1071, %v1192
  %v1198 = vsel %vm329, %v1151, 0
  %v1201 = vsel %vm329, %v1156, 0
  %v1204 = vsel %vm329, %v1161, 0
  %v1207 = vsel %vm329, %v1166, 0
  %1209 = vmatprep.subr.mxu0 0.0
  %1210 = vmatpush1.msra.mxu0 0.0
  %1211 = vmatprep.subr.mxu0 0.0
  %1212 = vmatpush1.msra.mxu0 0.0
  %1213 = vmatprep.subr.mxu0 0.0
  %1214 = vmatpush1.msra.mxu0 0.0
  %1215 = vmatprep.subr.mxu0 0.0
  %1216 = vmatpush1.msra.mxu0 0.0
  %1217 = vmatprep.subr.mxu0 0.0
  %1218 = vmatpush1.msra.mxu0 0.0
  %1219 = vmatprep.subr.mxu0 0.0
  %1220 = vmatpush1.msra.mxu0 0.0
  %1221 = vmatprep.subr.mxu0 0.0
  %1222 = vmatpush1.msra.mxu0 0.0
  %1223 = vmatprep.subr.mxu0 0.0
  %1224 = vmatpush1.msra.mxu0 0.0
  %1225 = vmatprep.subr.mxu0 0.0
  %1226 = vmatpush1.msra.mxu0 0.0
  %1227 = vmatprep.subr.mxu0 0.0
  %1228 = vmatpush1.msra.mxu0 0.0
  %1229 = vmatprep.subr.mxu0 0.0
  %1230 = vmatpush1.msra.mxu0 0.0
  %1231 = vmatprep.subr.mxu0 0.0
  %1232 = vmatpush1.msra.mxu0 0.0
  %1233 = vmatprep.subr.mxu0 0.0
  %1234 = vmatpush1.msra.mxu0 %v368
  %1235 = vmatprep.subr.mxu0 0.0
  %1236 = vmatpush1.msra.mxu0 %v367
  %1237 = vmatprep.subr.mxu0 0.0
  %1238 = vmatpush1.msra.mxu0 %v366
  %1239 = vmatprep.subr.mxu0 0.0
  %1240 = vmatpush1.msra.mxu0 %v365
  %1241 = vmatprep.subr.mxu0 0.0
  %1242 = vmatpush2.msra.mxu0 0.0
  %1243 = vmatprep.subr.mxu0 0.0
  %1244 = vmatpush2.msra.mxu0 0.0
  %1245 = vmatprep.subr.mxu0 0.0
  %1246 = vmatpush2.msra.mxu0 0.0
  %1247 = vmatprep.subr.mxu0 0.0
  %1248 = vmatpush2.msra.mxu0 0.0
  %1249 = vmatprep.subr.mxu0 0.0
  %1250 = vmatpush2.msra.mxu0 0.0
  %1251 = vmatprep.subr.mxu0 0.0
  %1252 = vmatpush2.msra.mxu0 0.0
  %1253 = vmatprep.subr.mxu0 0.0
  %1254 = vmatpush2.msra.mxu0 0.0
  %1255 = vmatprep.subr.mxu0 0.0
  %1256 = vmatpush2.msra.mxu0 0.0
  %1257 = vmatprep.subr.mxu0 0.0
  %1258 = vmatpush2.msra.mxu0 0.0
  %1259 = vmatprep.subr.mxu0 0.0
  %1260 = vmatpush2.msra.mxu0 0.0
  %1261 = vmatprep.subr.mxu0 0.0
  %1262 = vmatpush2.msra.mxu0 0.0
  %1263 = vmatprep.subr.mxu0 0.0
  %1264 = vmatpush2.msra.mxu0 0.0
  %1265 = vmatprep.subr.mxu0 0.0
  %1266 = vmatpush2.msra.mxu0 0.0
  %1267 = vmatprep.subr.mxu0 0.0
  %1268 = vmatpush2.msra.mxu0 0.0
  %1269 = vmatprep.subr.mxu0 0.0
  %1270 = vmatpush2.msra.mxu0 0.0
  %1271 = vmatprep.subr.mxu0 0.0
  %1272 = vmatpush2.msra.mxu0 0.0
  %1273 = vmatprep.mubr.f32.mxu0 0.0
  %1274 = vmatmul.mubr.f32.gmra.mxu0 %v1198
  %v1275 = vpop.f32.mrf.mxu0
  %v1276 = vadd.f32 0.0, %v1275
  %v1277 = vpop.f32.mrf.mxu0
  %1278 = vmatprep.mubr.f32.mxu0 0.0
  %1279 = vmatmul.mubr.f32.gmra.mxu0 %v1201
  %v1280 = vpop.f32.mrf.mxu0
  %v1281 = vadd.f32 0.0, %v1280
  %v1282 = vpop.f32.mrf.mxu0
  %1283 = vmatprep.mubr.f32.mxu0 0.0
  %1284 = vmatmul.mubr.f32.gmra.mxu0 %v1204
  %v1285 = vpop.f32.mrf.mxu0
  %v1286 = vadd.f32 0.0, %v1285
  %v1287 = vpop.f32.mrf.mxu0
  %1288 = vmatprep.mubr.f32.mxu0 0.0
  %1289 = vmatmul.mubr.f32.gmra.mxu0 %v1207
  %v1290 = vpop.f32.mrf.mxu0
  %v1291 = vadd.f32 0.0, %v1290
  %v1292 = vpop.f32.mrf.mxu0
  %1293 = vdwg.mxu0
  %v1294 = vmul.f32 %v1276, %v369
  %v1295 = vmul.f32 %v1281, %v370
  %v1296 = vmul.f32 %v1286, %v371
  %v1297 = vmul.f32 %v1291, %v372
  %v1298 = vsel %vm329, %v1294, 0.0
  %1299 = vadd.xlane.f32.xlu0 %v1298
  %v1300 = vpop.xlane.xlu0 %1299
  %v1301 = vsel %vm329, %v1295, 0.0
  %1302 = vadd.xlane.f32.xlu0 %v1301
  %v1303 = vpop.xlane.xlu0 %1302
  %v1304 = vsel %vm329, %v1296, 0.0
  %1305 = vadd.xlane.f32.xlu0 %v1304
  %v1306 = vpop.xlane.xlu0 %1305
  %v1307 = vsel %vm329, %v1297, 0.0
  %1308 = vadd.xlane.f32.xlu0 %v1307
  %v1309 = vpop.xlane.xlu0 %1308
  %v1310 = vlaneseq
  %v1311 = vshrl.u32 %v1310, 7
  %v1312 = vsub.s32 0, %v1311
  %v1313 = vrot.slane %v374, %v1312
  %v1314 = vmul.f32 %v1300, %v1313
  %v1315 = vmul.f32 %v1303, %v1313
  %v1316 = vmul.f32 %v1306, %v1313
  %v1317 = vmul.f32 %v1309, %v1313
  %v1318 = vadd.f32 %v1193, %v1314
  %v1319 = vadd.f32 %v1194, %v1315
  %v1320 = vadd.f32 %v1195, %v1316
  %v1321 = vadd.f32 %v1196, %v1317
  %v1323 = vsel %vm329, %v1276, 0
  %v1326 = vsel %vm329, %v1281, 0
  %v1329 = vsel %vm329, %v1286, 0
  %v1332 = vsel %vm329, %v1291, 0
  %1334 = vmatprep.subr.mxu0 0.0
  %1335 = vmatpush1.msra.mxu0 0.0
  %1336 = vmatprep.subr.mxu0 0.0
  %1337 = vmatpush1.msra.mxu0 0.0
  %1338 = vmatprep.subr.mxu0 0.0
  %1339 = vmatpush1.msra.mxu0 0.0
  %1340 = vmatprep.subr.mxu0 0.0
  %1341 = vmatpush1.msra.mxu0 0.0
  %1342 = vmatprep.subr.mxu0 0.0
  %1343 = vmatpush1.msra.mxu0 0.0
  %1344 = vmatprep.subr.mxu0 0.0
  %1345 = vmatpush1.msra.mxu0 0.0
  %1346 = vmatprep.subr.mxu0 0.0
  %1347 = vmatpush1.msra.mxu0 0.0
  %1348 = vmatprep.subr.mxu0 0.0
  %1349 = vmatpush1.msra.mxu0 0.0
  %1350 = vmatprep.subr.mxu0 0.0
  %1351 = vmatpush1.msra.mxu0 0.0
  %1352 = vmatprep.subr.mxu0 0.0
  %1353 = vmatpush1.msra.mxu0 0.0
  %1354 = vmatprep.subr.mxu0 0.0
  %1355 = vmatpush1.msra.mxu0 0.0
  %1356 = vmatprep.subr.mxu0 0.0
  %1357 = vmatpush1.msra.mxu0 0.0
  %1358 = vmatprep.subr.mxu0 0.0
  %1359 = vmatpush1.msra.mxu0 %v368
  %1360 = vmatprep.subr.mxu0 0.0
  %1361 = vmatpush1.msra.mxu0 %v367
  %1362 = vmatprep.subr.mxu0 0.0
  %1363 = vmatpush1.msra.mxu0 %v366
  %1364 = vmatprep.subr.mxu0 0.0
  %1365 = vmatpush1.msra.mxu0 %v365
  %1366 = vmatprep.subr.mxu0 0.0
  %1367 = vmatpush2.msra.mxu0 0.0
  %1368 = vmatprep.subr.mxu0 0.0
  %1369 = vmatpush2.msra.mxu0 0.0
  %1370 = vmatprep.subr.mxu0 0.0
  %1371 = vmatpush2.msra.mxu0 0.0
  %1372 = vmatprep.subr.mxu0 0.0
  %1373 = vmatpush2.msra.mxu0 0.0
  %1374 = vmatprep.subr.mxu0 0.0
  %1375 = vmatpush2.msra.mxu0 0.0
  %1376 = vmatprep.subr.mxu0 0.0
  %1377 = vmatpush2.msra.mxu0 0.0
  %1378 = vmatprep.subr.mxu0 0.0
  %1379 = vmatpush2.msra.mxu0 0.0
  %1380 = vmatprep.subr.mxu0 0.0
  %1381 = vmatpush2.msra.mxu0 0.0
  %1382 = vmatprep.subr.mxu0 0.0
  %1383 = vmatpush2.msra.mxu0 0.0
  %1384 = vmatprep.subr.mxu0 0.0
  %1385 = vmatpush2.msra.mxu0 0.0
  %1386 = vmatprep.subr.mxu0 0.0
  %1387 = vmatpush2.msra.mxu0 0.0
  %1388 = vmatprep.subr.mxu0 0.0
  %1389 = vmatpush2.msra.mxu0 0.0
  %1390 = vmatprep.subr.mxu0 0.0
  %1391 = vmatpush2.msra.mxu0 0.0
  %1392 = vmatprep.subr.mxu0 0.0
  %1393 = vmatpush2.msra.mxu0 0.0
  %1394 = vmatprep.subr.mxu0 0.0
  %1395 = vmatpush2.msra.mxu0 0.0
  %1396 = vmatprep.subr.mxu0 0.0
  %1397 = vmatpush2.msra.mxu0 0.0
  %1398 = vmatprep.mubr.f32.mxu0 0.0
  %1399 = vmatmul.mubr.f32.gmra.mxu0 %v1323
  %v1400 = vpop.f32.mrf.mxu0
  %v1401 = vadd.f32 0.0, %v1400
  %v1402 = vpop.f32.mrf.mxu0
  %1403 = vmatprep.mubr.f32.mxu0 0.0
  %1404 = vmatmul.mubr.f32.gmra.mxu0 %v1326
  %v1405 = vpop.f32.mrf.mxu0
  %v1406 = vadd.f32 0.0, %v1405
  %v1407 = vpop.f32.mrf.mxu0
  %1408 = vmatprep.mubr.f32.mxu0 0.0
  %1409 = vmatmul.mubr.f32.gmra.mxu0 %v1329
  %v1410 = vpop.f32.mrf.mxu0
  %v1411 = vadd.f32 0.0, %v1410
  %v1412 = vpop.f32.mrf.mxu0
  %1413 = vmatprep.mubr.f32.mxu0 0.0
  %1414 = vmatmul.mubr.f32.gmra.mxu0 %v1332
  %v1415 = vpop.f32.mrf.mxu0
  %v1416 = vadd.f32 0.0, %v1415
  %v1417 = vpop.f32.mrf.mxu0
  %1418 = vdwg.mxu0
  %v1419 = vmul.f32 %v1401, %v369
  %v1420 = vmul.f32 %v1406, %v370
  %v1421 = vmul.f32 %v1411, %v371
  %v1422 = vmul.f32 %v1416, %v372
  %v1423 = vsel %vm329, %v1419, 0.0
  %1424 = vadd.xlane.f32.xlu0 %v1423
  %v1425 = vpop.xlane.xlu0 %1424
  %v1426 = vsel %vm329, %v1420, 0.0
  %1427 = vadd.xlane.f32.xlu0 %v1426
  %v1428 = vpop.xlane.xlu0 %1427
  %v1429 = vsel %vm329, %v1421, 0.0
  %1430 = vadd.xlane.f32.xlu0 %v1429
  %v1431 = vpop.xlane.xlu0 %1430
  %v1432 = vsel %vm329, %v1422, 0.0
  %1433 = vadd.xlane.f32.xlu0 %v1432
  %v1434 = vpop.xlane.xlu0 %1433
  %v1435 = vlaneseq
  %v1436 = vshrl.u32 %v1435, 7
  %v1437 = vsub.s32 1, %v1436
  %v1438 = vrot.slane %v374, %v1437
  %v1439 = vmul.f32 %v1425, %v1438
  %v1440 = vmul.f32 %v1428, %v1438
  %v1441 = vmul.f32 %v1431, %v1438
  %v1442 = vmul.f32 %v1434, %v1438
  %v1443 = vadd.f32 %v1318, %v1439
  %v1444 = vadd.f32 %v1319, %v1440
  %v1445 = vadd.f32 %v1320, %v1441
  %v1446 = vadd.f32 %v1321, %v1442
  %v1448 = vsel %vm329, %v1401, 0
  %v1451 = vsel %vm329, %v1406, 0
  %v1454 = vsel %vm329, %v1411, 0
  %v1457 = vsel %vm329, %v1416, 0
  %1459 = vmatprep.subr.mxu0 0.0
  %1460 = vmatpush1.msra.mxu0 0.0
  %1461 = vmatprep.subr.mxu0 0.0
  %1462 = vmatpush1.msra.mxu0 0.0
  %1463 = vmatprep.subr.mxu0 0.0
  %1464 = vmatpush1.msra.mxu0 0.0
  %1465 = vmatprep.subr.mxu0 0.0
  %1466 = vmatpush1.msra.mxu0 0.0
  %1467 = vmatprep.subr.mxu0 0.0
  %1468 = vmatpush1.msra.mxu0 0.0
  %1469 = vmatprep.subr.mxu0 0.0
  %1470 = vmatpush1.msra.mxu0 0.0
  %1471 = vmatprep.subr.mxu0 0.0
  %1472 = vmatpush1.msra.mxu0 0.0
  %1473 = vmatprep.subr.mxu0 0.0
  %1474 = vmatpush1.msra.mxu0 0.0
  %1475 = vmatprep.subr.mxu0 0.0
  %1476 = vmatpush1.msra.mxu0 0.0
  %1477 = vmatprep.subr.mxu0 0.0
  %1478 = vmatpush1.msra.mxu0 0.0
  %1479 = vmatprep.subr.mxu0 0.0
  %1480 = vmatpush1.msra.mxu0 0.0
  %1481 = vmatprep.subr.mxu0 0.0
  %1482 = vmatpush1.msra.mxu0 0.0
  %1483 = vmatprep.subr.mxu0 0.0
  %1484 = vmatpush1.msra.mxu0 %v368
  %1485 = vmatprep.subr.mxu0 0.0
  %1486 = vmatpush1.msra.mxu0 %v367
  %1487 = vmatprep.subr.mxu0 0.0
  %1488 = vmatpush1.msra.mxu0 %v366
  %1489 = vmatprep.subr.mxu0 0.0
  %1490 = vmatpush1.msra.mxu0 %v365
  %1491 = vmatprep.subr.mxu0 0.0
  %1492 = vmatpush2.msra.mxu0 0.0
  %1493 = vmatprep.subr.mxu0 0.0
  %1494 = vmatpush2.msra.mxu0 0.0
  %1495 = vmatprep.subr.mxu0 0.0
  %1496 = vmatpush2.msra.mxu0 0.0
  %1497 = vmatprep.subr.mxu0 0.0
  %1498 = vmatpush2.msra.mxu0 0.0
  %1499 = vmatprep.subr.mxu0 0.0
  %1500 = vmatpush2.msra.mxu0 0.0
  %1501 = vmatprep.subr.mxu0 0.0
  %1502 = vmatpush2.msra.mxu0 0.0
  %1503 = vmatprep.subr.mxu0 0.0
  %1504 = vmatpush2.msra.mxu0 0.0
  %1505 = vmatprep.subr.mxu0 0.0
  %1506 = vmatpush2.msra.mxu0 0.0
  %1507 = vmatprep.subr.mxu0 0.0
  %1508 = vmatpush2.msra.mxu0 0.0
  %1509 = vmatprep.subr.mxu0 0.0
  %1510 = vmatpush2.msra.mxu0 0.0
  %1511 = vmatprep.subr.mxu0 0.0
  %1512 = vmatpush2.msra.mxu0 0.0
  %1513 = vmatprep.subr.mxu0 0.0
  %1514 = vmatpush2.msra.mxu0 0.0
  %1515 = vmatprep.subr.mxu0 0.0
  %1516 = vmatpush2.msra.mxu0 0.0
  %1517 = vmatprep.subr.mxu0 0.0
  %1518 = vmatpush2.msra.mxu0 0.0
  %1519 = vmatprep.subr.mxu0 0.0
  %1520 = vmatpush2.msra.mxu0 0.0
  %1521 = vmatprep.subr.mxu0 0.0
  %1522 = vmatpush2.msra.mxu0 0.0
  %1523 = vmatprep.mubr.f32.mxu0 0.0
  %1524 = vmatmul.mubr.f32.gmra.mxu0 %v1448
  %v1525 = vpop.f32.mrf.mxu0
  %v1526 = vadd.f32 0.0, %v1525
  %v1527 = vpop.f32.mrf.mxu0
  %1528 = vmatprep.mubr.f32.mxu0 0.0
  %1529 = vmatmul.mubr.f32.gmra.mxu0 %v1451
  %v1530 = vpop.f32.mrf.mxu0
  %v1531 = vadd.f32 0.0, %v1530
  %v1532 = vpop.f32.mrf.mxu0
  %1533 = vmatprep.mubr.f32.mxu0 0.0
  %1534 = vmatmul.mubr.f32.gmra.mxu0 %v1454
  %v1535 = vpop.f32.mrf.mxu0
  %v1536 = vadd.f32 0.0, %v1535
  %v1537 = vpop.f32.mrf.mxu0
  %1538 = vmatprep.mubr.f32.mxu0 0.0
  %1539 = vmatmul.mubr.f32.gmra.mxu0 %v1457
  %v1540 = vpop.f32.mrf.mxu0
  %v1541 = vadd.f32 0.0, %v1540
  %v1542 = vpop.f32.mrf.mxu0
  %1543 = vdwg.mxu0
  %v1544 = vmul.f32 %v1526, %v369
  %v1545 = vmul.f32 %v1531, %v370
  %v1546 = vmul.f32 %v1536, %v371
  %v1547 = vmul.f32 %v1541, %v372
  %v1548 = vsel %vm329, %v1544, 0.0
  %1549 = vadd.xlane.f32.xlu0 %v1548
  %v1550 = vpop.xlane.xlu0 %1549
  %v1551 = vsel %vm329, %v1545, 0.0
  %1552 = vadd.xlane.f32.xlu0 %v1551
  %v1553 = vpop.xlane.xlu0 %1552
  %v1554 = vsel %vm329, %v1546, 0.0
  %1555 = vadd.xlane.f32.xlu0 %v1554
  %v1556 = vpop.xlane.xlu0 %1555
  %v1557 = vsel %vm329, %v1547, 0.0
  %1558 = vadd.xlane.f32.xlu0 %v1557
  %v1559 = vpop.xlane.xlu0 %1558
  %v1560 = vlaneseq
  %v1561 = vshrl.u32 %v1560, 7
  %v1562 = vsub.s32 2, %v1561
  %v1563 = vrot.slane %v374, %v1562
  %v1564 = vmul.f32 %v1550, %v1563
  %v1565 = vmul.f32 %v1553, %v1563
  %v1566 = vmul.f32 %v1556, %v1563
  %v1567 = vmul.f32 %v1559, %v1563
  %v1568 = vadd.f32 %v1443, %v1564
  %v1569 = vadd.f32 %v1444, %v1565
  %v1570 = vadd.f32 %v1445, %v1566
  %v1571 = vadd.f32 %v1446, %v1567
  %v1573 = vsel %vm329, %v1526, 0
  %v1576 = vsel %vm329, %v1531, 0
  %v1579 = vsel %vm329, %v1536, 0
  %v1582 = vsel %vm329, %v1541, 0
  %1584 = vmatprep.subr.mxu0 0.0
  %1585 = vmatpush1.msra.mxu0 0.0
  %1586 = vmatprep.subr.mxu0 0.0
  %1587 = vmatpush1.msra.mxu0 0.0
  %1588 = vmatprep.subr.mxu0 0.0
  %1589 = vmatpush1.msra.mxu0 0.0
  %1590 = vmatprep.subr.mxu0 0.0
  %1591 = vmatpush1.msra.mxu0 0.0
  %1592 = vmatprep.subr.mxu0 0.0
  %1593 = vmatpush1.msra.mxu0 0.0
  %1594 = vmatprep.subr.mxu0 0.0
  %1595 = vmatpush1.msra.mxu0 0.0
  %1596 = vmatprep.subr.mxu0 0.0
  %1597 = vmatpush1.msra.mxu0 0.0
  %1598 = vmatprep.subr.mxu0 0.0
  %1599 = vmatpush1.msra.mxu0 0.0
  %1600 = vmatprep.subr.mxu0 0.0
  %1601 = vmatpush1.msra.mxu0 0.0
  %1602 = vmatprep.subr.mxu0 0.0
  %1603 = vmatpush1.msra.mxu0 0.0
  %1604 = vmatprep.subr.mxu0 0.0
  %1605 = vmatpush1.msra.mxu0 0.0
  %1606 = vmatprep.subr.mxu0 0.0
  %1607 = vmatpush1.msra.mxu0 0.0
  %1608 = vmatprep.subr.mxu0 0.0
  %1609 = vmatpush1.msra.mxu0 %v368
  %1610 = vmatprep.subr.mxu0 0.0
  %1611 = vmatpush1.msra.mxu0 %v367
  %1612 = vmatprep.subr.mxu0 0.0
  %1613 = vmatpush1.msra.mxu0 %v366
  %1614 = vmatprep.subr.mxu0 0.0
  %1615 = vmatpush1.msra.mxu0 %v365
  %1616 = vmatprep.subr.mxu0 0.0
  %1617 = vmatpush2.msra.mxu0 0.0
  %1618 = vmatprep.subr.mxu0 0.0
  %1619 = vmatpush2.msra.mxu0 0.0
  %1620 = vmatprep.subr.mxu0 0.0
  %1621 = vmatpush2.msra.mxu0 0.0
  %1622 = vmatprep.subr.mxu0 0.0
  %1623 = vmatpush2.msra.mxu0 0.0
  %1624 = vmatprep.subr.mxu0 0.0
  %1625 = vmatpush2.msra.mxu0 0.0
  %1626 = vmatprep.subr.mxu0 0.0
  %1627 = vmatpush2.msra.mxu0 0.0
  %1628 = vmatprep.subr.mxu0 0.0
  %1629 = vmatpush2.msra.mxu0 0.0
  %1630 = vmatprep.subr.mxu0 0.0
  %1631 = vmatpush2.msra.mxu0 0.0
  %1632 = vmatprep.subr.mxu0 0.0
  %1633 = vmatpush2.msra.mxu0 0.0
  %1634 = vmatprep.subr.mxu0 0.0
  %1635 = vmatpush2.msra.mxu0 0.0
  %1636 = vmatprep.subr.mxu0 0.0
  %1637 = vmatpush2.msra.mxu0 0.0
  %1638 = vmatprep.subr.mxu0 0.0
  %1639 = vmatpush2.msra.mxu0 0.0
  %1640 = vmatprep.subr.mxu0 0.0
  %1641 = vmatpush2.msra.mxu0 0.0
  %1642 = vmatprep.subr.mxu0 0.0
  %1643 = vmatpush2.msra.mxu0 0.0
  %1644 = vmatprep.subr.mxu0 0.0
  %1645 = vmatpush2.msra.mxu0 0.0
  %1646 = vmatprep.subr.mxu0 0.0
  %1647 = vmatpush2.msra.mxu0 0.0
  %1648 = vmatprep.mubr.f32.mxu0 0.0
  %1649 = vmatmul.mubr.f32.gmra.mxu0 %v1573
  %v1650 = vpop.f32.mrf.mxu0
  %v1651 = vadd.f32 0.0, %v1650
  %v1652 = vpop.f32.mrf.mxu0
  %1653 = vmatprep.mubr.f32.mxu0 0.0
  %1654 = vmatmul.mubr.f32.gmra.mxu0 %v1576
  %v1655 = vpop.f32.mrf.mxu0
  %v1656 = vadd.f32 0.0, %v1655
  %v1657 = vpop.f32.mrf.mxu0
  %1658 = vmatprep.mubr.f32.mxu0 0.0
  %1659 = vmatmul.mubr.f32.gmra.mxu0 %v1579
  %v1660 = vpop.f32.mrf.mxu0
  %v1661 = vadd.f32 0.0, %v1660
  %v1662 = vpop.f32.mrf.mxu0
  %1663 = vmatprep.mubr.f32.mxu0 0.0
  %1664 = vmatmul.mubr.f32.gmra.mxu0 %v1582
  %v1665 = vpop.f32.mrf.mxu0
  %v1666 = vadd.f32 0.0, %v1665
  %v1667 = vpop.f32.mrf.mxu0
  %1668 = vdwg.mxu0
  %v1669 = vmul.f32 %v1651, %v369
  %v1670 = vmul.f32 %v1656, %v370
  %v1671 = vmul.f32 %v1661, %v371
  %v1672 = vmul.f32 %v1666, %v372
  %v1673 = vsel %vm329, %v1669, 0.0
  %1674 = vadd.xlane.f32.xlu0 %v1673
  %v1675 = vpop.xlane.xlu0 %1674
  %v1676 = vsel %vm329, %v1670, 0.0
  %1677 = vadd.xlane.f32.xlu0 %v1676
  %v1678 = vpop.xlane.xlu0 %1677
  %v1679 = vsel %vm329, %v1671, 0.0
  %1680 = vadd.xlane.f32.xlu0 %v1679
  %v1681 = vpop.xlane.xlu0 %1680
  %v1682 = vsel %vm329, %v1672, 0.0
  %1683 = vadd.xlane.f32.xlu0 %v1682
  %v1684 = vpop.xlane.xlu0 %1683
  %v1685 = vlaneseq
  %v1686 = vshrl.u32 %v1685, 7
  %v1687 = vsub.s32 3, %v1686
  %v1688 = vrot.slane %v374, %v1687
  %v1689 = vmul.f32 %v1675, %v1688
  %v1690 = vmul.f32 %v1678, %v1688
  %v1691 = vmul.f32 %v1681, %v1688
  %v1692 = vmul.f32 %v1684, %v1688
  %v1693 = vadd.f32 %v1568, %v1689
  %v1694 = vadd.f32 %v1569, %v1690
  %v1695 = vadd.f32 %v1570, %v1691
  %v1696 = vadd.f32 %v1571, %v1692
  %v1698 = vsel %vm329, %v1651, 0
  %v1701 = vsel %vm329, %v1656, 0
  %v1704 = vsel %vm329, %v1661, 0
  %v1707 = vsel %vm329, %v1666, 0
  %1709 = vmatprep.subr.mxu0 0.0
  %1710 = vmatpush1.msra.mxu0 0.0
  %1711 = vmatprep.subr.mxu0 0.0
  %1712 = vmatpush1.msra.mxu0 0.0
  %1713 = vmatprep.subr.mxu0 0.0
  %1714 = vmatpush1.msra.mxu0 0.0
  %1715 = vmatprep.subr.mxu0 0.0
  %1716 = vmatpush1.msra.mxu0 0.0
  %1717 = vmatprep.subr.mxu0 0.0
  %1718 = vmatpush1.msra.mxu0 0.0
  %1719 = vmatprep.subr.mxu0 0.0
  %1720 = vmatpush1.msra.mxu0 0.0
  %1721 = vmatprep.subr.mxu0 0.0
  %1722 = vmatpush1.msra.mxu0 0.0
  %1723 = vmatprep.subr.mxu0 0.0
  %1724 = vmatpush1.msra.mxu0 0.0
  %1725 = vmatprep.subr.mxu0 0.0
  %1726 = vmatpush1.msra.mxu0 0.0
  %1727 = vmatprep.subr.mxu0 0.0
  %1728 = vmatpush1.msra.mxu0 0.0
  %1729 = vmatprep.subr.mxu0 0.0
  %1730 = vmatpush1.msra.mxu0 0.0
  %1731 = vmatprep.subr.mxu0 0.0
  %1732 = vmatpush1.msra.mxu0 0.0
  %1733 = vmatprep.subr.mxu0 0.0
  %1734 = vmatpush1.msra.mxu0 %v368
  %1735 = vmatprep.subr.mxu0 0.0
  %1736 = vmatpush1.msra.mxu0 %v367
  %1737 = vmatprep.subr.mxu0 0.0
  %1738 = vmatpush1.msra.mxu0 %v366
  %1739 = vmatprep.subr.mxu0 0.0
  %1740 = vmatpush1.msra.mxu0 %v365
  %1741 = vmatprep.subr.mxu0 0.0
  %1742 = vmatpush2.msra.mxu0 0.0
  %1743 = vmatprep.subr.mxu0 0.0
  %1744 = vmatpush2.msra.mxu0 0.0
  %1745 = vmatprep.subr.mxu0 0.0
  %1746 = vmatpush2.msra.mxu0 0.0
  %1747 = vmatprep.subr.mxu0 0.0
  %1748 = vmatpush2.msra.mxu0 0.0
  %1749 = vmatprep.subr.mxu0 0.0
  %1750 = vmatpush2.msra.mxu0 0.0
  %1751 = vmatprep.subr.mxu0 0.0
  %1752 = vmatpush2.msra.mxu0 0.0
  %1753 = vmatprep.subr.mxu0 0.0
  %1754 = vmatpush2.msra.mxu0 0.0
  %1755 = vmatprep.subr.mxu0 0.0
  %1756 = vmatpush2.msra.mxu0 0.0
  %1757 = vmatprep.subr.mxu0 0.0
  %1758 = vmatpush2.msra.mxu0 0.0
  %1759 = vmatprep.subr.mxu0 0.0
  %1760 = vmatpush2.msra.mxu0 0.0
  %1761 = vmatprep.subr.mxu0 0.0
  %1762 = vmatpush2.msra.mxu0 0.0
  %1763 = vmatprep.subr.mxu0 0.0
  %1764 = vmatpush2.msra.mxu0 0.0
  %1765 = vmatprep.subr.mxu0 0.0
  %1766 = vmatpush2.msra.mxu0 0.0
  %1767 = vmatprep.subr.mxu0 0.0
  %1768 = vmatpush2.msra.mxu0 0.0
  %1769 = vmatprep.subr.mxu0 0.0
  %1770 = vmatpush2.msra.mxu0 0.0
  %1771 = vmatprep.subr.mxu0 0.0
  %1772 = vmatpush2.msra.mxu0 0.0
  %1773 = vmatprep.mubr.f32.mxu0 0.0
  %1774 = vmatmul.mubr.f32.gmra.mxu0 %v1698
  %v1775 = vpop.f32.mrf.mxu0
  %v1776 = vadd.f32 0.0, %v1775
  %v1777 = vpop.f32.mrf.mxu0
  %1778 = vmatprep.mubr.f32.mxu0 0.0
  %1779 = vmatmul.mubr.f32.gmra.mxu0 %v1701
  %v1780 = vpop.f32.mrf.mxu0
  %v1781 = vadd.f32 0.0, %v1780
  %v1782 = vpop.f32.mrf.mxu0
  %1783 = vmatprep.mubr.f32.mxu0 0.0
  %1784 = vmatmul.mubr.f32.gmra.mxu0 %v1704
  %v1785 = vpop.f32.mrf.mxu0
  %v1786 = vadd.f32 0.0, %v1785
  %v1787 = vpop.f32.mrf.mxu0
  %1788 = vmatprep.mubr.f32.mxu0 0.0
  %1789 = vmatmul.mubr.f32.gmra.mxu0 %v1707
  %v1790 = vpop.f32.mrf.mxu0
  %v1791 = vadd.f32 0.0, %v1790
  %v1792 = vpop.f32.mrf.mxu0
  %1793 = vdwg.mxu0
  %v1794 = vmul.f32 %v1776, %v369
  %v1795 = vmul.f32 %v1781, %v370
  %v1796 = vmul.f32 %v1786, %v371
  %v1797 = vmul.f32 %v1791, %v372
  %v1798 = vsel %vm329, %v1794, 0.0
  %1799 = vadd.xlane.f32.xlu0 %v1798
  %v1800 = vpop.xlane.xlu0 %1799
  %v1801 = vsel %vm329, %v1795, 0.0
  %1802 = vadd.xlane.f32.xlu0 %v1801
  %v1803 = vpop.xlane.xlu0 %1802
  %v1804 = vsel %vm329, %v1796, 0.0
  %1805 = vadd.xlane.f32.xlu0 %v1804
  %v1806 = vpop.xlane.xlu0 %1805
  %v1807 = vsel %vm329, %v1797, 0.0
  %1808 = vadd.xlane.f32.xlu0 %v1807
  %v1809 = vpop.xlane.xlu0 %1808
  %v1810 = vlaneseq
  %v1811 = vshrl.u32 %v1810, 7
  %v1812 = vsub.s32 4, %v1811
  %v1813 = vrot.slane %v374, %v1812
  %v1814 = vmul.f32 %v1800, %v1813
  %v1815 = vmul.f32 %v1803, %v1813
  %v1816 = vmul.f32 %v1806, %v1813
  %v1817 = vmul.f32 %v1809, %v1813
  %v1818 = vadd.f32 %v1693, %v1814
  %v1819 = vadd.f32 %v1694, %v1815
  %v1820 = vadd.f32 %v1695, %v1816
  %v1821 = vadd.f32 %v1696, %v1817
  %v1823 = vsel %vm329, %v1776, 0
  %v1826 = vsel %vm329, %v1781, 0
  %v1829 = vsel %vm329, %v1786, 0
  %v1832 = vsel %vm329, %v1791, 0
  %1834 = vmatprep.subr.mxu0 0.0
  %1835 = vmatpush1.msra.mxu0 0.0
  %1836 = vmatprep.subr.mxu0 0.0
  %1837 = vmatpush1.msra.mxu0 0.0
  %1838 = vmatprep.subr.mxu0 0.0
  %1839 = vmatpush1.msra.mxu0 0.0
  %1840 = vmatprep.subr.mxu0 0.0
  %1841 = vmatpush1.msra.mxu0 0.0
  %1842 = vmatprep.subr.mxu0 0.0
  %1843 = vmatpush1.msra.mxu0 0.0
  %1844 = vmatprep.subr.mxu0 0.0
  %1845 = vmatpush1.msra.mxu0 0.0
  %1846 = vmatprep.subr.mxu0 0.0
  %1847 = vmatpush1.msra.mxu0 0.0
  %1848 = vmatprep.subr.mxu0 0.0
  %1849 = vmatpush1.msra.mxu0 0.0
  %1850 = vmatprep.subr.mxu0 0.0
  %1851 = vmatpush1.msra.mxu0 0.0
  %1852 = vmatprep.subr.mxu0 0.0
  %1853 = vmatpush1.msra.mxu0 0.0
  %1854 = vmatprep.subr.mxu0 0.0
  %1855 = vmatpush1.msra.mxu0 0.0
  %1856 = vmatprep.subr.mxu0 0.0
  %1857 = vmatpush1.msra.mxu0 0.0
  %1858 = vmatprep.subr.mxu0 0.0
  %1859 = vmatpush1.msra.mxu0 %v368
  %1860 = vmatprep.subr.mxu0 0.0
  %1861 = vmatpush1.msra.mxu0 %v367
  %1862 = vmatprep.subr.mxu0 0.0
  %1863 = vmatpush1.msra.mxu0 %v366
  %1864 = vmatprep.subr.mxu0 0.0
  %1865 = vmatpush1.msra.mxu0 %v365
  %1866 = vmatprep.subr.mxu0 0.0
  %1867 = vmatpush2.msra.mxu0 0.0
  %1868 = vmatprep.subr.mxu0 0.0
  %1869 = vmatpush2.msra.mxu0 0.0
  %1870 = vmatprep.subr.mxu0 0.0
  %1871 = vmatpush2.msra.mxu0 0.0
  %1872 = vmatprep.subr.mxu0 0.0
  %1873 = vmatpush2.msra.mxu0 0.0
  %1874 = vmatprep.subr.mxu0 0.0
  %1875 = vmatpush2.msra.mxu0 0.0
  %1876 = vmatprep.subr.mxu0 0.0
  %1877 = vmatpush2.msra.mxu0 0.0
  %1878 = vmatprep.subr.mxu0 0.0
  %1879 = vmatpush2.msra.mxu0 0.0
  %1880 = vmatprep.subr.mxu0 0.0
  %1881 = vmatpush2.msra.mxu0 0.0
  %1882 = vmatprep.subr.mxu0 0.0
  %1883 = vmatpush2.msra.mxu0 0.0
  %1884 = vmatprep.subr.mxu0 0.0
  %1885 = vmatpush2.msra.mxu0 0.0
  %1886 = vmatprep.subr.mxu0 0.0
  %1887 = vmatpush2.msra.mxu0 0.0
  %1888 = vmatprep.subr.mxu0 0.0
  %1889 = vmatpush2.msra.mxu0 0.0
  %1890 = vmatprep.subr.mxu0 0.0
  %1891 = vmatpush2.msra.mxu0 0.0
  %1892 = vmatprep.subr.mxu0 0.0
  %1893 = vmatpush2.msra.mxu0 0.0
  %1894 = vmatprep.subr.mxu0 0.0
  %1895 = vmatpush2.msra.mxu0 0.0
  %1896 = vmatprep.subr.mxu0 0.0
  %1897 = vmatpush2.msra.mxu0 0.0
  %1898 = vmatprep.mubr.f32.mxu0 0.0
  %1899 = vmatmul.mubr.f32.gmra.mxu0 %v1823
  %v1900 = vpop.f32.mrf.mxu0
  %v1901 = vadd.f32 0.0, %v1900
  %v1902 = vpop.f32.mrf.mxu0
  %1903 = vmatprep.mubr.f32.mxu0 0.0
  %1904 = vmatmul.mubr.f32.gmra.mxu0 %v1826
  %v1905 = vpop.f32.mrf.mxu0
  %v1906 = vadd.f32 0.0, %v1905
  %v1907 = vpop.f32.mrf.mxu0
  %1908 = vmatprep.mubr.f32.mxu0 0.0
  %1909 = vmatmul.mubr.f32.gmra.mxu0 %v1829
  %v1910 = vpop.f32.mrf.mxu0
  %v1911 = vadd.f32 0.0, %v1910
  %v1912 = vpop.f32.mrf.mxu0
  %1913 = vmatprep.mubr.f32.mxu0 0.0
  %1914 = vmatmul.mubr.f32.gmra.mxu0 %v1832
  %v1915 = vpop.f32.mrf.mxu0
  %v1916 = vadd.f32 0.0, %v1915
  %v1917 = vpop.f32.mrf.mxu0
  %1918 = vdwg.mxu0
  %v1919 = vmul.f32 %v1901, %v369
  %v1920 = vmul.f32 %v1906, %v370
  %v1921 = vmul.f32 %v1911, %v371
  %v1922 = vmul.f32 %v1916, %v372
  %v1923 = vsel %vm329, %v1919, 0.0
  %1924 = vadd.xlane.f32.xlu0 %v1923
  %v1925 = vpop.xlane.xlu0 %1924
  %v1926 = vsel %vm329, %v1920, 0.0
  %1927 = vadd.xlane.f32.xlu0 %v1926
  %v1928 = vpop.xlane.xlu0 %1927
  %v1929 = vsel %vm329, %v1921, 0.0
  %1930 = vadd.xlane.f32.xlu0 %v1929
  %v1931 = vpop.xlane.xlu0 %1930
  %v1932 = vsel %vm329, %v1922, 0.0
  %1933 = vadd.xlane.f32.xlu0 %v1932
  %v1934 = vpop.xlane.xlu0 %1933
  %v1935 = vlaneseq
  %v1936 = vshrl.u32 %v1935, 7
  %v1937 = vsub.s32 5, %v1936
  %v1938 = vrot.slane %v374, %v1937
  %v1939 = vmul.f32 %v1925, %v1938
  %v1940 = vmul.f32 %v1928, %v1938
  %v1941 = vmul.f32 %v1931, %v1938
  %v1942 = vmul.f32 %v1934, %v1938
  %v1943 = vadd.f32 %v1818, %v1939
  %v1944 = vadd.f32 %v1819, %v1940
  %v1945 = vadd.f32 %v1820, %v1941
  %v1946 = vadd.f32 %v1821, %v1942
  %v1948 = vsel %vm329, %v1901, 0
  %v1951 = vsel %vm329, %v1906, 0
  %v1954 = vsel %vm329, %v1911, 0
  %v1957 = vsel %vm329, %v1916, 0
  %1959 = vmatprep.subr.mxu0 0.0
  %1960 = vmatpush1.msra.mxu0 0.0
  %1961 = vmatprep.subr.mxu0 0.0
  %1962 = vmatpush1.msra.mxu0 0.0
  %1963 = vmatprep.subr.mxu0 0.0
  %1964 = vmatpush1.msra.mxu0 0.0
  %1965 = vmatprep.subr.mxu0 0.0
  %1966 = vmatpush1.msra.mxu0 0.0
  %1967 = vmatprep.subr.mxu0 0.0
  %1968 = vmatpush1.msra.mxu0 0.0
  %1969 = vmatprep.subr.mxu0 0.0
  %1970 = vmatpush1.msra.mxu0 0.0
  %1971 = vmatprep.subr.mxu0 0.0
  %1972 = vmatpush1.msra.mxu0 0.0
  %1973 = vmatprep.subr.mxu0 0.0
  %1974 = vmatpush1.msra.mxu0 0.0
  %1975 = vmatprep.subr.mxu0 0.0
  %1976 = vmatpush1.msra.mxu0 0.0
  %1977 = vmatprep.subr.mxu0 0.0
  %1978 = vmatpush1.msra.mxu0 0.0
  %1979 = vmatprep.subr.mxu0 0.0
  %1980 = vmatpush1.msra.mxu0 0.0
  %1981 = vmatprep.subr.mxu0 0.0
  %1982 = vmatpush1.msra.mxu0 0.0
  %1983 = vmatprep.subr.mxu0 0.0
  %1984 = vmatpush1.msra.mxu0 %v368
  %1985 = vmatprep.subr.mxu0 0.0
  %1986 = vmatpush1.msra.mxu0 %v367
  %1987 = vmatprep.subr.mxu0 0.0
  %1988 = vmatpush1.msra.mxu0 %v366
  %1989 = vmatprep.subr.mxu0 0.0
  %1990 = vmatpush1.msra.mxu0 %v365
  %1991 = vmatprep.subr.mxu0 0.0
  %1992 = vmatpush2.msra.mxu0 0.0
  %1993 = vmatprep.subr.mxu0 0.0
  %1994 = vmatpush2.msra.mxu0 0.0
  %1995 = vmatprep.subr.mxu0 0.0
  %1996 = vmatpush2.msra.mxu0 0.0
  %1997 = vmatprep.subr.mxu0 0.0
  %1998 = vmatpush2.msra.mxu0 0.0
  %1999 = vmatprep.subr.mxu0 0.0
  %2000 = vmatpush2.msra.mxu0 0.0
  %2001 = vmatprep.subr.mxu0 0.0
  %2002 = vmatpush2.msra.mxu0 0.0
  %2003 = vmatprep.subr.mxu0 0.0
  %2004 = vmatpush2.msra.mxu0 0.0
  %2005 = vmatprep.subr.mxu0 0.0
  %2006 = vmatpush2.msra.mxu0 0.0
  %2007 = vmatprep.subr.mxu0 0.0
  %2008 = vmatpush2.msra.mxu0 0.0
  %2009 = vmatprep.subr.mxu0 0.0
  %2010 = vmatpush2.msra.mxu0 0.0
  %2011 = vmatprep.subr.mxu0 0.0
  %2012 = vmatpush2.msra.mxu0 0.0
  %2013 = vmatprep.subr.mxu0 0.0
  %2014 = vmatpush2.msra.mxu0 0.0
  %2015 = vmatprep.subr.mxu0 0.0
  %2016 = vmatpush2.msra.mxu0 0.0
  %2017 = vmatprep.subr.mxu0 0.0
  %2018 = vmatpush2.msra.mxu0 0.0
  %2019 = vmatprep.subr.mxu0 0.0
  %2020 = vmatpush2.msra.mxu0 0.0
  %2021 = vmatprep.subr.mxu0 0.0
  %2022 = vmatpush2.msra.mxu0 0.0
  %2023 = vmatprep.mubr.f32.mxu0 0.0
  %2024 = vmatmul.mubr.f32.gmra.mxu0 %v1948
  %v2025 = vpop.f32.mrf.mxu0
  %v2026 = vadd.f32 0.0, %v2025
  %v2027 = vpop.f32.mrf.mxu0
  %2028 = vmatprep.mubr.f32.mxu0 0.0
  %2029 = vmatmul.mubr.f32.gmra.mxu0 %v1951
  %v2030 = vpop.f32.mrf.mxu0
  %v2031 = vadd.f32 0.0, %v2030
  %v2032 = vpop.f32.mrf.mxu0
  %2033 = vmatprep.mubr.f32.mxu0 0.0
  %2034 = vmatmul.mubr.f32.gmra.mxu0 %v1954
  %v2035 = vpop.f32.mrf.mxu0
  %v2036 = vadd.f32 0.0, %v2035
  %v2037 = vpop.f32.mrf.mxu0
  %2038 = vmatprep.mubr.f32.mxu0 0.0
  %2039 = vmatmul.mubr.f32.gmra.mxu0 %v1957
  %v2040 = vpop.f32.mrf.mxu0
  %v2041 = vadd.f32 0.0, %v2040
  %v2042 = vpop.f32.mrf.mxu0
  %2043 = vdwg.mxu0
  %v2044 = vmul.f32 %v2026, %v369
  %v2045 = vmul.f32 %v2031, %v370
  %v2046 = vmul.f32 %v2036, %v371
  %v2047 = vmul.f32 %v2041, %v372
  %v2048 = vsel %vm329, %v2044, 0.0
  %2049 = vadd.xlane.f32.xlu0 %v2048
  %v2050 = vpop.xlane.xlu0 %2049
  %v2051 = vsel %vm329, %v2045, 0.0
  %2052 = vadd.xlane.f32.xlu0 %v2051
  %v2053 = vpop.xlane.xlu0 %2052
  %v2054 = vsel %vm329, %v2046, 0.0
  %2055 = vadd.xlane.f32.xlu0 %v2054
  %v2056 = vpop.xlane.xlu0 %2055
  %v2057 = vsel %vm329, %v2047, 0.0
  %2058 = vadd.xlane.f32.xlu0 %v2057
  %v2059 = vpop.xlane.xlu0 %2058
  %v2060 = vlaneseq
  %v2061 = vshrl.u32 %v2060, 7
  %v2062 = vsub.s32 6, %v2061
  %v2063 = vrot.slane %v374, %v2062
  %v2064 = vmul.f32 %v2050, %v2063
  %v2065 = vmul.f32 %v2053, %v2063
  %v2066 = vmul.f32 %v2056, %v2063
  %v2067 = vmul.f32 %v2059, %v2063
  %v2068 = vadd.f32 %v1943, %v2064
  %v2069 = vadd.f32 %v1944, %v2065
  %v2070 = vadd.f32 %v1945, %v2066
  %v2071 = vadd.f32 %v1946, %v2067
  %v2073 = vsel %vm329, %v2026, 0
  %v2076 = vsel %vm329, %v2031, 0
  %v2079 = vsel %vm329, %v2036, 0
  %v2082 = vsel %vm329, %v2041, 0
  %2084 = vmatprep.subr.mxu0 0.0
  %2085 = vmatpush1.msra.mxu0 0.0
  %2086 = vmatprep.subr.mxu0 0.0
  %2087 = vmatpush1.msra.mxu0 0.0
  %2088 = vmatprep.subr.mxu0 0.0
  %2089 = vmatpush1.msra.mxu0 0.0
  %2090 = vmatprep.subr.mxu0 0.0
  %2091 = vmatpush1.msra.mxu0 0.0
  %2092 = vmatprep.subr.mxu0 0.0
  %2093 = vmatpush1.msra.mxu0 0.0
  %2094 = vmatprep.subr.mxu0 0.0
  %2095 = vmatpush1.msra.mxu0 0.0
  %2096 = vmatprep.subr.mxu0 0.0
  %2097 = vmatpush1.msra.mxu0 0.0
  %2098 = vmatprep.subr.mxu0 0.0
  %2099 = vmatpush1.msra.mxu0 0.0
  %2100 = vmatprep.subr.mxu0 0.0
  %2101 = vmatpush1.msra.mxu0 0.0
  %2102 = vmatprep.subr.mxu0 0.0
  %2103 = vmatpush1.msra.mxu0 0.0
  %2104 = vmatprep.subr.mxu0 0.0
  %2105 = vmatpush1.msra.mxu0 0.0
  %2106 = vmatprep.subr.mxu0 0.0
  %2107 = vmatpush1.msra.mxu0 0.0
  %2108 = vmatprep.subr.mxu0 0.0
  %2109 = vmatpush1.msra.mxu0 %v368
  %2110 = vmatprep.subr.mxu0 0.0
  %2111 = vmatpush1.msra.mxu0 %v367
  %2112 = vmatprep.subr.mxu0 0.0
  %2113 = vmatpush1.msra.mxu0 %v366
  %2114 = vmatprep.subr.mxu0 0.0
  %2115 = vmatpush1.msra.mxu0 %v365
  %2116 = vmatprep.subr.mxu0 0.0
  %2117 = vmatpush2.msra.mxu0 0.0
  %2118 = vmatprep.subr.mxu0 0.0
  %2119 = vmatpush2.msra.mxu0 0.0
  %2120 = vmatprep.subr.mxu0 0.0
  %2121 = vmatpush2.msra.mxu0 0.0
  %2122 = vmatprep.subr.mxu0 0.0
  %2123 = vmatpush2.msra.mxu0 0.0
  %2124 = vmatprep.subr.mxu0 0.0
  %2125 = vmatpush2.msra.mxu0 0.0
  %2126 = vmatprep.subr.mxu0 0.0
  %2127 = vmatpush2.msra.mxu0 0.0
  %2128 = vmatprep.subr.mxu0 0.0
  %2129 = vmatpush2.msra.mxu0 0.0
  %2130 = vmatprep.subr.mxu0 0.0
  %2131 = vmatpush2.msra.mxu0 0.0
  %2132 = vmatprep.subr.mxu0 0.0
  %2133 = vmatpush2.msra.mxu0 0.0
  %2134 = vmatprep.subr.mxu0 0.0
  %2135 = vmatpush2.msra.mxu0 0.0
  %2136 = vmatprep.subr.mxu0 0.0
  %2137 = vmatpush2.msra.mxu0 0.0
  %2138 = vmatprep.subr.mxu0 0.0
  %2139 = vmatpush2.msra.mxu0 0.0
  %2140 = vmatprep.subr.mxu0 0.0
  %2141 = vmatpush2.msra.mxu0 0.0
  %2142 = vmatprep.subr.mxu0 0.0
  %2143 = vmatpush2.msra.mxu0 0.0
  %2144 = vmatprep.subr.mxu0 0.0
  %2145 = vmatpush2.msra.mxu0 0.0
  %2146 = vmatprep.subr.mxu0 0.0
  %2147 = vmatpush2.msra.mxu0 0.0
  %2148 = vmatprep.mubr.f32.mxu0 0.0
  %2149 = vmatmul.mubr.f32.gmra.mxu0 %v2073
  %v2150 = vpop.f32.mrf.mxu0
  %v2151 = vadd.f32 0.0, %v2150
  %v2152 = vpop.f32.mrf.mxu0
  %2153 = vmatprep.mubr.f32.mxu0 0.0
  %2154 = vmatmul.mubr.f32.gmra.mxu0 %v2076
  %v2155 = vpop.f32.mrf.mxu0
  %v2156 = vadd.f32 0.0, %v2155
  %v2157 = vpop.f32.mrf.mxu0
  %2158 = vmatprep.mubr.f32.mxu0 0.0
  %2159 = vmatmul.mubr.f32.gmra.mxu0 %v2079
  %v2160 = vpop.f32.mrf.mxu0
  %v2161 = vadd.f32 0.0, %v2160
  %v2162 = vpop.f32.mrf.mxu0
  %2163 = vmatprep.mubr.f32.mxu0 0.0
  %2164 = vmatmul.mubr.f32.gmra.mxu0 %v2082
  %v2165 = vpop.f32.mrf.mxu0
  %v2166 = vadd.f32 0.0, %v2165
  %v2167 = vpop.f32.mrf.mxu0
  %2168 = vdwg.mxu0
  %v2169 = vmul.f32 %v2151, %v369
  %v2170 = vmul.f32 %v2156, %v370
  %v2171 = vmul.f32 %v2161, %v371
  %v2172 = vmul.f32 %v2166, %v372
  %v2173 = vsel %vm329, %v2169, 0.0
  %2174 = vadd.xlane.f32.xlu0 %v2173
  %v2175 = vpop.xlane.xlu0 %2174
  %v2176 = vsel %vm329, %v2170, 0.0
  %2177 = vadd.xlane.f32.xlu0 %v2176
  %v2178 = vpop.xlane.xlu0 %2177
  %v2179 = vsel %vm329, %v2171, 0.0
  %2180 = vadd.xlane.f32.xlu0 %v2179
  %v2181 = vpop.xlane.xlu0 %2180
  %v2182 = vsel %vm329, %v2172, 0.0
  %2183 = vadd.xlane.f32.xlu0 %v2182
  %v2184 = vpop.xlane.xlu0 %2183
  %v2185 = vlaneseq
  %v2186 = vshrl.u32 %v2185, 7
  %v2187 = vsub.s32 7, %v2186
  %v2188 = vrot.slane %v374, %v2187
  %v2189 = vmul.f32 %v2175, %v2188
  %v2190 = vmul.f32 %v2178, %v2188
  %v2191 = vmul.f32 %v2181, %v2188
  %v2192 = vmul.f32 %v2184, %v2188
  %v2193 = vadd.f32 %v2068, %v2189
  %v2194 = vadd.f32 %v2069, %v2190
  %v2195 = vadd.f32 %v2070, %v2191
  %v2196 = vadd.f32 %v2071, %v2192
  %v2198 = vsel %vm329, %v2151, 0
  %v2201 = vsel %vm329, %v2156, 0
  %v2204 = vsel %vm329, %v2161, 0
  %v2207 = vsel %vm329, %v2166, 0
  %2209 = vmatprep.subr.mxu0 0.0
  %2210 = vmatpush1.msra.mxu0 0.0
  %2211 = vmatprep.subr.mxu0 0.0
  %2212 = vmatpush1.msra.mxu0 0.0
  %2213 = vmatprep.subr.mxu0 0.0
  %2214 = vmatpush1.msra.mxu0 0.0
  %2215 = vmatprep.subr.mxu0 0.0
  %2216 = vmatpush1.msra.mxu0 0.0
  %2217 = vmatprep.subr.mxu0 0.0
  %2218 = vmatpush1.msra.mxu0 0.0
  %2219 = vmatprep.subr.mxu0 0.0
  %2220 = vmatpush1.msra.mxu0 0.0
  %2221 = vmatprep.subr.mxu0 0.0
  %2222 = vmatpush1.msra.mxu0 0.0
  %2223 = vmatprep.subr.mxu0 0.0
  %2224 = vmatpush1.msra.mxu0 0.0
  %2225 = vmatprep.subr.mxu0 0.0
  %2226 = vmatpush1.msra.mxu0 0.0
  %2227 = vmatprep.subr.mxu0 0.0
  %2228 = vmatpush1.msra.mxu0 0.0
  %2229 = vmatprep.subr.mxu0 0.0
  %2230 = vmatpush1.msra.mxu0 0.0
  %2231 = vmatprep.subr.mxu0 0.0
  %2232 = vmatpush1.msra.mxu0 0.0
  %2233 = vmatprep.subr.mxu0 0.0
  %2234 = vmatpush1.msra.mxu0 %v368
  %2235 = vmatprep.subr.mxu0 0.0
  %2236 = vmatpush1.msra.mxu0 %v367
  %2237 = vmatprep.subr.mxu0 0.0
  %2238 = vmatpush1.msra.mxu0 %v366
  %2239 = vmatprep.subr.mxu0 0.0
  %2240 = vmatpush1.msra.mxu0 %v365
  %2241 = vmatprep.subr.mxu0 0.0
  %2242 = vmatpush2.msra.mxu0 0.0
  %2243 = vmatprep.subr.mxu0 0.0
  %2244 = vmatpush2.msra.mxu0 0.0
  %2245 = vmatprep.subr.mxu0 0.0
  %2246 = vmatpush2.msra.mxu0 0.0
  %2247 = vmatprep.subr.mxu0 0.0
  %2248 = vmatpush2.msra.mxu0 0.0
  %2249 = vmatprep.subr.mxu0 0.0
  %2250 = vmatpush2.msra.mxu0 0.0
  %2251 = vmatprep.subr.mxu0 0.0
  %2252 = vmatpush2.msra.mxu0 0.0
  %2253 = vmatprep.subr.mxu0 0.0
  %2254 = vmatpush2.msra.mxu0 0.0
  %2255 = vmatprep.subr.mxu0 0.0
  %2256 = vmatpush2.msra.mxu0 0.0
  %2257 = vmatprep.subr.mxu0 0.0
  %2258 = vmatpush2.msra.mxu0 0.0
  %2259 = vmatprep.subr.mxu0 0.0
  %2260 = vmatpush2.msra.mxu0 0.0
  %2261 = vmatprep.subr.mxu0 0.0
  %2262 = vmatpush2.msra.mxu0 0.0
  %2263 = vmatprep.subr.mxu0 0.0
  %2264 = vmatpush2.msra.mxu0 0.0
  %2265 = vmatprep.subr.mxu0 0.0
  %2266 = vmatpush2.msra.mxu0 0.0
  %2267 = vmatprep.subr.mxu0 0.0
  %2268 = vmatpush2.msra.mxu0 0.0
  %2269 = vmatprep.subr.mxu0 0.0
  %2270 = vmatpush2.msra.mxu0 0.0
  %2271 = vmatprep.subr.mxu0 0.0
  %2272 = vmatpush2.msra.mxu0 0.0
  %2273 = vmatprep.mubr.f32.mxu0 0.0
  %2274 = vmatmul.mubr.f32.gmra.mxu0 %v2198
  %v2275 = vpop.f32.mrf.mxu0
  %v2276 = vadd.f32 0.0, %v2275
  %v2277 = vpop.f32.mrf.mxu0
  %2278 = vmatprep.mubr.f32.mxu0 0.0
  %2279 = vmatmul.mubr.f32.gmra.mxu0 %v2201
  %v2280 = vpop.f32.mrf.mxu0
  %v2281 = vadd.f32 0.0, %v2280
  %v2282 = vpop.f32.mrf.mxu0
  %2283 = vmatprep.mubr.f32.mxu0 0.0
  %2284 = vmatmul.mubr.f32.gmra.mxu0 %v2204
  %v2285 = vpop.f32.mrf.mxu0
  %v2286 = vadd.f32 0.0, %v2285
  %v2287 = vpop.f32.mrf.mxu0
  %2288 = vmatprep.mubr.f32.mxu0 0.0
  %2289 = vmatmul.mubr.f32.gmra.mxu0 %v2207
  %v2290 = vpop.f32.mrf.mxu0
  %v2291 = vadd.f32 0.0, %v2290
  %v2292 = vpop.f32.mrf.mxu0
  %2293 = vdwg.mxu0
  %v2294 = vmul.f32 %v2276, %v369
  %v2295 = vmul.f32 %v2281, %v370
  %v2296 = vmul.f32 %v2286, %v371
  %v2297 = vmul.f32 %v2291, %v372
  %v2298 = vsel %vm329, %v2294, 0.0
  %2299 = vadd.xlane.f32.xlu0 %v2298
  %v2300 = vpop.xlane.xlu0 %2299
  %v2301 = vsel %vm329, %v2295, 0.0
  %2302 = vadd.xlane.f32.xlu0 %v2301
  %v2303 = vpop.xlane.xlu0 %2302
  %v2304 = vsel %vm329, %v2296, 0.0
  %2305 = vadd.xlane.f32.xlu0 %v2304
  %v2306 = vpop.xlane.xlu0 %2305
  %v2307 = vsel %vm329, %v2297, 0.0
  %2308 = vadd.xlane.f32.xlu0 %v2307
  %v2309 = vpop.xlane.xlu0 %2308
  %v2310 = vlaneseq
  %v2311 = vshrl.u32 %v2310, 7
  %v2312 = vsub.s32 0, %v2311
  %v2313 = vrot.slane %v375, %v2312
  %v2314 = vmul.f32 %v2300, %v2313
  %v2315 = vmul.f32 %v2303, %v2313
  %v2316 = vmul.f32 %v2306, %v2313
  %v2317 = vmul.f32 %v2309, %v2313
  %v2318 = vadd.f32 %v2193, %v2314
  %v2319 = vadd.f32 %v2194, %v2315
  %v2320 = vadd.f32 %v2195, %v2316
  %v2321 = vadd.f32 %v2196, %v2317
  %v2323 = vsel %vm329, %v2276, 0
  %v2326 = vsel %vm329, %v2281, 0
  %v2329 = vsel %vm329, %v2286, 0
  %v2332 = vsel %vm329, %v2291, 0
  %2334 = vmatprep.subr.mxu0 0.0
  %2335 = vmatpush1.msra.mxu0 0.0
  %2336 = vmatprep.subr.mxu0 0.0
  %2337 = vmatpush1.msra.mxu0 0.0
  %2338 = vmatprep.subr.mxu0 0.0
  %2339 = vmatpush1.msra.mxu0 0.0
  %2340 = vmatprep.subr.mxu0 0.0
  %2341 = vmatpush1.msra.mxu0 0.0
  %2342 = vmatprep.subr.mxu0 0.0
  %2343 = vmatpush1.msra.mxu0 0.0
  %2344 = vmatprep.subr.mxu0 0.0
  %2345 = vmatpush1.msra.mxu0 0.0
  %2346 = vmatprep.subr.mxu0 0.0
  %2347 = vmatpush1.msra.mxu0 0.0
  %2348 = vmatprep.subr.mxu0 0.0
  %2349 = vmatpush1.msra.mxu0 0.0
  %2350 = vmatprep.subr.mxu0 0.0
  %2351 = vmatpush1.msra.mxu0 0.0
  %2352 = vmatprep.subr.mxu0 0.0
  %2353 = vmatpush1.msra.mxu0 0.0
  %2354 = vmatprep.subr.mxu0 0.0
  %2355 = vmatpush1.msra.mxu0 0.0
  %2356 = vmatprep.subr.mxu0 0.0
  %2357 = vmatpush1.msra.mxu0 0.0
  %2358 = vmatprep.subr.mxu0 0.0
  %2359 = vmatpush1.msra.mxu0 %v368
  %2360 = vmatprep.subr.mxu0 0.0
  %2361 = vmatpush1.msra.mxu0 %v367
  %2362 = vmatprep.subr.mxu0 0.0
  %2363 = vmatpush1.msra.mxu0 %v366
  %2364 = vmatprep.subr.mxu0 0.0
  %2365 = vmatpush1.msra.mxu0 %v365
  %2366 = vmatprep.subr.mxu0 0.0
  %2367 = vmatpush2.msra.mxu0 0.0
  %2368 = vmatprep.subr.mxu0 0.0
  %2369 = vmatpush2.msra.mxu0 0.0
  %2370 = vmatprep.subr.mxu0 0.0
  %2371 = vmatpush2.msra.mxu0 0.0
  %2372 = vmatprep.subr.mxu0 0.0
  %2373 = vmatpush2.msra.mxu0 0.0
  %2374 = vmatprep.subr.mxu0 0.0
  %2375 = vmatpush2.msra.mxu0 0.0
  %2376 = vmatprep.subr.mxu0 0.0
  %2377 = vmatpush2.msra.mxu0 0.0
  %2378 = vmatprep.subr.mxu0 0.0
  %2379 = vmatpush2.msra.mxu0 0.0
  %2380 = vmatprep.subr.mxu0 0.0
  %2381 = vmatpush2.msra.mxu0 0.0
  %2382 = vmatprep.subr.mxu0 0.0
  %2383 = vmatpush2.msra.mxu0 0.0
  %2384 = vmatprep.subr.mxu0 0.0
  %2385 = vmatpush2.msra.mxu0 0.0
  %2386 = vmatprep.subr.mxu0 0.0
  %2387 = vmatpush2.msra.mxu0 0.0
  %2388 = vmatprep.subr.mxu0 0.0
  %2389 = vmatpush2.msra.mxu0 0.0
  %2390 = vmatprep.subr.mxu0 0.0
  %2391 = vmatpush2.msra.mxu0 0.0
  %2392 = vmatprep.subr.mxu0 0.0
  %2393 = vmatpush2.msra.mxu0 0.0
  %2394 = vmatprep.subr.mxu0 0.0
  %2395 = vmatpush2.msra.mxu0 0.0
  %2396 = vmatprep.subr.mxu0 0.0
  %2397 = vmatpush2.msra.mxu0 0.0
  %2398 = vmatprep.mubr.f32.mxu0 0.0
  %2399 = vmatmul.mubr.f32.gmra.mxu0 %v2323
  %v2400 = vpop.f32.mrf.mxu0
  %v2401 = vadd.f32 0.0, %v2400
  %v2402 = vpop.f32.mrf.mxu0
  %2403 = vmatprep.mubr.f32.mxu0 0.0
  %2404 = vmatmul.mubr.f32.gmra.mxu0 %v2326
  %v2405 = vpop.f32.mrf.mxu0
  %v2406 = vadd.f32 0.0, %v2405
  %v2407 = vpop.f32.mrf.mxu0
  %2408 = vmatprep.mubr.f32.mxu0 0.0
  %2409 = vmatmul.mubr.f32.gmra.mxu0 %v2329
  %v2410 = vpop.f32.mrf.mxu0
  %v2411 = vadd.f32 0.0, %v2410
  %v2412 = vpop.f32.mrf.mxu0
  %2413 = vmatprep.mubr.f32.mxu0 0.0
  %2414 = vmatmul.mubr.f32.gmra.mxu0 %v2332
  %v2415 = vpop.f32.mrf.mxu0
  %v2416 = vadd.f32 0.0, %v2415
  %v2417 = vpop.f32.mrf.mxu0
  %2418 = vdwg.mxu0
  %v2419 = vmul.f32 %v2401, %v369
  %v2420 = vmul.f32 %v2406, %v370
  %v2421 = vmul.f32 %v2411, %v371
  %v2422 = vmul.f32 %v2416, %v372
  %v2423 = vsel %vm329, %v2419, 0.0
  %2424 = vadd.xlane.f32.xlu0 %v2423
  %v2425 = vpop.xlane.xlu0 %2424
  %v2426 = vsel %vm329, %v2420, 0.0
  %2427 = vadd.xlane.f32.xlu0 %v2426
  %v2428 = vpop.xlane.xlu0 %2427
  %v2429 = vsel %vm329, %v2421, 0.0
  %2430 = vadd.xlane.f32.xlu0 %v2429
  %v2431 = vpop.xlane.xlu0 %2430
  %v2432 = vsel %vm329, %v2422, 0.0
  %2433 = vadd.xlane.f32.xlu0 %v2432
  %v2434 = vpop.xlane.xlu0 %2433
  %v2435 = vlaneseq
  %v2436 = vshrl.u32 %v2435, 7
  %v2437 = vsub.s32 1, %v2436
  %v2438 = vrot.slane %v375, %v2437
  %v2439 = vmul.f32 %v2425, %v2438
  %v2440 = vmul.f32 %v2428, %v2438
  %v2441 = vmul.f32 %v2431, %v2438
  %v2442 = vmul.f32 %v2434, %v2438
  %v2443 = vadd.f32 %v2318, %v2439
  %v2444 = vadd.f32 %v2319, %v2440
  %v2445 = vadd.f32 %v2320, %v2441
  %v2446 = vadd.f32 %v2321, %v2442
  %v2448 = vsel %vm329, %v2401, 0
  %v2451 = vsel %vm329, %v2406, 0
  %v2454 = vsel %vm329, %v2411, 0
  %v2457 = vsel %vm329, %v2416, 0
  %2459 = vmatprep.subr.mxu0 0.0
  %2460 = vmatpush1.msra.mxu0 0.0
  %2461 = vmatprep.subr.mxu0 0.0
  %2462 = vmatpush1.msra.mxu0 0.0
  %2463 = vmatprep.subr.mxu0 0.0
  %2464 = vmatpush1.msra.mxu0 0.0
  %2465 = vmatprep.subr.mxu0 0.0
  %2466 = vmatpush1.msra.mxu0 0.0
  %2467 = vmatprep.subr.mxu0 0.0
  %2468 = vmatpush1.msra.mxu0 0.0
  %2469 = vmatprep.subr.mxu0 0.0
  %2470 = vmatpush1.msra.mxu0 0.0
  %2471 = vmatprep.subr.mxu0 0.0
  %2472 = vmatpush1.msra.mxu0 0.0
  %2473 = vmatprep.subr.mxu0 0.0
  %2474 = vmatpush1.msra.mxu0 0.0
  %2475 = vmatprep.subr.mxu0 0.0
  %2476 = vmatpush1.msra.mxu0 0.0
  %2477 = vmatprep.subr.mxu0 0.0
  %2478 = vmatpush1.msra.mxu0 0.0
  %2479 = vmatprep.subr.mxu0 0.0
  %2480 = vmatpush1.msra.mxu0 0.0
  %2481 = vmatprep.subr.mxu0 0.0
  %2482 = vmatpush1.msra.mxu0 0.0
  %2483 = vmatprep.subr.mxu0 0.0
  %2484 = vmatpush1.msra.mxu0 %v368
  %2485 = vmatprep.subr.mxu0 0.0
  %2486 = vmatpush1.msra.mxu0 %v367
  %2487 = vmatprep.subr.mxu0 0.0
  %2488 = vmatpush1.msra.mxu0 %v366
  %2489 = vmatprep.subr.mxu0 0.0
  %2490 = vmatpush1.msra.mxu0 %v365
  %2491 = vmatprep.subr.mxu0 0.0
  %2492 = vmatpush2.msra.mxu0 0.0
  %2493 = vmatprep.subr.mxu0 0.0
  %2494 = vmatpush2.msra.mxu0 0.0
  %2495 = vmatprep.subr.mxu0 0.0
  %2496 = vmatpush2.msra.mxu0 0.0
  %2497 = vmatprep.subr.mxu0 0.0
  %2498 = vmatpush2.msra.mxu0 0.0
  %2499 = vmatprep.subr.mxu0 0.0
  %2500 = vmatpush2.msra.mxu0 0.0
  %2501 = vmatprep.subr.mxu0 0.0
  %2502 = vmatpush2.msra.mxu0 0.0
  %2503 = vmatprep.subr.mxu0 0.0
  %2504 = vmatpush2.msra.mxu0 0.0
  %2505 = vmatprep.subr.mxu0 0.0
  %2506 = vmatpush2.msra.mxu0 0.0
  %2507 = vmatprep.subr.mxu0 0.0
  %2508 = vmatpush2.msra.mxu0 0.0
  %2509 = vmatprep.subr.mxu0 0.0
  %2510 = vmatpush2.msra.mxu0 0.0
  %2511 = vmatprep.subr.mxu0 0.0
  %2512 = vmatpush2.msra.mxu0 0.0
  %2513 = vmatprep.subr.mxu0 0.0
  %2514 = vmatpush2.msra.mxu0 0.0
  %2515 = vmatprep.subr.mxu0 0.0
  %2516 = vmatpush2.msra.mxu0 0.0
  %2517 = vmatprep.subr.mxu0 0.0
  %2518 = vmatpush2.msra.mxu0 0.0
  %2519 = vmatprep.subr.mxu0 0.0
  %2520 = vmatpush2.msra.mxu0 0.0
  %2521 = vmatprep.subr.mxu0 0.0
  %2522 = vmatpush2.msra.mxu0 0.0
  %2523 = vmatprep.mubr.f32.mxu0 0.0
  %2524 = vmatmul.mubr.f32.gmra.mxu0 %v2448
  %v2525 = vpop.f32.mrf.mxu0
  %v2526 = vadd.f32 0.0, %v2525
  %v2527 = vpop.f32.mrf.mxu0
  %2528 = vmatprep.mubr.f32.mxu0 0.0
  %2529 = vmatmul.mubr.f32.gmra.mxu0 %v2451
  %v2530 = vpop.f32.mrf.mxu0
  %v2531 = vadd.f32 0.0, %v2530
  %v2532 = vpop.f32.mrf.mxu0
  %2533 = vmatprep.mubr.f32.mxu0 0.0
  %2534 = vmatmul.mubr.f32.gmra.mxu0 %v2454
  %v2535 = vpop.f32.mrf.mxu0
  %v2536 = vadd.f32 0.0, %v2535
  %v2537 = vpop.f32.mrf.mxu0
  %2538 = vmatprep.mubr.f32.mxu0 0.0
  %2539 = vmatmul.mubr.f32.gmra.mxu0 %v2457
  %v2540 = vpop.f32.mrf.mxu0
  %v2541 = vadd.f32 0.0, %v2540
  %v2542 = vpop.f32.mrf.mxu0
  %2543 = vdwg.mxu0
  %v2544 = vmul.f32 %v2526, %v369
  %v2545 = vmul.f32 %v2531, %v370
  %v2546 = vmul.f32 %v2536, %v371
  %v2547 = vmul.f32 %v2541, %v372
  %v2548 = vsel %vm329, %v2544, 0.0
  %2549 = vadd.xlane.f32.xlu0 %v2548
  %v2550 = vpop.xlane.xlu0 %2549
  %v2551 = vsel %vm329, %v2545, 0.0
  %2552 = vadd.xlane.f32.xlu0 %v2551
  %v2553 = vpop.xlane.xlu0 %2552
  %v2554 = vsel %vm329, %v2546, 0.0
  %2555 = vadd.xlane.f32.xlu0 %v2554
  %v2556 = vpop.xlane.xlu0 %2555
  %v2557 = vsel %vm329, %v2547, 0.0
  %2558 = vadd.xlane.f32.xlu0 %v2557
  %v2559 = vpop.xlane.xlu0 %2558
  %v2560 = vlaneseq
  %v2561 = vshrl.u32 %v2560, 7
  %v2562 = vsub.s32 2, %v2561
  %v2563 = vrot.slane %v375, %v2562
  %v2564 = vmul.f32 %v2550, %v2563
  %v2565 = vmul.f32 %v2553, %v2563
  %v2566 = vmul.f32 %v2556, %v2563
  %v2567 = vmul.f32 %v2559, %v2563
  %v2568 = vadd.f32 %v2443, %v2564
  %v2569 = vadd.f32 %v2444, %v2565
  %v2570 = vadd.f32 %v2445, %v2566
  %v2571 = vadd.f32 %v2446, %v2567
  %v2573 = vsel %vm329, %v2526, 0
  %v2576 = vsel %vm329, %v2531, 0
  %v2579 = vsel %vm329, %v2536, 0
  %v2582 = vsel %vm329, %v2541, 0
  %2584 = vmatprep.subr.mxu0 0.0
  %2585 = vmatpush1.msra.mxu0 0.0
  %2586 = vmatprep.subr.mxu0 0.0
  %2587 = vmatpush1.msra.mxu0 0.0
  %2588 = vmatprep.subr.mxu0 0.0
  %2589 = vmatpush1.msra.mxu0 0.0
  %2590 = vmatprep.subr.mxu0 0.0
  %2591 = vmatpush1.msra.mxu0 0.0
  %2592 = vmatprep.subr.mxu0 0.0
  %2593 = vmatpush1.msra.mxu0 0.0
  %2594 = vmatprep.subr.mxu0 0.0
  %2595 = vmatpush1.msra.mxu0 0.0
  %2596 = vmatprep.subr.mxu0 0.0
  %2597 = vmatpush1.msra.mxu0 0.0
  %2598 = vmatprep.subr.mxu0 0.0
  %2599 = vmatpush1.msra.mxu0 0.0
  %2600 = vmatprep.subr.mxu0 0.0
  %2601 = vmatpush1.msra.mxu0 0.0
  %2602 = vmatprep.subr.mxu0 0.0
  %2603 = vmatpush1.msra.mxu0 0.0
  %2604 = vmatprep.subr.mxu0 0.0
  %2605 = vmatpush1.msra.mxu0 0.0
  %2606 = vmatprep.subr.mxu0 0.0
  %2607 = vmatpush1.msra.mxu0 0.0
  %2608 = vmatprep.subr.mxu0 0.0
  %2609 = vmatpush1.msra.mxu0 %v368
  %2610 = vmatprep.subr.mxu0 0.0
  %2611 = vmatpush1.msra.mxu0 %v367
  %2612 = vmatprep.subr.mxu0 0.0
  %2613 = vmatpush1.msra.mxu0 %v366
  %2614 = vmatprep.subr.mxu0 0.0
  %2615 = vmatpush1.msra.mxu0 %v365
  %2616 = vmatprep.subr.mxu0 0.0
  %2617 = vmatpush2.msra.mxu0 0.0
  %2618 = vmatprep.subr.mxu0 0.0
  %2619 = vmatpush2.msra.mxu0 0.0
  %2620 = vmatprep.subr.mxu0 0.0
  %2621 = vmatpush2.msra.mxu0 0.0
  %2622 = vmatprep.subr.mxu0 0.0
  %2623 = vmatpush2.msra.mxu0 0.0
  %2624 = vmatprep.subr.mxu0 0.0
  %2625 = vmatpush2.msra.mxu0 0.0
  %2626 = vmatprep.subr.mxu0 0.0
  %2627 = vmatpush2.msra.mxu0 0.0
  %2628 = vmatprep.subr.mxu0 0.0
  %2629 = vmatpush2.msra.mxu0 0.0
  %2630 = vmatprep.subr.mxu0 0.0
  %2631 = vmatpush2.msra.mxu0 0.0
  %2632 = vmatprep.subr.mxu0 0.0
  %2633 = vmatpush2.msra.mxu0 0.0
  %2634 = vmatprep.subr.mxu0 0.0
  %2635 = vmatpush2.msra.mxu0 0.0
  %2636 = vmatprep.subr.mxu0 0.0
  %2637 = vmatpush2.msra.mxu0 0.0
  %2638 = vmatprep.subr.mxu0 0.0
  %2639 = vmatpush2.msra.mxu0 0.0
  %2640 = vmatprep.subr.mxu0 0.0
  %2641 = vmatpush2.msra.mxu0 0.0
  %2642 = vmatprep.subr.mxu0 0.0
  %2643 = vmatpush2.msra.mxu0 0.0
  %2644 = vmatprep.subr.mxu0 0.0
  %2645 = vmatpush2.msra.mxu0 0.0
  %2646 = vmatprep.subr.mxu0 0.0
  %2647 = vmatpush2.msra.mxu0 0.0
  %2648 = vmatprep.mubr.f32.mxu0 0.0
  %2649 = vmatmul.mubr.f32.gmra.mxu0 %v2573
  %v2650 = vpop.f32.mrf.mxu0
  %v2651 = vadd.f32 0.0, %v2650
  %v2652 = vpop.f32.mrf.mxu0
  %2653 = vmatprep.mubr.f32.mxu0 0.0
  %2654 = vmatmul.mubr.f32.gmra.mxu0 %v2576
  %v2655 = vpop.f32.mrf.mxu0
  %v2656 = vadd.f32 0.0, %v2655
  %v2657 = vpop.f32.mrf.mxu0
  %2658 = vmatprep.mubr.f32.mxu0 0.0
  %2659 = vmatmul.mubr.f32.gmra.mxu0 %v2579
  %v2660 = vpop.f32.mrf.mxu0
  %v2661 = vadd.f32 0.0, %v2660
  %v2662 = vpop.f32.mrf.mxu0
  %2663 = vmatprep.mubr.f32.mxu0 0.0
  %2664 = vmatmul.mubr.f32.gmra.mxu0 %v2582
  %v2665 = vpop.f32.mrf.mxu0
  %v2666 = vadd.f32 0.0, %v2665
  %v2667 = vpop.f32.mrf.mxu0
  %2668 = vdwg.mxu0
  %v2669 = vmul.f32 %v2651, %v369
  %v2670 = vmul.f32 %v2656, %v370
  %v2671 = vmul.f32 %v2661, %v371
  %v2672 = vmul.f32 %v2666, %v372
  %v2673 = vsel %vm329, %v2669, 0.0
  %2674 = vadd.xlane.f32.xlu0 %v2673
  %v2675 = vpop.xlane.xlu0 %2674
  %v2676 = vsel %vm329, %v2670, 0.0
  %2677 = vadd.xlane.f32.xlu0 %v2676
  %v2678 = vpop.xlane.xlu0 %2677
  %v2679 = vsel %vm329, %v2671, 0.0
  %2680 = vadd.xlane.f32.xlu0 %v2679
  %v2681 = vpop.xlane.xlu0 %2680
  %v2682 = vsel %vm329, %v2672, 0.0
  %2683 = vadd.xlane.f32.xlu0 %v2682
  %v2684 = vpop.xlane.xlu0 %2683
  %v2685 = vlaneseq
  %v2686 = vshrl.u32 %v2685, 7
  %v2687 = vsub.s32 3, %v2686
  %v2688 = vrot.slane %v375, %v2687
  %v2689 = vmul.f32 %v2675, %v2688
  %v2690 = vmul.f32 %v2678, %v2688
  %v2691 = vmul.f32 %v2681, %v2688
  %v2692 = vmul.f32 %v2684, %v2688
  %v2693 = vadd.f32 %v2568, %v2689
  %v2694 = vadd.f32 %v2569, %v2690
  %v2695 = vadd.f32 %v2570, %v2691
  %v2696 = vadd.f32 %v2571, %v2692
  %v2697 = vld [vmem:[%s6] sm:$0xff]
  %v2698 = vld [vmem:[%s7] sm:$0x1]
  %v2700 = vlaneseq
  %v2701 = vshrl.u32 %v2700, 7
  %v2702 = vsub.s32 0, %v2701
  %v2703 = vrot.slane %v2698, %v2702
  %vm2705 = vcmask 64512
  %v2707 = vsel %vm2705, %v87, 0
  %v2710 = vsel %vm2705, %v88, 0
  %v2713 = vsel %vm2705, %v89, 0
  %v2716 = vsel %vm2705, %v90, 0
  %v2719 = vsel %vm2705, %v91, 0
  %v2722 = vsel %vm2705, %v92, 0
  %v2725 = vsel %vm2705, %v93, 0
  %v2728 = vsel %vm2705, %v94, 0
  %2730 = vmatprep.subr.mxu0 0.0
  %2731 = vmatpush1.msra.mxu0 0.0
  %2732 = vmatprep.subr.mxu0 0.0
  %2733 = vmatpush1.msra.mxu0 0.0
  %2734 = vmatprep.subr.mxu0 0.0
  %2735 = vmatpush1.msra.mxu0 0.0
  %2736 = vmatprep.subr.mxu0 0.0
  %2737 = vmatpush1.msra.mxu0 0.0
  %2738 = vmatprep.subr.mxu0 0.0
  %2739 = vmatpush1.msra.mxu0 0.0
  %2740 = vmatprep.subr.mxu0 0.0
  %2741 = vmatpush1.msra.mxu0 0.0
  %2742 = vmatprep.subr.mxu0 0.0
  %2743 = vmatpush1.msra.mxu0 0.0
  %2744 = vmatprep.subr.mxu0 0.0
  %2745 = vmatpush1.msra.mxu0 0.0
  %2746 = vmatprep.subr.mxu0 0.0
  %2747 = vmatpush1.msra.mxu0 0.0
  %2748 = vmatprep.subr.mxu0 0.0
  %2749 = vmatpush1.msra.mxu0 0.0
  %2750 = vmatprep.subr.mxu0 0.0
  %2751 = vmatpush1.msra.mxu0 0.0
  %2752 = vmatprep.subr.mxu0 0.0
  %2753 = vmatpush1.msra.mxu0 0.0
  %2754 = vmatprep.subr.mxu0 0.0
  %2755 = vmatpush1.msra.mxu0 0.0
  %2756 = vmatprep.subr.mxu0 0.0
  %2757 = vmatpush1.msra.mxu0 0.0
  %2758 = vmatprep.subr.mxu0 0.0
  %2759 = vmatpush1.msra.mxu0 0.0
  %2760 = vmatprep.subr.mxu0 0.0
  %2761 = vmatpush1.msra.mxu0 %v2697
  %2762 = vmatprep.subr.mxu0 0.0
  %2763 = vmatpush2.msra.mxu0 0.0
  %2764 = vmatprep.subr.mxu0 0.0
  %2765 = vmatpush2.msra.mxu0 0.0
  %2766 = vmatprep.subr.mxu0 0.0
  %2767 = vmatpush2.msra.mxu0 0.0
  %2768 = vmatprep.subr.mxu0 0.0
  %2769 = vmatpush2.msra.mxu0 0.0
  %2770 = vmatprep.subr.mxu0 0.0
  %2771 = vmatpush2.msra.mxu0 0.0
  %2772 = vmatprep.subr.mxu0 0.0
  %2773 = vmatpush2.msra.mxu0 0.0
  %2774 = vmatprep.subr.mxu0 0.0
  %2775 = vmatpush2.msra.mxu0 0.0
  %2776 = vmatprep.subr.mxu0 0.0
  %2777 = vmatpush2.msra.mxu0 0.0
  %2778 = vmatprep.subr.mxu0 0.0
  %2779 = vmatpush2.msra.mxu0 0.0
  %2780 = vmatprep.subr.mxu0 0.0
  %2781 = vmatpush2.msra.mxu0 0.0
  %2782 = vmatprep.subr.mxu0 0.0
  %2783 = vmatpush2.msra.mxu0 0.0
  %2784 = vmatprep.subr.mxu0 0.0
  %2785 = vmatpush2.msra.mxu0 0.0
  %2786 = vmatprep.subr.mxu0 0.0
  %2787 = vmatpush2.msra.mxu0 0.0
  %2788 = vmatprep.subr.mxu0 0.0
  %2789 = vmatpush2.msra.mxu0 0.0
  %2790 = vmatprep.subr.mxu0 0.0
  %2791 = vmatpush2.msra.mxu0 0.0
  %2792 = vmatprep.subr.mxu0 0.0
  %2793 = vmatpush2.msra.mxu0 0.0
  %2794 = vmatprep.mubr.f32.mxu0 0.0
  %2795 = vmatmul.mubr.f32.gmra.mxu0 %v2707
  %v2796 = vpop.f32.mrf.mxu0
  %v2797 = vadd.f32 %v2703, %v2796
  %v2798 = vpop.f32.mrf.mxu0
  %2799 = vmatprep.mubr.f32.mxu0 0.0
  %2800 = vmatmul.mubr.f32.gmra.mxu0 %v2710
  %v2801 = vpop.f32.mrf.mxu0
  %v2802 = vadd.f32 %v2703, %v2801
  %v2803 = vpop.f32.mrf.mxu0
  %2804 = vmatprep.mubr.f32.mxu0 0.0
  %2805 = vmatmul.mubr.f32.gmra.mxu0 %v2713
  %v2806 = vpop.f32.mrf.mxu0
  %v2807 = vadd.f32 %v2703, %v2806
  %v2808 = vpop.f32.mrf.mxu0
  %2809 = vmatprep.mubr.f32.mxu0 0.0
  %2810 = vmatmul.mubr.f32.gmra.mxu0 %v2716
  %v2811 = vpop.f32.mrf.mxu0
  %v2812 = vadd.f32 %v2703, %v2811
  %v2813 = vpop.f32.mrf.mxu0
  %2814 = vmatprep.mubr.f32.mxu0 0.0
  %2815 = vmatmul.mubr.f32.gmra.mxu0 %v2719
  %v2816 = vpop.f32.mrf.mxu0
  %v2817 = vadd.f32 %v2703, %v2816
  %v2818 = vpop.f32.mrf.mxu0
  %2819 = vmatprep.mubr.f32.mxu0 0.0
  %2820 = vmatmul.mubr.f32.gmra.mxu0 %v2722
  %v2821 = vpop.f32.mrf.mxu0
  %v2822 = vadd.f32 %v2703, %v2821
  %v2823 = vpop.f32.mrf.mxu0
  %2824 = vmatprep.mubr.f32.mxu0 0.0
  %2825 = vmatmul.mubr.f32.gmra.mxu0 %v2725
  %v2826 = vpop.f32.mrf.mxu0
  %v2827 = vadd.f32 %v2703, %v2826
  %v2828 = vpop.f32.mrf.mxu0
  %2829 = vmatprep.mubr.f32.mxu0 0.0
  %2830 = vmatmul.mubr.f32.gmra.mxu0 %v2728
  %v2831 = vpop.f32.mrf.mxu0
  %v2832 = vadd.f32 %v2703, %v2831
  %v2833 = vpop.f32.mrf.mxu0
  %2834 = vdwg.mxu0
  %2835 = vxpose.xlu0.b32.start [1/16] %v113, 128
  %2836 = vxpose.xlu0.b32.cont [2/16] %v114, 128
  %2837 = vxpose.xlu0.b32.cont [3/16] %v115, 128
  %2838 = vxpose.xlu0.b32.cont [4/16] %v116, 128
  %2839 = vxpose.xlu0.b32.cont [5/16] 0.0, 128
  %2840 = vxpose.xlu0.b32.cont [6/16] 0.0, 128
  %2841 = vxpose.xlu0.b32.cont [7/16] 0.0, 128
  %2842 = vxpose.xlu0.b32.cont [8/16] 0.0, 128
  %2843 = vxpose.xlu0.b32.cont [9/16] 0.0, 128
  %2844 = vxpose.xlu0.b32.cont [10/16] 0.0, 128
  %2845 = vxpose.xlu0.b32.cont [11/16] 0.0, 128
  %2846 = vxpose.xlu0.b32.cont [12/16] 0.0, 128
  %2847 = vxpose.xlu0.b32.cont [13/16] 0.0, 128
  %2848 = vxpose.xlu0.b32.cont [14/16] 0.0, 128
  %2849 = vxpose.xlu0.b32.cont [15/16] 0.0, 128
  %2850 = vxpose.xlu0.b32.end [16/16] 0.0, 128
  %v2851 = vpop.trf.xlu0
  %v2852 = vpop.trf.xlu0
  %v2853 = vpop.trf.xlu0
  %v2854 = vpop.trf.xlu0
  %v2855 = vpop.trf.xlu0
  %v2856 = vpop.trf.xlu0
  %v2857 = vpop.trf.xlu0
  %v2858 = vpop.trf.xlu0
  %v2859 = vpop.trf.xlu0
  %v2860 = vpop.trf.xlu0
  %v2861 = vpop.trf.xlu0
  %v2862 = vpop.trf.xlu0
  %v2863 = vpop.trf.xlu0
  %v2864 = vpop.trf.xlu0
  %v2865 = vpop.trf.xlu0
  %v2866 = vpop.trf.xlu0
  %v2868 = vsel %vm329, %v2851, 0
  %v2871 = vsel %vm329, %v2852, 0
  %v2874 = vsel %vm329, %v2853, 0
  %v2877 = vsel %vm329, %v2854, 0
  %v2880 = vsel %vm329, %v2855, 0
  %v2883 = vsel %vm329, %v2856, 0
  %v2886 = vsel %vm329, %v2857, 0
  %v2889 = vsel %vm329, %v2858, 0
  %2891 = vmatprep.subr.mxu0 0.0
  %2892 = vmatpush1.msra.mxu0 0.0
  %2893 = vmatprep.subr.mxu0 0.0
  %2894 = vmatpush1.msra.mxu0 0.0
  %2895 = vmatprep.subr.mxu0 0.0
  %2896 = vmatpush1.msra.mxu0 0.0
  %2897 = vmatprep.subr.mxu0 0.0
  %2898 = vmatpush1.msra.mxu0 0.0
  %2899 = vmatprep.subr.mxu0 0.0
  %2900 = vmatpush1.msra.mxu0 0.0
  %2901 = vmatprep.subr.mxu0 0.0
  %2902 = vmatpush1.msra.mxu0 0.0
  %2903 = vmatprep.subr.mxu0 0.0
  %2904 = vmatpush1.msra.mxu0 0.0
  %2905 = vmatprep.subr.mxu0 0.0
  %2906 = vmatpush1.msra.mxu0 0.0
  %2907 = vmatprep.subr.mxu0 0.0
  %2908 = vmatpush1.msra.mxu0 0.0
  %2909 = vmatprep.subr.mxu0 0.0
  %2910 = vmatpush1.msra.mxu0 0.0
  %2911 = vmatprep.subr.mxu0 0.0
  %2912 = vmatpush1.msra.mxu0 0.0
  %2913 = vmatprep.subr.mxu0 0.0
  %2914 = vmatpush1.msra.mxu0 0.0
  %2915 = vmatprep.subr.mxu0 0.0
  %2916 = vmatpush1.msra.mxu0 %v2696
  %2917 = vmatprep.subr.mxu0 0.0
  %2918 = vmatpush1.msra.mxu0 %v2695
  %2919 = vmatprep.subr.mxu0 0.0
  %2920 = vmatpush1.msra.mxu0 %v2694
  %2921 = vmatprep.subr.mxu0 0.0
  %2922 = vmatpush1.msra.mxu0 %v2693
  %2923 = vmatprep.subr.mxu0 0.0
  %2924 = vmatpush2.msra.mxu0 0.0
  %2925 = vmatprep.subr.mxu0 0.0
  %2926 = vmatpush2.msra.mxu0 0.0
  %2927 = vmatprep.subr.mxu0 0.0
  %2928 = vmatpush2.msra.mxu0 0.0
  %2929 = vmatprep.subr.mxu0 0.0
  %2930 = vmatpush2.msra.mxu0 0.0
  %2931 = vmatprep.subr.mxu0 0.0
  %2932 = vmatpush2.msra.mxu0 0.0
  %2933 = vmatprep.subr.mxu0 0.0
  %2934 = vmatpush2.msra.mxu0 0.0
  %2935 = vmatprep.subr.mxu0 0.0
  %2936 = vmatpush2.msra.mxu0 0.0
  %2937 = vmatprep.subr.mxu0 0.0
  %2938 = vmatpush2.msra.mxu0 0.0
  %2939 = vmatprep.subr.mxu0 0.0
  %2940 = vmatpush2.msra.mxu0 0.0
  %2941 = vmatprep.subr.mxu0 0.0
  %2942 = vmatpush2.msra.mxu0 0.0
  %2943 = vmatprep.subr.mxu0 0.0
  %2944 = vmatpush2.msra.mxu0 0.0
  %2945 = vmatprep.subr.mxu0 0.0
  %2946 = vmatpush2.msra.mxu0 0.0
  %2947 = vmatprep.subr.mxu0 0.0
  %2948 = vmatpush2.msra.mxu0 0.0
  %2949 = vmatprep.subr.mxu0 0.0
  %2950 = vmatpush2.msra.mxu0 0.0
  %2951 = vmatprep.subr.mxu0 0.0
  %2952 = vmatpush2.msra.mxu0 0.0
  %2953 = vmatprep.subr.mxu0 0.0
  %2954 = vmatpush2.msra.mxu0 0.0
  %2955 = vmatprep.mubr.f32.mxu0 0.0
  %2956 = vmatmul.mubr.f32.gmra.mxu0 %v2868
  %v2957 = vpop.f32.mrf.mxu0
  %v2958 = vadd.f32 %v2797, %v2957
  %v2959 = vpop.f32.mrf.mxu0
  %2960 = vmatprep.mubr.f32.mxu0 0.0
  %2961 = vmatmul.mubr.f32.gmra.mxu0 %v2871
  %v2962 = vpop.f32.mrf.mxu0
  %v2963 = vadd.f32 %v2802, %v2962
  %v2964 = vpop.f32.mrf.mxu0
  %2965 = vmatprep.mubr.f32.mxu0 0.0
  %2966 = vmatmul.mubr.f32.gmra.mxu0 %v2874
  %v2967 = vpop.f32.mrf.mxu0
  %v2968 = vadd.f32 %v2807, %v2967
  %v2969 = vpop.f32.mrf.mxu0
  %2970 = vmatprep.mubr.f32.mxu0 0.0
  %2971 = vmatmul.mubr.f32.gmra.mxu0 %v2877
  %v2972 = vpop.f32.mrf.mxu0
  %v2973 = vadd.f32 %v2812, %v2972
  %v2974 = vpop.f32.mrf.mxu0
  %2975 = vmatprep.mubr.f32.mxu0 0.0
  %2976 = vmatmul.mubr.f32.gmra.mxu0 %v2880
  %v2977 = vpop.f32.mrf.mxu0
  %v2978 = vadd.f32 %v2817, %v2977
  %v2979 = vpop.f32.mrf.mxu0
  %2980 = vmatprep.mubr.f32.mxu0 0.0
  %2981 = vmatmul.mubr.f32.gmra.mxu0 %v2883
  %v2982 = vpop.f32.mrf.mxu0
  %v2983 = vadd.f32 %v2822, %v2982
  %v2984 = vpop.f32.mrf.mxu0
  %2985 = vmatprep.mubr.f32.mxu0 0.0
  %2986 = vmatmul.mubr.f32.gmra.mxu0 %v2886
  %v2987 = vpop.f32.mrf.mxu0
  %v2988 = vadd.f32 %v2827, %v2987
  %v2989 = vpop.f32.mrf.mxu0
  %2990 = vmatprep.mubr.f32.mxu0 0.0
  %2991 = vmatmul.mubr.f32.gmra.mxu0 %v2889
  %v2992 = vpop.f32.mrf.mxu0
  %v2993 = vadd.f32 %v2832, %v2992
  %v2994 = vpop.f32.mrf.mxu0
  %2995 = vdwg.mxu0
  %v2996 = vmax.f32 %v2958, 0.0
  %v2997 = vmax.f32 %v2963, 0.0
  %v2998 = vmax.f32 %v2968, 0.0
  %v2999 = vmax.f32 %v2973, 0.0
  %v3000 = vmax.f32 %v2978, 0.0
  %v3001 = vmax.f32 %v2983, 0.0
  %v3002 = vmax.f32 %v2988, 0.0
  %v3003 = vmax.f32 %v2993, 0.0
  %3004 = vmatprep.subr.mxu0 0.0
  %3005 = vmatpush1.msra.mxu0 0.0
  %3006 = vmatprep.subr.mxu0 0.0
  %3007 = vmatpush1.msra.mxu0 0.0
  %3008 = vmatprep.subr.mxu0 0.0
  %3009 = vmatpush1.msra.mxu0 0.0
  %3010 = vmatprep.subr.mxu0 0.0
  %3011 = vmatpush1.msra.mxu0 0.0
  %3012 = vmatprep.subr.mxu0 0.0
  %3013 = vmatpush1.msra.mxu0 0.0
  %3014 = vmatprep.subr.mxu0 0.0
  %3015 = vmatpush1.msra.mxu0 0.0
  %3016 = vmatprep.subr.mxu0 0.0
  %3017 = vmatpush1.msra.mxu0 0.0
  %3018 = vmatprep.subr.mxu0 0.0
  %3019 = vmatpush1.msra.mxu0 0.0
  %3020 = vmatprep.subr.mxu0 0.0
  %3021 = vmatpush1.msra.mxu0 %v3003
  %3022 = vmatprep.subr.mxu0 0.0
  %3023 = vmatpush1.msra.mxu0 %v3002
  %3024 = vmatprep.subr.mxu0 0.0
  %3025 = vmatpush1.msra.mxu0 %v3001
  %3026 = vmatprep.subr.mxu0 0.0
  %3027 = vmatpush1.msra.mxu0 %v3000
  %3028 = vmatprep.subr.mxu0 0.0
  %3029 = vmatpush1.msra.mxu0 %v2999
  %3030 = vmatprep.subr.mxu0 0.0
  %3031 = vmatpush1.msra.mxu0 %v2998
  %3032 = vmatprep.subr.mxu0 0.0
  %3033 = vmatpush1.msra.mxu0 %v2997
  %3034 = vmatprep.subr.mxu0 0.0
  %3035 = vmatpush1.msra.mxu0 %v2996
  %3036 = vmatprep.subr.mxu0 0.0
  %3037 = vmatpush2.msra.mxu0 0.0
  %3038 = vmatprep.subr.mxu0 0.0
  %3039 = vmatpush2.msra.mxu0 0.0
  %3040 = vmatprep.subr.mxu0 0.0
  %3041 = vmatpush2.msra.mxu0 0.0
  %3042 = vmatprep.subr.mxu0 0.0
  %3043 = vmatpush2.msra.mxu0 0.0
  %3044 = vmatprep.subr.mxu0 0.0
  %3045 = vmatpush2.msra.mxu0 0.0
  %3046 = vmatprep.subr.mxu0 0.0
  %3047 = vmatpush2.msra.mxu0 0.0
  %3048 = vmatprep.subr.mxu0 0.0
  %3049 = vmatpush2.msra.mxu0 0.0
  %3050 = vmatprep.subr.mxu0 0.0
  %3051 = vmatpush2.msra.mxu0 0.0
  %3052 = vmatprep.subr.mxu0 0.0
  %3053 = vmatpush2.msra.mxu0 0.0
  %3054 = vmatprep.subr.mxu0 0.0
  %3055 = vmatpush2.msra.mxu0 0.0
  %3056 = vmatprep.subr.mxu0 0.0
  %3057 = vmatpush2.msra.mxu0 0.0
  %3058 = vmatprep.subr.mxu0 0.0
  %3059 = vmatpush2.msra.mxu0 0.0
  %3060 = vmatprep.subr.mxu0 0.0
  %3061 = vmatpush2.msra.mxu0 0.0
  %3062 = vmatprep.subr.mxu0 0.0
  %3063 = vmatpush2.msra.mxu0 0.0
  %3064 = vmatprep.subr.mxu0 0.0
  %3065 = vmatpush2.msra.mxu0 0.0
  %3066 = vmatprep.subr.mxu0 0.0
  %3067 = vmatpush2.msra.mxu0 0.0
  %3068 = vmatprep.mubr.f32.mxu0 0.0
  %3069 = vmatmul.mubr.f32.gmra.mxu0 %v148
  %v3070 = vpop.f32.mrf.mxu0
  %v3071 = vadd.f32 %v2693, %v3070
  %v3072 = vpop.f32.mrf.mxu0
  %3073 = vmatprep.mubr.f32.mxu0 0.0
  %3074 = vmatmul.mubr.f32.gmra.mxu0 %v151
  %v3075 = vpop.f32.mrf.mxu0
  %v3076 = vadd.f32 %v2694, %v3075
  %v3077 = vpop.f32.mrf.mxu0
  %3078 = vmatprep.mubr.f32.mxu0 0.0
  %3079 = vmatmul.mubr.f32.gmra.mxu0 %v154
  %v3080 = vpop.f32.mrf.mxu0
  %v3081 = vadd.f32 %v2695, %v3080
  %v3082 = vpop.f32.mrf.mxu0
  %3083 = vmatprep.mubr.f32.mxu0 0.0
  %3084 = vmatmul.mubr.f32.gmra.mxu0 %v157
  %v3085 = vpop.f32.mrf.mxu0
  %v3086 = vadd.f32 %v2696, %v3085
  %v3087 = vpop.f32.mrf.mxu0
  %3088 = vdwg.mxu0
  %v3089 = vld [vmem:[%s8] sm:$0xff]
  %v3090 = vld [vmem:[%s8 + $0x8] sm:$0xff]
  %v3091 = vld [vmem:[%s9] sm:$0x1]
  %v3093 = vlaneseq
  %v3094 = vshrl.u32 %v3093, 7
  %v3095 = vsub.s32 0, %v3094
  %v3096 = vrot.slane %v3091, %v3095
  %vm3098 = vcmask 130048
  %v3100 = vsel %vm3098, %v3071, 0
  %v3103 = vsel %vm3098, %v3076, 0
  %v3106 = vsel %vm3098, %v3081, 0
  %v3109 = vsel %vm3098, %v3086, 0
  %3111 = vmatprep.subr.mxu0 0.0
  %3112 = vmatpush1.msra.mxu0 0.0
  %3113 = vmatprep.subr.mxu0 0.0
  %3114 = vmatpush1.msra.mxu0 0.0
  %3115 = vmatprep.subr.mxu0 0.0
  %3116 = vmatpush1.msra.mxu0 0.0
  %3117 = vmatprep.subr.mxu0 0.0
  %3118 = vmatpush1.msra.mxu0 0.0
  %3119 = vmatprep.subr.mxu0 0.0
  %3120 = vmatpush1.msra.mxu0 0.0
  %3121 = vmatprep.subr.mxu0 0.0
  %3122 = vmatpush1.msra.mxu0 0.0
  %3123 = vmatprep.subr.mxu0 0.0
  %3124 = vmatpush1.msra.mxu0 0.0
  %3125 = vmatprep.subr.mxu0 0.0
  %3126 = vmatpush1.msra.mxu0 0.0
  %3127 = vmatprep.subr.mxu0 0.0
  %3128 = vmatpush1.msra.mxu0 0.0
  %3129 = vmatprep.subr.mxu0 0.0
  %3130 = vmatpush1.msra.mxu0 0.0
  %3131 = vmatprep.subr.mxu0 0.0
  %3132 = vmatpush1.msra.mxu0 0.0
  %3133 = vmatprep.subr.mxu0 0.0
  %3134 = vmatpush1.msra.mxu0 0.0
  %3135 = vmatprep.subr.mxu0 0.0
  %3136 = vmatpush1.msra.mxu0 0.0
  %3137 = vmatprep.subr.mxu0 0.0
  %3138 = vmatpush1.msra.mxu0 0.0
  %3139 = vmatprep.subr.mxu0 0.0
  %3140 = vmatpush1.msra.mxu0 %v3090
  %3141 = vmatprep.subr.mxu0 0.0
  %3142 = vmatpush1.msra.mxu0 %v3089
  %3143 = vmatprep.subr.mxu0 0.0
  %3144 = vmatpush2.msra.mxu0 0.0
  %3145 = vmatprep.subr.mxu0 0.0
  %3146 = vmatpush2.msra.mxu0 0.0
  %3147 = vmatprep.subr.mxu0 0.0
  %3148 = vmatpush2.msra.mxu0 0.0
  %3149 = vmatprep.subr.mxu0 0.0
  %3150 = vmatpush2.msra.mxu0 0.0
  %3151 = vmatprep.subr.mxu0 0.0
  %3152 = vmatpush2.msra.mxu0 0.0
  %3153 = vmatprep.subr.mxu0 0.0
  %3154 = vmatpush2.msra.mxu0 0.0
  %3155 = vmatprep.subr.mxu0 0.0
  %3156 = vmatpush2.msra.mxu0 0.0
  %3157 = vmatprep.subr.mxu0 0.0
  %3158 = vmatpush2.msra.mxu0 0.0
  %3159 = vmatprep.subr.mxu0 0.0
  %3160 = vmatpush2.msra.mxu0 0.0
  %3161 = vmatprep.subr.mxu0 0.0
  %3162 = vmatpush2.msra.mxu0 0.0
  %3163 = vmatprep.subr.mxu0 0.0
  %3164 = vmatpush2.msra.mxu0 0.0
  %3165 = vmatprep.subr.mxu0 0.0
  %3166 = vmatpush2.msra.mxu0 0.0
  %3167 = vmatprep.subr.mxu0 0.0
  %3168 = vmatpush2.msra.mxu0 0.0
  %3169 = vmatprep.subr.mxu0 0.0
  %3170 = vmatpush2.msra.mxu0 0.0
  %3171 = vmatprep.subr.mxu0 0.0
  %3172 = vmatpush2.msra.mxu0 0.0
  %3173 = vmatprep.subr.mxu0 0.0
  %3174 = vmatpush2.msra.mxu0 0.0
  %3175 = vmatprep.mubr.f32.mxu0 0.0
  %3176 = vmatmul.mubr.f32.gmra.mxu0 %v3100
  %v3177 = vpop.f32.mrf.mxu0
  %v3178 = vadd.f32 %v3096, %v3177
  %v3179 = vpop.f32.mrf.mxu0
  %3180 = vmatprep.mubr.f32.mxu0 0.0
  %3181 = vmatmul.mubr.f32.gmra.mxu0 %v3103
  %v3182 = vpop.f32.mrf.mxu0
  %v3183 = vadd.f32 %v3096, %v3182
  %v3184 = vpop.f32.mrf.mxu0
  %3185 = vmatprep.mubr.f32.mxu0 0.0
  %3186 = vmatmul.mubr.f32.gmra.mxu0 %v3106
  %v3187 = vpop.f32.mrf.mxu0
  %v3188 = vadd.f32 %v3096, %v3187
  %v3189 = vpop.f32.mrf.mxu0
  %3190 = vmatprep.mubr.f32.mxu0 0.0
  %3191 = vmatmul.mubr.f32.gmra.mxu0 %v3109
  %v3192 = vpop.f32.mrf.mxu0
  %v3193 = vadd.f32 %v3096, %v3192
  %v3194 = vpop.f32.mrf.mxu0
  %3195 = vdwg.mxu0
  %v3196 = vmax.f32 %v3178, 0.0
  %v3197 = vmax.f32 %v3183, 0.0
  %v3198 = vmax.f32 %v3188, 0.0
  %v3199 = vmax.f32 %v3193, 0.0
  %v3200 = vld [vmem:[%s10] sm:$0xff]
  %v3201 = vld [vmem:[%s10 + $0x8] sm:$0xff]
  %v3202 = vld [vmem:[%s11] sm:$0x1]
  %v3204 = vlaneseq
  %v3205 = vshrl.u32 %v3204, 7
  %v3206 = vsub.s32 0, %v3205
  %v3207 = vrot.slane %v3202, %v3206
  %v3210 = vsel %vm3098, %v3196, 0
  %v3213 = vsel %vm3098, %v3197, 0
  %v3216 = vsel %vm3098, %v3198, 0
  %v3219 = vsel %vm3098, %v3199, 0
  %3221 = vmatprep.subr.mxu0 0.0
  %3222 = vmatpush1.msra.mxu0 0.0
  %3223 = vmatprep.subr.mxu0 0.0
  %3224 = vmatpush1.msra.mxu0 0.0
  %3225 = vmatprep.subr.mxu0 0.0
  %3226 = vmatpush1.msra.mxu0 0.0
  %3227 = vmatprep.subr.mxu0 0.0
  %3228 = vmatpush1.msra.mxu0 0.0
  %3229 = vmatprep.subr.mxu0 0.0
  %3230 = vmatpush1.msra.mxu0 0.0
  %3231 = vmatprep.subr.mxu0 0.0
  %3232 = vmatpush1.msra.mxu0 0.0
  %3233 = vmatprep.subr.mxu0 0.0
  %3234 = vmatpush1.msra.mxu0 0.0
  %3235 = vmatprep.subr.mxu0 0.0
  %3236 = vmatpush1.msra.mxu0 0.0
  %3237 = vmatprep.subr.mxu0 0.0
  %3238 = vmatpush1.msra.mxu0 0.0
  %3239 = vmatprep.subr.mxu0 0.0
  %3240 = vmatpush1.msra.mxu0 0.0
  %3241 = vmatprep.subr.mxu0 0.0
  %3242 = vmatpush1.msra.mxu0 0.0
  %3243 = vmatprep.subr.mxu0 0.0
  %3244 = vmatpush1.msra.mxu0 0.0
  %3245 = vmatprep.subr.mxu0 0.0
  %3246 = vmatpush1.msra.mxu0 0.0
  %3247 = vmatprep.subr.mxu0 0.0
  %3248 = vmatpush1.msra.mxu0 0.0
  %3249 = vmatprep.subr.mxu0 0.0
  %3250 = vmatpush1.msra.mxu0 %v3201
  %3251 = vmatprep.subr.mxu0 0.0
  %3252 = vmatpush1.msra.mxu0 %v3200
  %3253 = vmatprep.subr.mxu0 0.0
  %3254 = vmatpush2.msra.mxu0 0.0
  %3255 = vmatprep.subr.mxu0 0.0
  %3256 = vmatpush2.msra.mxu0 0.0
  %3257 = vmatprep.subr.mxu0 0.0
  %3258 = vmatpush2.msra.mxu0 0.0
  %3259 = vmatprep.subr.mxu0 0.0
  %3260 = vmatpush2.msra.mxu0 0.0
  %3261 = vmatprep.subr.mxu0 0.0
  %3262 = vmatpush2.msra.mxu0 0.0
  %3263 = vmatprep.subr.mxu0 0.0
  %3264 = vmatpush2.msra.mxu0 0.0
  %3265 = vmatprep.subr.mxu0 0.0
  %3266 = vmatpush2.msra.mxu0 0.0
  %3267 = vmatprep.subr.mxu0 0.0
  %3268 = vmatpush2.msra.mxu0 0.0
  %3269 = vmatprep.subr.mxu0 0.0
  %3270 = vmatpush2.msra.mxu0 0.0
  %3271 = vmatprep.subr.mxu0 0.0
  %3272 = vmatpush2.msra.mxu0 0.0
  %3273 = vmatprep.subr.mxu0 0.0
  %3274 = vmatpush2.msra.mxu0 0.0
  %3275 = vmatprep.subr.mxu0 0.0
  %3276 = vmatpush2.msra.mxu0 0.0
  %3277 = vmatprep.subr.mxu0 0.0
  %3278 = vmatpush2.msra.mxu0 0.0
  %3279 = vmatprep.subr.mxu0 0.0
  %3280 = vmatpush2.msra.mxu0 0.0
  %3281 = vmatprep.subr.mxu0 0.0
  %3282 = vmatpush2.msra.mxu0 0.0
  %3283 = vmatprep.subr.mxu0 0.0
  %3284 = vmatpush2.msra.mxu0 0.0
  %3285 = vmatprep.mubr.f32.mxu0 0.0
  %3286 = vmatmul.mubr.f32.gmra.mxu0 %v3210
  %v3287 = vpop.f32.mrf.mxu0
  %v3288 = vadd.f32 %v3207, %v3287
  %v3289 = vpop.f32.mrf.mxu0
  %3290 = vmatprep.mubr.f32.mxu0 0.0
  %3291 = vmatmul.mubr.f32.gmra.mxu0 %v3213
  %v3292 = vpop.f32.mrf.mxu0
  %v3293 = vadd.f32 %v3207, %v3292
  %v3294 = vpop.f32.mrf.mxu0
  %3295 = vmatprep.mubr.f32.mxu0 0.0
  %3296 = vmatmul.mubr.f32.gmra.mxu0 %v3216
  %v3297 = vpop.f32.mrf.mxu0
  %v3298 = vadd.f32 %v3207, %v3297
  %v3299 = vpop.f32.mrf.mxu0
  %3300 = vmatprep.mubr.f32.mxu0 0.0
  %3301 = vmatmul.mubr.f32.gmra.mxu0 %v3219
  %v3302 = vpop.f32.mrf.mxu0
  %v3303 = vadd.f32 %v3207, %v3302
  %v3304 = vpop.f32.mrf.mxu0
  %3305 = vdwg.mxu0
  %v3306 = vadd.f32 %v3288, %v2693
  %v3307 = vadd.f32 %v3293, %v2694
  %v3308 = vadd.f32 %v3298, %v2695
  %v3309 = vadd.f32 %v3303, %v2696
  %v3310 = vld [vmem:[%s12] sm:$0x1]
  %v3312 = vlaneseq
  %v3313 = vshrl.u32 %v3312, 7
  %v3314 = vsub.s32 0, %v3313
  %v3315 = vrot.slane %v3310, %v3314
  %v3317 = vmul.f32 %v3306, %v3315
  %v3318 = vmul.f32 %v3307, %v3315
  %v3319 = vmul.f32 %v3308, %v3315
  %v3320 = vmul.f32 %v3309, %v3315
  %v3321 = vld [vmem:[%s13] sm:$0x1]
  %v3323 = vlaneseq
  %v3324 = vshrl.u32 %v3323, 7
  %v3325 = vsub.s32 0, %v3324
  %v3326 = vrot.slane %v3321, %v3325
  %v3328 = vadd.f32 %v3317, %v3326
  %v3329 = vadd.f32 %v3318, %v3326
  %v3330 = vadd.f32 %v3319, %v3326
  %v3331 = vadd.f32 %v3320, %v3326
  %v3332 = vld [vmem:[%s14] sm:$0xff]
  %v3333 = vld [vmem:[%s14 + $0x8] sm:$0xff]
  %v3334 = vld [vmem:[%s15] sm:$0x1]
  %v3336 = vlaneseq
  %v3337 = vshrl.u32 %v3336, 7
  %v3338 = vsub.s32 0, %v3337
  %v3339 = vrot.slane %v3334, %v3338
  %v3342 = vsel %vm3098, %v2693, 0
  %v3345 = vsel %vm3098, %v2694, 0
  %v3348 = vsel %vm3098, %v2695, 0
  %v3351 = vsel %vm3098, %v2696, 0
  %3353 = vmatprep.subr.mxu0 0.0
  %3354 = vmatpush1.msra.mxu0 0.0
  %3355 = vmatprep.subr.mxu0 0.0
  %3356 = vmatpush1.msra.mxu0 0.0
  %3357 = vmatprep.subr.mxu0 0.0
  %3358 = vmatpush1.msra.mxu0 0.0
  %3359 = vmatprep.subr.mxu0 0.0
  %3360 = vmatpush1.msra.mxu0 0.0
  %3361 = vmatprep.subr.mxu0 0.0
  %3362 = vmatpush1.msra.mxu0 0.0
  %3363 = vmatprep.subr.mxu0 0.0
  %3364 = vmatpush1.msra.mxu0 0.0
  %3365 = vmatprep.subr.mxu0 0.0
  %3366 = vmatpush1.msra.mxu0 0.0
  %3367 = vmatprep.subr.mxu0 0.0
  %3368 = vmatpush1.msra.mxu0 0.0
  %3369 = vmatprep.subr.mxu0 0.0
  %3370 = vmatpush1.msra.mxu0 0.0
  %3371 = vmatprep.subr.mxu0 0.0
  %3372 = vmatpush1.msra.mxu0 0.0
  %3373 = vmatprep.subr.mxu0 0.0
  %3374 = vmatpush1.msra.mxu0 0.0
  %3375 = vmatprep.subr.mxu0 0.0
  %3376 = vmatpush1.msra.mxu0 0.0
  %3377 = vmatprep.subr.mxu0 0.0
  %3378 = vmatpush1.msra.mxu0 0.0
  %3379 = vmatprep.subr.mxu0 0.0
  %3380 = vmatpush1.msra.mxu0 0.0
  %3381 = vmatprep.subr.mxu0 0.0
  %3382 = vmatpush1.msra.mxu0 %v3333
  %3383 = vmatprep.subr.mxu0 0.0
  %3384 = vmatpush1.msra.mxu0 %v3332
  %3385 = vmatprep.subr.mxu0 0.0
  %3386 = vmatpush2.msra.mxu0 0.0
  %3387 = vmatprep.subr.mxu0 0.0
  %3388 = vmatpush2.msra.mxu0 0.0
  %3389 = vmatprep.subr.mxu0 0.0
  %3390 = vmatpush2.msra.mxu0 0.0
  %3391 = vmatprep.subr.mxu0 0.0
  %3392 = vmatpush2.msra.mxu0 0.0
  %3393 = vmatprep.subr.mxu0 0.0
  %3394 = vmatpush2.msra.mxu0 0.0
  %3395 = vmatprep.subr.mxu0 0.0
  %3396 = vmatpush2.msra.mxu0 0.0
  %3397 = vmatprep.subr.mxu0 0.0
  %3398 = vmatpush2.msra.mxu0 0.0
  %3399 = vmatprep.subr.mxu0 0.0
  %3400 = vmatpush2.msra.mxu0 0.0
  %3401 = vmatprep.subr.mxu0 0.0
  %3402 = vmatpush2.msra.mxu0 0.0
  %3403 = vmatprep.subr.mxu0 0.0
  %3404 = vmatpush2.msra.mxu0 0.0
  %3405 = vmatprep.subr.mxu0 0.0
  %3406 = vmatpush2.msra.mxu0 0.0
  %3407 = vmatprep.subr.mxu0 0.0
  %3408 = vmatpush2.msra.mxu0 0.0
  %3409 = vmatprep.subr.mxu0 0.0
  %3410 = vmatpush2.msra.mxu0 0.0
  %3411 = vmatprep.subr.mxu0 0.0
  %3412 = vmatpush2.msra.mxu0 0.0
  %3413 = vmatprep.subr.mxu0 0.0
  %3414 = vmatpush2.msra.mxu0 0.0
  %3415 = vmatprep.subr.mxu0 0.0
  %3416 = vmatpush2.msra.mxu0 0.0
  %3417 = vmatprep.mubr.f32.mxu0 0.0
  %3418 = vmatmul.mubr.f32.gmra.mxu0 %v3342
  %v3419 = vpop.f32.mrf.mxu0
  %v3420 = vadd.f32 %v3339, %v3419
  %v3421 = vpop.f32.mrf.mxu0
  %3422 = vmatprep.mubr.f32.mxu0 0.0
  %3423 = vmatmul.mubr.f32.gmra.mxu0 %v3345
  %v3424 = vpop.f32.mrf.mxu0
  %v3425 = vadd.f32 %v3339, %v3424
  %v3426 = vpop.f32.mrf.mxu0
  %3427 = vmatprep.mubr.f32.mxu0 0.0
  %3428 = vmatmul.mubr.f32.gmra.mxu0 %v3348
  %v3429 = vpop.f32.mrf.mxu0
  %v3430 = vadd.f32 %v3339, %v3429
  %v3431 = vpop.f32.mrf.mxu0
  %3432 = vmatprep.mubr.f32.mxu0 0.0
  %3433 = vmatmul.mubr.f32.gmra.mxu0 %v3351
  %v3434 = vpop.f32.mrf.mxu0
  %v3435 = vadd.f32 %v3339, %v3434
  %v3436 = vpop.f32.mrf.mxu0
  %3437 = vdwg.mxu0
  %v3438 = vld [vmem:[%s16] sm:$0xff]
  %v3439 = vld [vmem:[%s16 + $0x8] sm:$0xff]
  %v3440 = vld [vmem:[%s17] sm:$0x1]
  %v3442 = vlaneseq
  %v3443 = vshrl.u32 %v3442, 7
  %v3444 = vsub.s32 0, %v3443
  %v3445 = vrot.slane %v3440, %v3444
  %v3447 = vadd.f32 %v3445, 0.0
  %3452 = vrot.lane.b32.xlu0 %v3420, 112
  %v3453 = vpop.permute.xlu0 %3452
  %3454 = vrot.lane.b32.xlu0 %v3425, 112
  %v3455 = vpop.permute.xlu0 %3454
  %3456 = vrot.lane.b32.xlu0 %v3430, 112
  %v3457 = vpop.permute.xlu0 %3456
  %3458 = vrot.lane.b32.xlu0 %v3435, 112
  %v3459 = vpop.permute.xlu0 %3458
  %vm3460 = vcmask 31744
  %v3461 = vsel %vm3460, %v3420, 0
  %v3463 = vsel %vm3460, %v3425, 0
  %v3465 = vsel %vm3460, %v3430, 0
  %v3467 = vsel %vm3460, %v3435, 0
  %v3469 = vsel %vm3460, %v3453, 0
  %v3471 = vsel %vm3460, %v3455, 0
  %v3473 = vsel %vm3460, %v3457, 0
  %v3475 = vsel %vm3460, %v3459, 0
  %3477 = vmatprep.subr.mxu0 0.0
  %3478 = vmatpush1.xpose.msra.mxu0 0.0
  %3479 = vmatprep.subr.mxu0 0.0
  %3480 = vmatpush1.xpose.msra.mxu0 0.0
  %3481 = vmatprep.subr.mxu0 0.0
  %3482 = vmatpush1.xpose.msra.mxu0 0.0
  %3483 = vmatprep.subr.mxu0 0.0
  %3484 = vmatpush1.xpose.msra.mxu0 0.0
  %3485 = vmatprep.subr.mxu0 0.0
  %3486 = vmatpush1.xpose.msra.mxu0 0.0
  %3487 = vmatprep.subr.mxu0 0.0
  %3488 = vmatpush1.xpose.msra.mxu0 0.0
  %3489 = vmatprep.subr.mxu0 0.0
  %3490 = vmatpush1.xpose.msra.mxu0 0.0
  %3491 = vmatprep.subr.mxu0 0.0
  %3492 = vmatpush1.xpose.msra.mxu0 0.0
  %3493 = vmatprep.subr.mxu0 0.0
  %3494 = vmatpush1.xpose.msra.mxu0 0.0
  %3495 = vmatprep.subr.mxu0 0.0
  %3496 = vmatpush1.xpose.msra.mxu0 0.0
  %3497 = vmatprep.subr.mxu0 0.0
  %3498 = vmatpush1.xpose.msra.mxu0 0.0
  %3499 = vmatprep.subr.mxu0 0.0
  %3500 = vmatpush1.xpose.msra.mxu0 0.0
  %3501 = vmatprep.subr.mxu0 0.0
  %3502 = vmatpush1.xpose.msra.mxu0 %v3475
  %3503 = vmatprep.subr.mxu0 0.0
  %3504 = vmatpush1.xpose.msra.mxu0 %v3473
  %3505 = vmatprep.subr.mxu0 0.0
  %3506 = vmatpush1.xpose.msra.mxu0 %v3471
  %3507 = vmatprep.subr.mxu0 0.0
  %3508 = vmatpush1.xpose.msra.mxu0 %v3469
  %3509 = vmatprep.subr.mxu0 0.0
  %3510 = vmatpush2.xpose.msra.mxu0 0.0
  %3511 = vmatprep.subr.mxu0 0.0
  %3512 = vmatpush2.xpose.msra.mxu0 0.0
  %3513 = vmatprep.subr.mxu0 0.0
  %3514 = vmatpush2.xpose.msra.mxu0 0.0
  %3515 = vmatprep.subr.mxu0 0.0
  %3516 = vmatpush2.xpose.msra.mxu0 0.0
  %3517 = vmatprep.subr.mxu0 0.0
  %3518 = vmatpush2.xpose.msra.mxu0 0.0
  %3519 = vmatprep.subr.mxu0 0.0
  %3520 = vmatpush2.xpose.msra.mxu0 0.0
  %3521 = vmatprep.subr.mxu0 0.0
  %3522 = vmatpush2.xpose.msra.mxu0 0.0
  %3523 = vmatprep.subr.mxu0 0.0
  %3524 = vmatpush2.xpose.msra.mxu0 0.0
  %3525 = vmatprep.subr.mxu0 0.0
  %3526 = vmatpush2.xpose.msra.mxu0 0.0
  %3527 = vmatprep.subr.mxu0 0.0
  %3528 = vmatpush2.xpose.msra.mxu0 0.0
  %3529 = vmatprep.subr.mxu0 0.0
  %3530 = vmatpush2.xpose.msra.mxu0 0.0
  %3531 = vmatprep.subr.mxu0 0.0
  %3532 = vmatpush2.xpose.msra.mxu0 0.0
  %3533 = vmatprep.subr.mxu0 0.0
  %3534 = vmatpush2.xpose.msra.mxu0 0.0
  %3535 = vmatprep.subr.mxu0 0.0
  %3536 = vmatpush2.xpose.msra.mxu0 0.0
  %3537 = vmatprep.subr.mxu0 0.0
  %3538 = vmatpush2.xpose.msra.mxu0 0.0
  %3539 = vmatprep.subr.mxu0 0.0
  %3540 = vmatpush2.xpose.msra.mxu0 0.0
  %3541 = vmatprep.mubr.f32.mxu0 0.0
  %3542 = vmatmul.mubr.f32.gmra.mxu0 %v3461
  %v3543 = vpop.f32.mrf.mxu0
  %v3544 = vadd.f32 0.0, %v3543
  %v3545 = vpop.f32.mrf.mxu0
  %3546 = vmatprep.mubr.f32.mxu0 0.0
  %3547 = vmatmul.mubr.f32.gmra.mxu0 %v3463
  %v3548 = vpop.f32.mrf.mxu0
  %v3549 = vadd.f32 0.0, %v3548
  %v3550 = vpop.f32.mrf.mxu0
  %3551 = vmatprep.mubr.f32.mxu0 0.0
  %3552 = vmatmul.mubr.f32.gmra.mxu0 %v3465
  %v3553 = vpop.f32.mrf.mxu0
  %v3554 = vadd.f32 0.0, %v3553
  %v3555 = vpop.f32.mrf.mxu0
  %3556 = vmatprep.mubr.f32.mxu0 0.0
  %3557 = vmatmul.mubr.f32.gmra.mxu0 %v3467
  %v3558 = vpop.f32.mrf.mxu0
  %v3559 = vadd.f32 0.0, %v3558
  %v3560 = vpop.f32.mrf.mxu0
  %3561 = vdwg.mxu0
  %v3562 = vsel %vm329, %v3544, -inf
  %3563 = vmax.xlane.f32.xlu0 %v3562
  %v3564 = vpop.xlane.xlu0 %3563
  %v3565 = vsel %vm329, %v3549, -inf
  %3566 = vmax.xlane.f32.xlu0 %v3565
  %v3567 = vpop.xlane.xlu0 %3566
  %v3568 = vsel %vm329, %v3554, -inf
  %3569 = vmax.xlane.f32.xlu0 %v3568
  %v3570 = vpop.xlane.xlu0 %3569
  %v3571 = vsel %vm329, %v3559, -inf
  %3572 = vmax.xlane.f32.xlu0 %v3571
  %v3573 = vpop.xlane.xlu0 %3572
  %v3574 = vsub.f32 %v3544, %v3564
  %v3575 = vsub.f32 %v3549, %v3567
  %v3576 = vsub.f32 %v3554, %v3570
  %v3577 = vsub.f32 %v3559, %v3573
  %v3578 = vmul.f32 %v3574, 1.442695
  %v3579 = vpow.pop %v3578
  %v3580 = vmul.f32 %v3575, 1.442695
  %v3581 = vpow.pop %v3580
  %v3582 = vmul.f32 %v3576, 1.442695
  %v3583 = vpow.pop %v3582
  %v3584 = vmul.f32 %v3577, 1.442695
  %v3585 = vpow.pop %v3584
  %v3586 = vsel %vm329, %v3579, 0.0
  %3587 = vadd.xlane.f32.xlu0 %v3586
  %v3588 = vpop.xlane.xlu0 %3587
  %v3589 = vsel %vm329, %v3581, 0.0
  %3590 = vadd.xlane.f32.xlu0 %v3589
  %v3591 = vpop.xlane.xlu0 %3590
  %v3592 = vsel %vm329, %v3583, 0.0
  %3593 = vadd.xlane.f32.xlu0 %v3592
  %v3594 = vpop.xlane.xlu0 %3593
  %v3595 = vsel %vm329, %v3585, 0.0
  %3596 = vadd.xlane.f32.xlu0 %v3595
  %v3597 = vpop.xlane.xlu0 %3596
  %v3598 = vrcp.pop %v3588
  %v3599 = vrcp.pop %v3591
  %v3600 = vrcp.pop %v3594
  %v3601 = vrcp.pop %v3597
  %v3602 = vmul.f32 %v3579, %v3598
  %v3603 = vmul.f32 %v3581, %v3599
  %v3604 = vmul.f32 %v3583, %v3600
  %v3605 = vmul.f32 %v3585, %v3601
  %3606 = vrot.lane.b32.xlu0 %v3420, 96
  %v3607 = vpop.permute.xlu0 %3606
  %3608 = vrot.lane.b32.xlu0 %v3425, 96
  %v3609 = vpop.permute.xlu0 %3608
  %3610 = vrot.lane.b32.xlu0 %v3430, 96
  %v3611 = vpop.permute.xlu0 %3610
  %3612 = vrot.lane.b32.xlu0 %v3435, 96
  %v3613 = vpop.permute.xlu0 %3612
  %v3619 = vsel %vm329, %v3602, 0
  %v3622 = vsel %vm329, %v3603, 0
  %v3625 = vsel %vm329, %v3604, 0
  %v3628 = vsel %vm329, %v3605, 0
  %3630 = vmatprep.subr.mxu0 0.0
  %3631 = vmatpush1.msra.mxu0 0.0
  %3632 = vmatprep.subr.mxu0 0.0
  %3633 = vmatpush1.msra.mxu0 0.0
  %3634 = vmatprep.subr.mxu0 0.0
  %3635 = vmatpush1.msra.mxu0 0.0
  %3636 = vmatprep.subr.mxu0 0.0
  %3637 = vmatpush1.msra.mxu0 0.0
  %3638 = vmatprep.subr.mxu0 0.0
  %3639 = vmatpush1.msra.mxu0 0.0
  %3640 = vmatprep.subr.mxu0 0.0
  %3641 = vmatpush1.msra.mxu0 0.0
  %3642 = vmatprep.subr.mxu0 0.0
  %3643 = vmatpush1.msra.mxu0 0.0
  %3644 = vmatprep.subr.mxu0 0.0
  %3645 = vmatpush1.msra.mxu0 0.0
  %3646 = vmatprep.subr.mxu0 0.0
  %3647 = vmatpush1.msra.mxu0 0.0
  %3648 = vmatprep.subr.mxu0 0.0
  %3649 = vmatpush1.msra.mxu0 0.0
  %3650 = vmatprep.subr.mxu0 0.0
  %3651 = vmatpush1.msra.mxu0 0.0
  %3652 = vmatprep.subr.mxu0 0.0
  %3653 = vmatpush1.msra.mxu0 0.0
  %3654 = vmatprep.subr.mxu0 0.0
  %3655 = vmatpush1.msra.mxu0 %v3613
  %3656 = vmatprep.subr.mxu0 0.0
  %3657 = vmatpush1.msra.mxu0 %v3611
  %3658 = vmatprep.subr.mxu0 0.0
  %3659 = vmatpush1.msra.mxu0 %v3609
  %3660 = vmatprep.subr.mxu0 0.0
  %3661 = vmatpush1.msra.mxu0 %v3607
  %3662 = vmatprep.subr.mxu0 0.0
  %3663 = vmatpush2.msra.mxu0 0.0
  %3664 = vmatprep.subr.mxu0 0.0
  %3665 = vmatpush2.msra.mxu0 0.0
  %3666 = vmatprep.subr.mxu0 0.0
  %3667 = vmatpush2.msra.mxu0 0.0
  %3668 = vmatprep.subr.mxu0 0.0
  %3669 = vmatpush2.msra.mxu0 0.0
  %3670 = vmatprep.subr.mxu0 0.0
  %3671 = vmatpush2.msra.mxu0 0.0
  %3672 = vmatprep.subr.mxu0 0.0
  %3673 = vmatpush2.msra.mxu0 0.0
  %3674 = vmatprep.subr.mxu0 0.0
  %3675 = vmatpush2.msra.mxu0 0.0
  %3676 = vmatprep.subr.mxu0 0.0
  %3677 = vmatpush2.msra.mxu0 0.0
  %3678 = vmatprep.subr.mxu0 0.0
  %3679 = vmatpush2.msra.mxu0 0.0
  %3680 = vmatprep.subr.mxu0 0.0
  %3681 = vmatpush2.msra.mxu0 0.0
  %3682 = vmatprep.subr.mxu0 0.0
  %3683 = vmatpush2.msra.mxu0 0.0
  %3684 = vmatprep.subr.mxu0 0.0
  %3685 = vmatpush2.msra.mxu0 0.0
  %3686 = vmatprep.subr.mxu0 0.0
  %3687 = vmatpush2.msra.mxu0 0.0
  %3688 = vmatprep.subr.mxu0 0.0
  %3689 = vmatpush2.msra.mxu0 0.0
  %3690 = vmatprep.subr.mxu0 0.0
  %3691 = vmatpush2.msra.mxu0 0.0
  %3692 = vmatprep.subr.mxu0 0.0
  %3693 = vmatpush2.msra.mxu0 0.0
  %3694 = vmatprep.mubr.f32.mxu0 0.0
  %3695 = vmatmul.mubr.f32.gmra.mxu0 %v3619
  %v3696 = vpop.f32.mrf.mxu0
  %v3697 = vadd.f32 0.0, %v3696
  %v3698 = vpop.f32.mrf.mxu0
  %3699 = vmatprep.mubr.f32.mxu0 0.0
  %3700 = vmatmul.mubr.f32.gmra.mxu0 %v3622
  %v3701 = vpop.f32.mrf.mxu0
  %v3702 = vadd.f32 0.0, %v3701
  %v3703 = vpop.f32.mrf.mxu0
  %3704 = vmatprep.mubr.f32.mxu0 0.0
  %3705 = vmatmul.mubr.f32.gmra.mxu0 %v3625
  %v3706 = vpop.f32.mrf.mxu0
  %v3707 = vadd.f32 0.0, %v3706
  %v3708 = vpop.f32.mrf.mxu0
  %3709 = vmatprep.mubr.f32.mxu0 0.0
  %3710 = vmatmul.mubr.f32.gmra.mxu0 %v3628
  %v3711 = vpop.f32.mrf.mxu0
  %v3712 = vadd.f32 0.0, %v3711
  %v3713 = vpop.f32.mrf.mxu0
  %3714 = vdwg.mxu0
  %v3716 = vsel %vm3460, %v3697, 0
  %v3719 = vsel %vm3460, %v3702, 0
  %v3722 = vsel %vm3460, %v3707, 0
  %v3725 = vsel %vm3460, %v3712, 0
  %vm3727 = vcmask 1043456
  %v3729 = vsel %vm3727, %v3438, 0
  %3731 = vmatprep.subr.mxu0 0.0
  %3732 = vmatpush1.msra.mxu0 0.0
  %3733 = vmatprep.subr.mxu0 0.0
  %3734 = vmatpush1.msra.mxu0 0.0
  %3735 = vmatprep.subr.mxu0 0.0
  %3736 = vmatpush1.msra.mxu0 0.0
  %3737 = vmatprep.subr.mxu0 0.0
  %3738 = vmatpush1.msra.mxu0 0.0
  %3739 = vmatprep.subr.mxu0 0.0
  %3740 = vmatpush1.msra.mxu0 0.0
  %3741 = vmatprep.subr.mxu0 0.0
  %3742 = vmatpush1.msra.mxu0 0.0
  %3743 = vmatprep.subr.mxu0 0.0
  %3744 = vmatpush1.msra.mxu0 0.0
  %3745 = vmatprep.subr.mxu0 0.0
  %3746 = vmatpush1.msra.mxu0 0.0
  %3747 = vmatprep.subr.mxu0 0.0
  %3748 = vmatpush1.msra.mxu0 0.0
  %3749 = vmatprep.subr.mxu0 0.0
  %3750 = vmatpush1.msra.mxu0 0.0
  %3751 = vmatprep.subr.mxu0 0.0
  %3752 = vmatpush1.msra.mxu0 0.0
  %3753 = vmatprep.subr.mxu0 0.0
  %3754 = vmatpush1.msra.mxu0 0.0
  %3755 = vmatprep.subr.mxu0 0.0
  %3756 = vmatpush1.msra.mxu0 0.0
  %3757 = vmatprep.subr.mxu0 0.0
  %3758 = vmatpush1.msra.mxu0 0.0
  %3759 = vmatprep.subr.mxu0 0.0
  %3760 = vmatpush1.msra.mxu0 0.0
  %3761 = vmatprep.subr.mxu0 0.0
  %3762 = vmatpush1.msra.mxu0 %v3729
  %3763 = vmatprep.subr.mxu0 0.0
  %3764 = vmatpush2.msra.mxu0 0.0
  %3765 = vmatprep.subr.mxu0 0.0
  %3766 = vmatpush2.msra.mxu0 0.0
  %3767 = vmatprep.subr.mxu0 0.0
  %3768 = vmatpush2.msra.mxu0 0.0
  %3769 = vmatprep.subr.mxu0 0.0
  %3770 = vmatpush2.msra.mxu0 0.0
  %3771 = vmatprep.subr.mxu0 0.0
  %3772 = vmatpush2.msra.mxu0 0.0
  %3773 = vmatprep.subr.mxu0 0.0
  %3774 = vmatpush2.msra.mxu0 0.0
  %3775 = vmatprep.subr.mxu0 0.0
  %3776 = vmatpush2.msra.mxu0 0.0
  %3777 = vmatprep.subr.mxu0 0.0
  %3778 = vmatpush2.msra.mxu0 0.0
  %3779 = vmatprep.subr.mxu0 0.0
  %3780 = vmatpush2.msra.mxu0 0.0
  %3781 = vmatprep.subr.mxu0 0.0
  %3782 = vmatpush2.msra.mxu0 0.0
  %3783 = vmatprep.subr.mxu0 0.0
  %3784 = vmatpush2.msra.mxu0 0.0
  %3785 = vmatprep.subr.mxu0 0.0
  %3786 = vmatpush2.msra.mxu0 0.0
  %3787 = vmatprep.subr.mxu0 0.0
  %3788 = vmatpush2.msra.mxu0 0.0
  %3789 = vmatprep.subr.mxu0 0.0
  %3790 = vmatpush2.msra.mxu0 0.0
  %3791 = vmatprep.subr.mxu0 0.0
  %3792 = vmatpush2.msra.mxu0 0.0
  %3793 = vmatprep.subr.mxu0 0.0
  %3794 = vmatpush2.msra.mxu0 0.0
  %3795 = vmatprep.mubr.f32.mxu0 0.0
  %3796 = vmatmul.mubr.f32.gmra.mxu0 %v3716
  %v3797 = vpop.f32.mrf.mxu0
  %v3798 = vadd.f32 0.0, %v3797
  %v3799 = vpop.f32.mrf.mxu0
  %3800 = vmatprep.mubr.f32.mxu0 0.0
  %3801 = vmatmul.mubr.f32.gmra.mxu0 %v3719
  %v3802 = vpop.f32.mrf.mxu0
  %v3803 = vadd.f32 0.0, %v3802
  %v3804 = vpop.f32.mrf.mxu0
  %3805 = vmatprep.mubr.f32.mxu0 0.0
  %3806 = vmatmul.mubr.f32.gmra.mxu0 %v3722
  %v3807 = vpop.f32.mrf.mxu0
  %v3808 = vadd.f32 0.0, %v3807
  %v3809 = vpop.f32.mrf.mxu0
  %3810 = vmatprep.mubr.f32.mxu0 0.0
  %3811 = vmatmul.mubr.f32.gmra.mxu0 %v3725
  %v3812 = vpop.f32.mrf.mxu0
  %v3813 = vadd.f32 0.0, %v3812
  %v3814 = vpop.f32.mrf.mxu0
  %3815 = vdwg.mxu0
  %v3816 = vadd.f32 %v3447, %v3798
  %v3817 = vadd.f32 %v3447, %v3803
  %v3818 = vadd.f32 %v3447, %v3808
  %v3819 = vadd.f32 %v3447, %v3813
  %3820 = vrot.lane.b32.xlu0 %v3420, 124
  %v3821 = vpop.permute.xlu0 %3820
  %3822 = vrot.lane.b32.xlu0 %v3425, 124
  %v3823 = vpop.permute.xlu0 %3822
  %3824 = vrot.lane.b32.xlu0 %v3430, 124
  %v3825 = vpop.permute.xlu0 %3824
  %3826 = vrot.lane.b32.xlu0 %v3435, 124
  %v3827 = vpop.permute.xlu0 %3826
  %3828 = vrot.lane.b32.xlu0 %v3420, 108
  %v3829 = vpop.permute.xlu0 %3828
  %3830 = vrot.lane.b32.xlu0 %v3425, 108
  %v3831 = vpop.permute.xlu0 %3830
  %3832 = vrot.lane.b32.xlu0 %v3430, 108
  %v3833 = vpop.permute.xlu0 %3832
  %3834 = vrot.lane.b32.xlu0 %v3435, 108
  %v3835 = vpop.permute.xlu0 %3834
  %v3836 = vsel %vm3460, %v3821, 0
  %v3838 = vsel %vm3460, %v3823, 0
  %v3840 = vsel %vm3460, %v3825, 0
  %v3842 = vsel %vm3460, %v3827, 0
  %v3844 = vsel %vm3460, %v3829, 0
  %v3846 = vsel %vm3460, %v3831, 0
  %v3848 = vsel %vm3460, %v3833, 0
  %v3850 = vsel %vm3460, %v3835, 0
  %3852 = vmatprep.subr.mxu0 0.0
  %3853 = vmatpush1.xpose.msra.mxu0 0.0
  %3854 = vmatprep.subr.mxu0 0.0
  %3855 = vmatpush1.xpose.msra.mxu0 0.0
  %3856 = vmatprep.subr.mxu0 0.0
  %3857 = vmatpush1.xpose.msra.mxu0 0.0
  %3858 = vmatprep.subr.mxu0 0.0
  %3859 = vmatpush1.xpose.msra.mxu0 0.0
  %3860 = vmatprep.subr.mxu0 0.0
  %3861 = vmatpush1.xpose.msra.mxu0 0.0
  %3862 = vmatprep.subr.mxu0 0.0
  %3863 = vmatpush1.xpose.msra.mxu0 0.0
  %3864 = vmatprep.subr.mxu0 0.0
  %3865 = vmatpush1.xpose.msra.mxu0 0.0
  %3866 = vmatprep.subr.mxu0 0.0
  %3867 = vmatpush1.xpose.msra.mxu0 0.0
  %3868 = vmatprep.subr.mxu0 0.0
  %3869 = vmatpush1.xpose.msra.mxu0 0.0
  %3870 = vmatprep.subr.mxu0 0.0
  %3871 = vmatpush1.xpose.msra.mxu0 0.0
  %3872 = vmatprep.subr.mxu0 0.0
  %3873 = vmatpush1.xpose.msra.mxu0 0.0
  %3874 = vmatprep.subr.mxu0 0.0
  %3875 = vmatpush1.xpose.msra.mxu0 0.0
  %3876 = vmatprep.subr.mxu0 0.0
  %3877 = vmatpush1.xpose.msra.mxu0 %v3850
  %3878 = vmatprep.subr.mxu0 0.0
  %3879 = vmatpush1.xpose.msra.mxu0 %v3848
  %3880 = vmatprep.subr.mxu0 0.0
  %3881 = vmatpush1.xpose.msra.mxu0 %v3846
  %3882 = vmatprep.subr.mxu0 0.0
  %3883 = vmatpush1.xpose.msra.mxu0 %v3844
  %3884 = vmatprep.subr.mxu0 0.0
  %3885 = vmatpush2.xpose.msra.mxu0 0.0
  %3886 = vmatprep.subr.mxu0 0.0
  %3887 = vmatpush2.xpose.msra.mxu0 0.0
  %3888 = vmatprep.subr.mxu0 0.0
  %3889 = vmatpush2.xpose.msra.mxu0 0.0
  %3890 = vmatprep.subr.mxu0 0.0
  %3891 = vmatpush2.xpose.msra.mxu0 0.0
  %3892 = vmatprep.subr.mxu0 0.0
  %3893 = vmatpush2.xpose.msra.mxu0 0.0
  %3894 = vmatprep.subr.mxu0 0.0
  %3895 = vmatpush2.xpose.msra.mxu0 0.0
  %3896 = vmatprep.subr.mxu0 0.0
  %3897 = vmatpush2.xpose.msra.mxu0 0.0
  %3898 = vmatprep.subr.mxu0 0.0
  %3899 = vmatpush2.xpose.msra.mxu0 0.0
  %3900 = vmatprep.subr.mxu0 0.0
  %3901 = vmatpush2.xpose.msra.mxu0 0.0
  %3902 = vmatprep.subr.mxu0 0.0
  %3903 = vmatpush2.xpose.msra.mxu0 0.0
  %3904 = vmatprep.subr.mxu0 0.0
  %3905 = vmatpush2.xpose.msra.mxu0 0.0
  %3906 = vmatprep.subr.mxu0 0.0
  %3907 = vmatpush2.xpose.msra.mxu0 0.0
  %3908 = vmatprep.subr.mxu0 0.0
  %3909 = vmatpush2.xpose.msra.mxu0 0.0
  %3910 = vmatprep.subr.mxu0 0.0
  %3911 = vmatpush2.xpose.msra.mxu0 0.0
  %3912 = vmatprep.subr.mxu0 0.0
  %3913 = vmatpush2.xpose.msra.mxu0 0.0
  %3914 = vmatprep.subr.mxu0 0.0
  %3915 = vmatpush2.xpose.msra.mxu0 0.0
  %3916 = vmatprep.mubr.f32.mxu0 0.0
  %3917 = vmatmul.mubr.f32.gmra.mxu0 %v3836
  %v3918 = vpop.f32.mrf.mxu0
  %v3919 = vadd.f32 0.0, %v3918
  %v3920 = vpop.f32.mrf.mxu0
  %3921 = vmatprep.mubr.f32.mxu0 0.0
  %3922 = vmatmul.mubr.f32.gmra.mxu0 %v3838
  %v3923 = vpop.f32.mrf.mxu0
  %v3924 = vadd.f32 0.0, %v3923
  %v3925 = vpop.f32.mrf.mxu0
  %3926 = vmatprep.mubr.f32.mxu0 0.0
  %3927 = vmatmul.mubr.f32.gmra.mxu0 %v3840
  %v3928 = vpop.f32.mrf.mxu0
  %v3929 = vadd.f32 0.0, %v3928
  %v3930 = vpop.f32.mrf.mxu0
  %3931 = vmatprep.mubr.f32.mxu0 0.0
  %3932 = vmatmul.mubr.f32.gmra.mxu0 %v3842
  %v3933 = vpop.f32.mrf.mxu0
  %v3934 = vadd.f32 0.0, %v3933
  %v3935 = vpop.f32.mrf.mxu0
  %3936 = vdwg.mxu0
  %v3937 = vsel %vm329, %v3919, -inf
  %3938 = vmax.xlane.f32.xlu0 %v3937
  %v3939 = vpop.xlane.xlu0 %3938
  %v3940 = vsel %vm329, %v3924, -inf
  %3941 = vmax.xlane.f32.xlu0 %v3940
  %v3942 = vpop.xlane.xlu0 %3941
  %v3943 = vsel %vm329, %v3929, -inf
  %3944 = vmax.xlane.f32.xlu0 %v3943
  %v3945 = vpop.xlane.xlu0 %3944
  %v3946 = vsel %vm329, %v3934, -inf
  %3947 = vmax.xlane.f32.xlu0 %v3946
  %v3948 = vpop.xlane.xlu0 %3947
  %v3949 = vsub.f32 %v3919, %v3939
  %v3950 = vsub.f32 %v3924, %v3942
  %v3951 = vsub.f32 %v3929, %v3945
  %v3952 = vsub.f32 %v3934, %v3948
  %v3953 = vmul.f32 %v3949, 1.442695
  %v3954 = vpow.pop %v3953
  %v3955 = vmul.f32 %v3950, 1.442695
  %v3956 = vpow.pop %v3955
  %v3957 = vmul.f32 %v3951, 1.442695
  %v3958 = vpow.pop %v3957
  %v3959 = vmul.f32 %v3952, 1.442695
  %v3960 = vpow.pop %v3959
  %v3961 = vsel %vm329, %v3954, 0.0
  %3962 = vadd.xlane.f32.xlu0 %v3961
  %v3963 = vpop.xlane.xlu0 %3962
  %v3964 = vsel %vm329, %v3956, 0.0
  %3965 = vadd.xlane.f32.xlu0 %v3964
  %v3966 = vpop.xlane.xlu0 %3965
  %v3967 = vsel %vm329, %v3958, 0.0
  %3968 = vadd.xlane.f32.xlu0 %v3967
  %v3969 = vpop.xlane.xlu0 %3968
  %v3970 = vsel %vm329, %v3960, 0.0
  %3971 = vadd.xlane.f32.xlu0 %v3970
  %v3972 = vpop.xlane.xlu0 %3971
  %v3973 = vrcp.pop %v3963
  %v3974 = vrcp.pop %v3966
  %v3975 = vrcp.pop %v3969
  %v3976 = vrcp.pop %v3972
  %v3977 = vmul.f32 %v3954, %v3973
  %v3978 = vmul.f32 %v3956, %v3974
  %v3979 = vmul.f32 %v3958, %v3975
  %v3980 = vmul.f32 %v3960, %v3976
  %3981 = vrot.lane.b32.xlu0 %v3420, 92
  %v3982 = vpop.permute.xlu0 %3981
  %3983 = vrot.lane.b32.xlu0 %v3425, 92
  %v3984 = vpop.permute.xlu0 %3983
  %3985 = vrot.lane.b32.xlu0 %v3430, 92
  %v3986 = vpop.permute.xlu0 %3985
  %3987 = vrot.lane.b32.xlu0 %v3435, 92
  %v3988 = vpop.permute.xlu0 %3987
  %v3994 = vsel %vm329, %v3977, 0
  %v3997 = vsel %vm329, %v3978, 0
  %v4000 = vsel %vm329, %v3979, 0
  %v4003 = vsel %vm329, %v3980, 0
  %4005 = vmatprep.subr.mxu0 0.0
  %4006 = vmatpush1.msra.mxu0 0.0
  %4007 = vmatprep.subr.mxu0 0.0
  %4008 = vmatpush1.msra.mxu0 0.0
  %4009 = vmatprep.subr.mxu0 0.0
  %4010 = vmatpush1.msra.mxu0 0.0
  %4011 = vmatprep.subr.mxu0 0.0
  %4012 = vmatpush1.msra.mxu0 0.0
  %4013 = vmatprep.subr.mxu0 0.0
  %4014 = vmatpush1.msra.mxu0 0.0
  %4015 = vmatprep.subr.mxu0 0.0
  %4016 = vmatpush1.msra.mxu0 0.0
  %4017 = vmatprep.subr.mxu0 0.0
  %4018 = vmatpush1.msra.mxu0 0.0
  %4019 = vmatprep.subr.mxu0 0.0
  %4020 = vmatpush1.msra.mxu0 0.0
  %4021 = vmatprep.subr.mxu0 0.0
  %4022 = vmatpush1.msra.mxu0 0.0
  %4023 = vmatprep.subr.mxu0 0.0
  %4024 = vmatpush1.msra.mxu0 0.0
  %4025 = vmatprep.subr.mxu0 0.0
  %4026 = vmatpush1.msra.mxu0 0.0
  %4027 = vmatprep.subr.mxu0 0.0
  %4028 = vmatpush1.msra.mxu0 0.0
  %4029 = vmatprep.subr.mxu0 0.0
  %4030 = vmatpush1.msra.mxu0 %v3988
  %4031 = vmatprep.subr.mxu0 0.0
  %4032 = vmatpush1.msra.mxu0 %v3986
  %4033 = vmatprep.subr.mxu0 0.0
  %4034 = vmatpush1.msra.mxu0 %v3984
  %4035 = vmatprep.subr.mxu0 0.0
  %4036 = vmatpush1.msra.mxu0 %v3982
  %4037 = vmatprep.subr.mxu0 0.0
  %4038 = vmatpush2.msra.mxu0 0.0
  %4039 = vmatprep.subr.mxu0 0.0
  %4040 = vmatpush2.msra.mxu0 0.0
  %4041 = vmatprep.subr.mxu0 0.0
  %4042 = vmatpush2.msra.mxu0 0.0
  %4043 = vmatprep.subr.mxu0 0.0
  %4044 = vmatpush2.msra.mxu0 0.0
  %4045 = vmatprep.subr.mxu0 0.0
  %4046 = vmatpush2.msra.mxu0 0.0
  %4047 = vmatprep.subr.mxu0 0.0
  %4048 = vmatpush2.msra.mxu0 0.0
  %4049 = vmatprep.subr.mxu0 0.0
  %4050 = vmatpush2.msra.mxu0 0.0
  %4051 = vmatprep.subr.mxu0 0.0
  %4052 = vmatpush2.msra.mxu0 0.0
  %4053 = vmatprep.subr.mxu0 0.0
  %4054 = vmatpush2.msra.mxu0 0.0
  %4055 = vmatprep.subr.mxu0 0.0
  %4056 = vmatpush2.msra.mxu0 0.0
  %4057 = vmatprep.subr.mxu0 0.0
  %4058 = vmatpush2.msra.mxu0 0.0
  %4059 = vmatprep.subr.mxu0 0.0
  %4060 = vmatpush2.msra.mxu0 0.0
  %4061 = vmatprep.subr.mxu0 0.0
  %4062 = vmatpush2.msra.mxu0 0.0
  %4063 = vmatprep.subr.mxu0 0.0
  %4064 = vmatpush2.msra.mxu0 0.0
  %4065 = vmatprep.subr.mxu0 0.0
  %4066 = vmatpush2.msra.mxu0 0.0
  %4067 = vmatprep.subr.mxu0 0.0
  %4068 = vmatpush2.msra.mxu0 0.0
  %4069 = vmatprep.mubr.f32.mxu0 0.0
  %4070 = vmatmul.mubr.f32.gmra.mxu0 %v3994
  %v4071 = vpop.f32.mrf.mxu0
  %v4072 = vadd.f32 0.0, %v4071
  %v4073 = vpop.f32.mrf.mxu0
  %4074 = vmatprep.mubr.f32.mxu0 0.0
  %4075 = vmatmul.mubr.f32.gmra.mxu0 %v3997
  %v4076 = vpop.f32.mrf.mxu0
  %v4077 = vadd.f32 0.0, %v4076
  %v4078 = vpop.f32.mrf.mxu0
  %4079 = vmatprep.mubr.f32.mxu0 0.0
  %4080 = vmatmul.mubr.f32.gmra.mxu0 %v4000
  %v4081 = vpop.f32.mrf.mxu0
  %v4082 = vadd.f32 0.0, %v4081
  %v4083 = vpop.f32.mrf.mxu0
  %4084 = vmatprep.mubr.f32.mxu0 0.0
  %4085 = vmatmul.mubr.f32.gmra.mxu0 %v4003
  %v4086 = vpop.f32.mrf.mxu0
  %v4087 = vadd.f32 0.0, %v4086
  %v4088 = vpop.f32.mrf.mxu0
  %4089 = vdwg.mxu0
  %v4090 = vrot.slane %v3438, 4
  %v4092 = vsel %vm3460, %v4072, 0
  %v4095 = vsel %vm3460, %v4077, 0
  %v4098 = vsel %vm3460, %v4082, 0
  %v4101 = vsel %vm3460, %v4087, 0
  %v4103 = vsel %vm3727, %v4090, 0
  %4105 = vmatprep.subr.mxu0 0.0
  %4106 = vmatpush1.msra.mxu0 0.0
  %4107 = vmatprep.subr.mxu0 0.0
  %4108 = vmatpush1.msra.mxu0 0.0
  %4109 = vmatprep.subr.mxu0 0.0
  %4110 = vmatpush1.msra.mxu0 0.0
  %4111 = vmatprep.subr.mxu0 0.0
  %4112 = vmatpush1.msra.mxu0 0.0
  %4113 = vmatprep.subr.mxu0 0.0
  %4114 = vmatpush1.msra.mxu0 0.0
  %4115 = vmatprep.subr.mxu0 0.0
  %4116 = vmatpush1.msra.mxu0 0.0
  %4117 = vmatprep.subr.mxu0 0.0
  %4118 = vmatpush1.msra.mxu0 0.0
  %4119 = vmatprep.subr.mxu0 0.0
  %4120 = vmatpush1.msra.mxu0 0.0
  %4121 = vmatprep.subr.mxu0 0.0
  %4122 = vmatpush1.msra.mxu0 0.0
  %4123 = vmatprep.subr.mxu0 0.0
  %4124 = vmatpush1.msra.mxu0 0.0
  %4125 = vmatprep.subr.mxu0 0.0
  %4126 = vmatpush1.msra.mxu0 0.0
  %4127 = vmatprep.subr.mxu0 0.0
  %4128 = vmatpush1.msra.mxu0 0.0
  %4129 = vmatprep.subr.mxu0 0.0
  %4130 = vmatpush1.msra.mxu0 0.0
  %4131 = vmatprep.subr.mxu0 0.0
  %4132 = vmatpush1.msra.mxu0 0.0
  %4133 = vmatprep.subr.mxu0 0.0
  %4134 = vmatpush1.msra.mxu0 0.0
  %4135 = vmatprep.subr.mxu0 0.0
  %4136 = vmatpush1.msra.mxu0 %v4103
  %4137 = vmatprep.subr.mxu0 0.0
  %4138 = vmatpush2.msra.mxu0 0.0
  %4139 = vmatprep.subr.mxu0 0.0
  %4140 = vmatpush2.msra.mxu0 0.0
  %4141 = vmatprep.subr.mxu0 0.0
  %4142 = vmatpush2.msra.mxu0 0.0
  %4143 = vmatprep.subr.mxu0 0.0
  %4144 = vmatpush2.msra.mxu0 0.0
  %4145 = vmatprep.subr.mxu0 0.0
  %4146 = vmatpush2.msra.mxu0 0.0
  %4147 = vmatprep.subr.mxu0 0.0
  %4148 = vmatpush2.msra.mxu0 0.0
  %4149 = vmatprep.subr.mxu0 0.0
  %4150 = vmatpush2.msra.mxu0 0.0
  %4151 = vmatprep.subr.mxu0 0.0
  %4152 = vmatpush2.msra.mxu0 0.0
  %4153 = vmatprep.subr.mxu0 0.0
  %4154 = vmatpush2.msra.mxu0 0.0
  %4155 = vmatprep.subr.mxu0 0.0
  %4156 = vmatpush2.msra.mxu0 0.0
  %4157 = vmatprep.subr.mxu0 0.0
  %4158 = vmatpush2.msra.mxu0 0.0
  %4159 = vmatprep.subr.mxu0 0.0
  %4160 = vmatpush2.msra.mxu0 0.0
  %4161 = vmatprep.subr.mxu0 0.0
  %4162 = vmatpush2.msra.mxu0 0.0
  %4163 = vmatprep.subr.mxu0 0.0
  %4164 = vmatpush2.msra.mxu0 0.0
  %4165 = vmatprep.subr.mxu0 0.0
  %4166 = vmatpush2.msra.mxu0 0.0
  %4167 = vmatprep.subr.mxu0 0.0
  %4168 = vmatpush2.msra.mxu0 0.0
  %4169 = vmatprep.mubr.f32.mxu0 0.0
  %4170 = vmatmul.mubr.f32.gmra.mxu0 %v4092
  %v4171 = vpop.f32.mrf.mxu0
  %v4172 = vadd.f32 0.0, %v4171
  %v4173 = vpop.f32.mrf.mxu0
  %4174 = vmatprep.mubr.f32.mxu0 0.0
  %4175 = vmatmul.mubr.f32.gmra.mxu0 %v4095
  %v4176 = vpop.f32.mrf.mxu0
  %v4177 = vadd.f32 0.0, %v4176
  %v4178 = vpop.f32.mrf.mxu0
  %4179 = vmatprep.mubr.f32.mxu0 0.0
  %4180 = vmatmul.mubr.f32.gmra.mxu0 %v4098
  %v4181 = vpop.f32.mrf.mxu0
  %v4182 = vadd.f32 0.0, %v4181
  %v4183 = vpop.f32.mrf.mxu0
  %4184 = vmatprep.mubr.f32.mxu0 0.0
  %4185 = vmatmul.mubr.f32.gmra.mxu0 %v4101
  %v4186 = vpop.f32.mrf.mxu0
  %v4187 = vadd.f32 0.0, %v4186
  %v4188 = vpop.f32.mrf.mxu0
  %4189 = vdwg.mxu0
  %v4190 = vadd.f32 %v3816, %v4172
  %v4191 = vadd.f32 %v3817, %v4177
  %v4192 = vadd.f32 %v3818, %v4182
  %v4193 = vadd.f32 %v3819, %v4187
  %4194 = vrot.lane.b32.xlu0 %v3420, 120
  %v4195 = vpop.permute.xlu0 %4194
  %4196 = vrot.lane.b32.xlu0 %v3425, 120
  %v4197 = vpop.permute.xlu0 %4196
  %4198 = vrot.lane.b32.xlu0 %v3430, 120
  %v4199 = vpop.permute.xlu0 %4198
  %4200 = vrot.lane.b32.xlu0 %v3435, 120
  %v4201 = vpop.permute.xlu0 %4200
  %4202 = vrot.lane.b32.xlu0 %v3420, 104
  %v4203 = vpop.permute.xlu0 %4202
  %4204 = vrot.lane.b32.xlu0 %v3425, 104
  %v4205 = vpop.permute.xlu0 %4204
  %4206 = vrot.lane.b32.xlu0 %v3430, 104
  %v4207 = vpop.permute.xlu0 %4206
  %4208 = vrot.lane.b32.xlu0 %v3435, 104
  %v4209 = vpop.permute.xlu0 %4208
  %v4210 = vsel %vm3460, %v4195, 0
  %v4212 = vsel %vm3460, %v4197, 0
  %v4214 = vsel %vm3460, %v4199, 0
  %v4216 = vsel %vm3460, %v4201, 0
  %v4218 = vsel %vm3460, %v4203, 0
  %v4220 = vsel %vm3460, %v4205, 0
  %v4222 = vsel %vm3460, %v4207, 0
  %v4224 = vsel %vm3460, %v4209, 0
  %4226 = vmatprep.subr.mxu0 0.0
  %4227 = vmatpush1.xpose.msra.mxu0 0.0
  %4228 = vmatprep.subr.mxu0 0.0
  %4229 = vmatpush1.xpose.msra.mxu0 0.0
  %4230 = vmatprep.subr.mxu0 0.0
  %4231 = vmatpush1.xpose.msra.mxu0 0.0
  %4232 = vmatprep.subr.mxu0 0.0
  %4233 = vmatpush1.xpose.msra.mxu0 0.0
  %4234 = vmatprep.subr.mxu0 0.0
  %4235 = vmatpush1.xpose.msra.mxu0 0.0
  %4236 = vmatprep.subr.mxu0 0.0
  %4237 = vmatpush1.xpose.msra.mxu0 0.0
  %4238 = vmatprep.subr.mxu0 0.0
  %4239 = vmatpush1.xpose.msra.mxu0 0.0
  %4240 = vmatprep.subr.mxu0 0.0
  %4241 = vmatpush1.xpose.msra.mxu0 0.0
  %4242 = vmatprep.subr.mxu0 0.0
  %4243 = vmatpush1.xpose.msra.mxu0 0.0
  %4244 = vmatprep.subr.mxu0 0.0
  %4245 = vmatpush1.xpose.msra.mxu0 0.0
  %4246 = vmatprep.subr.mxu0 0.0
  %4247 = vmatpush1.xpose.msra.mxu0 0.0
  %4248 = vmatprep.subr.mxu0 0.0
  %4249 = vmatpush1.xpose.msra.mxu0 0.0
  %4250 = vmatprep.subr.mxu0 0.0
  %4251 = vmatpush1.xpose.msra.mxu0 %v4224
  %4252 = vmatprep.subr.mxu0 0.0
  %4253 = vmatpush1.xpose.msra.mxu0 %v4222
  %4254 = vmatprep.subr.mxu0 0.0
  %4255 = vmatpush1.xpose.msra.mxu0 %v4220
  %4256 = vmatprep.subr.mxu0 0.0
  %4257 = vmatpush1.xpose.msra.mxu0 %v4218
  %4258 = vmatprep.subr.mxu0 0.0
  %4259 = vmatpush2.xpose.msra.mxu0 0.0
  %4260 = vmatprep.subr.mxu0 0.0
  %4261 = vmatpush2.xpose.msra.mxu0 0.0
  %4262 = vmatprep.subr.mxu0 0.0
  %4263 = vmatpush2.xpose.msra.mxu0 0.0
  %4264 = vmatprep.subr.mxu0 0.0
  %4265 = vmatpush2.xpose.msra.mxu0 0.0
  %4266 = vmatprep.subr.mxu0 0.0
  %4267 = vmatpush2.xpose.msra.mxu0 0.0
  %4268 = vmatprep.subr.mxu0 0.0
  %4269 = vmatpush2.xpose.msra.mxu0 0.0
  %4270 = vmatprep.subr.mxu0 0.0
  %4271 = vmatpush2.xpose.msra.mxu0 0.0
  %4272 = vmatprep.subr.mxu0 0.0
  %4273 = vmatpush2.xpose.msra.mxu0 0.0
  %4274 = vmatprep.subr.mxu0 0.0
  %4275 = vmatpush2.xpose.msra.mxu0 0.0
  %4276 = vmatprep.subr.mxu0 0.0
  %4277 = vmatpush2.xpose.msra.mxu0 0.0
  %4278 = vmatprep.subr.mxu0 0.0
  %4279 = vmatpush2.xpose.msra.mxu0 0.0
  %4280 = vmatprep.subr.mxu0 0.0
  %4281 = vmatpush2.xpose.msra.mxu0 0.0
  %4282 = vmatprep.subr.mxu0 0.0
  %4283 = vmatpush2.xpose.msra.mxu0 0.0
  %4284 = vmatprep.subr.mxu0 0.0
  %4285 = vmatpush2.xpose.msra.mxu0 0.0
  %4286 = vmatprep.subr.mxu0 0.0
  %4287 = vmatpush2.xpose.msra.mxu0 0.0
  %4288 = vmatprep.subr.mxu0 0.0
  %4289 = vmatpush2.xpose.msra.mxu0 0.0
  %4290 = vmatprep.mubr.f32.mxu0 0.0
  %4291 = vmatmul.mubr.f32.gmra.mxu0 %v4210
  %v4292 = vpop.f32.mrf.mxu0
  %v4293 = vadd.f32 0.0, %v4292
  %v4294 = vpop.f32.mrf.mxu0
  %4295 = vmatprep.mubr.f32.mxu0 0.0
  %4296 = vmatmul.mubr.f32.gmra.mxu0 %v4212
  %v4297 = vpop.f32.mrf.mxu0
  %v4298 = vadd.f32 0.0, %v4297
  %v4299 = vpop.f32.mrf.mxu0
  %4300 = vmatprep.mubr.f32.mxu0 0.0
  %4301 = vmatmul.mubr.f32.gmra.mxu0 %v4214
  %v4302 = vpop.f32.mrf.mxu0
  %v4303 = vadd.f32 0.0, %v4302
  %v4304 = vpop.f32.mrf.mxu0
  %4305 = vmatprep.mubr.f32.mxu0 0.0
  %4306 = vmatmul.mubr.f32.gmra.mxu0 %v4216
  %v4307 = vpop.f32.mrf.mxu0
  %v4308 = vadd.f32 0.0, %v4307
  %v4309 = vpop.f32.mrf.mxu0
  %4310 = vdwg.mxu0
  %v4311 = vsel %vm329, %v4293, -inf
  %4312 = vmax.xlane.f32.xlu0 %v4311
  %v4313 = vpop.xlane.xlu0 %4312
  %v4314 = vsel %vm329, %v4298, -inf
  %4315 = vmax.xlane.f32.xlu0 %v4314
  %v4316 = vpop.xlane.xlu0 %4315
  %v4317 = vsel %vm329, %v4303, -inf
  %4318 = vmax.xlane.f32.xlu0 %v4317
  %v4319 = vpop.xlane.xlu0 %4318
  %v4320 = vsel %vm329, %v4308, -inf
  %4321 = vmax.xlane.f32.xlu0 %v4320
  %v4322 = vpop.xlane.xlu0 %4321
  %v4323 = vsub.f32 %v4293, %v4313
  %v4324 = vsub.f32 %v4298, %v4316
  %v4325 = vsub.f32 %v4303, %v4319
  %v4326 = vsub.f32 %v4308, %v4322
  %v4327 = vmul.f32 %v4323, 1.442695
  %v4328 = vpow.pop %v4327
  %v4329 = vmul.f32 %v4324, 1.442695
  %v4330 = vpow.pop %v4329
  %v4331 = vmul.f32 %v4325, 1.442695
  %v4332 = vpow.pop %v4331
  %v4333 = vmul.f32 %v4326, 1.442695
  %v4334 = vpow.pop %v4333
  %v4335 = vsel %vm329, %v4328, 0.0
  %4336 = vadd.xlane.f32.xlu0 %v4335
  %v4337 = vpop.xlane.xlu0 %4336
  %v4338 = vsel %vm329, %v4330, 0.0
  %4339 = vadd.xlane.f32.xlu0 %v4338
  %v4340 = vpop.xlane.xlu0 %4339
  %v4341 = vsel %vm329, %v4332, 0.0
  %4342 = vadd.xlane.f32.xlu0 %v4341
  %v4343 = vpop.xlane.xlu0 %4342
  %v4344 = vsel %vm329, %v4334, 0.0
  %4345 = vadd.xlane.f32.xlu0 %v4344
  %v4346 = vpop.xlane.xlu0 %4345
  %v4347 = vrcp.pop %v4337
  %v4348 = vrcp.pop %v4340
  %v4349 = vrcp.pop %v4343
  %v4350 = vrcp.pop %v4346
  %v4351 = vmul.f32 %v4328, %v4347
  %v4352 = vmul.f32 %v4330, %v4348
  %v4353 = vmul.f32 %v4332, %v4349
  %v4354 = vmul.f32 %v4334, %v4350
  %4355 = vrot.lane.b32.xlu0 %v3420, 88
  %v4356 = vpop.permute.xlu0 %4355
  %4357 = vrot.lane.b32.xlu0 %v3425, 88
  %v4358 = vpop.permute.xlu0 %4357
  %4359 = vrot.lane.b32.xlu0 %v3430, 88
  %v4360 = vpop.permute.xlu0 %4359
  %4361 = vrot.lane.b32.xlu0 %v3435, 88
  %v4362 = vpop.permute.xlu0 %4361
  %v4368 = vsel %vm329, %v4351, 0
  %v4371 = vsel %vm329, %v4352, 0
  %v4374 = vsel %vm329, %v4353, 0
  %v4377 = vsel %vm329, %v4354, 0
  %4379 = vmatprep.subr.mxu0 0.0
  %4380 = vmatpush1.msra.mxu0 0.0
  %4381 = vmatprep.subr.mxu0 0.0
  %4382 = vmatpush1.msra.mxu0 0.0
  %4383 = vmatprep.subr.mxu0 0.0
  %4384 = vmatpush1.msra.mxu0 0.0
  %4385 = vmatprep.subr.mxu0 0.0
  %4386 = vmatpush1.msra.mxu0 0.0
  %4387 = vmatprep.subr.mxu0 0.0
  %4388 = vmatpush1.msra.mxu0 0.0
  %4389 = vmatprep.subr.mxu0 0.0
  %4390 = vmatpush1.msra.mxu0 0.0
  %4391 = vmatprep.subr.mxu0 0.0
  %4392 = vmatpush1.msra.mxu0 0.0
  %4393 = vmatprep.subr.mxu0 0.0
  %4394 = vmatpush1.msra.mxu0 0.0
  %4395 = vmatprep.subr.mxu0 0.0
  %4396 = vmatpush1.msra.mxu0 0.0
  %4397 = vmatprep.subr.mxu0 0.0
  %4398 = vmatpush1.msra.mxu0 0.0
  %4399 = vmatprep.subr.mxu0 0.0
  %4400 = vmatpush1.msra.mxu0 0.0
  %4401 = vmatprep.subr.mxu0 0.0
  %4402 = vmatpush1.msra.mxu0 0.0
  %4403 = vmatprep.subr.mxu0 0.0
  %4404 = vmatpush1.msra.mxu0 %v4362
  %4405 = vmatprep.subr.mxu0 0.0
  %4406 = vmatpush1.msra.mxu0 %v4360
  %4407 = vmatprep.subr.mxu0 0.0
  %4408 = vmatpush1.msra.mxu0 %v4358
  %4409 = vmatprep.subr.mxu0 0.0
  %4410 = vmatpush1.msra.mxu0 %v4356
  %4411 = vmatprep.subr.mxu0 0.0
  %4412 = vmatpush2.msra.mxu0 0.0
  %4413 = vmatprep.subr.mxu0 0.0
  %4414 = vmatpush2.msra.mxu0 0.0
  %4415 = vmatprep.subr.mxu0 0.0
  %4416 = vmatpush2.msra.mxu0 0.0
  %4417 = vmatprep.subr.mxu0 0.0
  %4418 = vmatpush2.msra.mxu0 0.0
  %4419 = vmatprep.subr.mxu0 0.0
  %4420 = vmatpush2.msra.mxu0 0.0
  %4421 = vmatprep.subr.mxu0 0.0
  %4422 = vmatpush2.msra.mxu0 0.0
  %4423 = vmatprep.subr.mxu0 0.0
  %4424 = vmatpush2.msra.mxu0 0.0
  %4425 = vmatprep.subr.mxu0 0.0
  %4426 = vmatpush2.msra.mxu0 0.0
  %4427 = vmatprep.subr.mxu0 0.0
  %4428 = vmatpush2.msra.mxu0 0.0
  %4429 = vmatprep.subr.mxu0 0.0
  %4430 = vmatpush2.msra.mxu0 0.0
  %4431 = vmatprep.subr.mxu0 0.0
  %4432 = vmatpush2.msra.mxu0 0.0
  %4433 = vmatprep.subr.mxu0 0.0
  %4434 = vmatpush2.msra.mxu0 0.0
  %4435 = vmatprep.subr.mxu0 0.0
  %4436 = vmatpush2.msra.mxu0 0.0
  %4437 = vmatprep.subr.mxu0 0.0
  %4438 = vmatpush2.msra.mxu0 0.0
  %4439 = vmatprep.subr.mxu0 0.0
  %4440 = vmatpush2.msra.mxu0 0.0
  %4441 = vmatprep.subr.mxu0 0.0
  %4442 = vmatpush2.msra.mxu0 0.0
  %4443 = vmatprep.mubr.f32.mxu0 0.0
  %4444 = vmatmul.mubr.f32.gmra.mxu0 %v4368
  %v4445 = vpop.f32.mrf.mxu0
  %v4446 = vadd.f32 0.0, %v4445
  %v4447 = vpop.f32.mrf.mxu0
  %4448 = vmatprep.mubr.f32.mxu0 0.0
  %4449 = vmatmul.mubr.f32.gmra.mxu0 %v4371
  %v4450 = vpop.f32.mrf.mxu0
  %v4451 = vadd.f32 0.0, %v4450
  %v4452 = vpop.f32.mrf.mxu0
  %4453 = vmatprep.mubr.f32.mxu0 0.0
  %4454 = vmatmul.mubr.f32.gmra.mxu0 %v4374
  %v4455 = vpop.f32.mrf.mxu0
  %v4456 = vadd.f32 0.0, %v4455
  %v4457 = vpop.f32.mrf.mxu0
  %4458 = vmatprep.mubr.f32.mxu0 0.0
  %4459 = vmatmul.mubr.f32.gmra.mxu0 %v4377
  %v4460 = vpop.f32.mrf.mxu0
  %v4461 = vadd.f32 0.0, %v4460
  %v4462 = vpop.f32.mrf.mxu0
  %4463 = vdwg.mxu0
  %v4465 = vsel %vm3460, %v4446, 0
  %v4468 = vsel %vm3460, %v4451, 0
  %v4471 = vsel %vm3460, %v4456, 0
  %v4474 = vsel %vm3460, %v4461, 0
  %v4477 = vsel %vm3727, %v3439, 0
  %4479 = vmatprep.subr.mxu0 0.0
  %4480 = vmatpush1.msra.mxu0 0.0
  %4481 = vmatprep.subr.mxu0 0.0
  %4482 = vmatpush1.msra.mxu0 0.0
  %4483 = vmatprep.subr.mxu0 0.0
  %4484 = vmatpush1.msra.mxu0 0.0
  %4485 = vmatprep.subr.mxu0 0.0
  %4486 = vmatpush1.msra.mxu0 0.0
  %4487 = vmatprep.subr.mxu0 0.0
  %4488 = vmatpush1.msra.mxu0 0.0
  %4489 = vmatprep.subr.mxu0 0.0
  %4490 = vmatpush1.msra.mxu0 0.0
  %4491 = vmatprep.subr.mxu0 0.0
  %4492 = vmatpush1.msra.mxu0 0.0
  %4493 = vmatprep.subr.mxu0 0.0
  %4494 = vmatpush1.msra.mxu0 0.0
  %4495 = vmatprep.subr.mxu0 0.0
  %4496 = vmatpush1.msra.mxu0 0.0
  %4497 = vmatprep.subr.mxu0 0.0
  %4498 = vmatpush1.msra.mxu0 0.0
  %4499 = vmatprep.subr.mxu0 0.0
  %4500 = vmatpush1.msra.mxu0 0.0
  %4501 = vmatprep.subr.mxu0 0.0
  %4502 = vmatpush1.msra.mxu0 0.0
  %4503 = vmatprep.subr.mxu0 0.0
  %4504 = vmatpush1.msra.mxu0 0.0
  %4505 = vmatprep.subr.mxu0 0.0
  %4506 = vmatpush1.msra.mxu0 0.0
  %4507 = vmatprep.subr.mxu0 0.0
  %4508 = vmatpush1.msra.mxu0 0.0
  %4509 = vmatprep.subr.mxu0 0.0
  %4510 = vmatpush1.msra.mxu0 %v4477
  %4511 = vmatprep.subr.mxu0 0.0
  %4512 = vmatpush2.msra.mxu0 0.0
  %4513 = vmatprep.subr.mxu0 0.0
  %4514 = vmatpush2.msra.mxu0 0.0
  %4515 = vmatprep.subr.mxu0 0.0
  %4516 = vmatpush2.msra.mxu0 0.0
  %4517 = vmatprep.subr.mxu0 0.0
  %4518 = vmatpush2.msra.mxu0 0.0
  %4519 = vmatprep.subr.mxu0 0.0
  %4520 = vmatpush2.msra.mxu0 0.0
  %4521 = vmatprep.subr.mxu0 0.0
  %4522 = vmatpush2.msra.mxu0 0.0
  %4523 = vmatprep.subr.mxu0 0.0
  %4524 = vmatpush2.msra.mxu0 0.0
  %4525 = vmatprep.subr.mxu0 0.0
  %4526 = vmatpush2.msra.mxu0 0.0
  %4527 = vmatprep.subr.mxu0 0.0
  %4528 = vmatpush2.msra.mxu0 0.0
  %4529 = vmatprep.subr.mxu0 0.0
  %4530 = vmatpush2.msra.mxu0 0.0
  %4531 = vmatprep.subr.mxu0 0.0
  %4532 = vmatpush2.msra.mxu0 0.0
  %4533 = vmatprep.subr.mxu0 0.0
  %4534 = vmatpush2.msra.mxu0 0.0
  %4535 = vmatprep.subr.mxu0 0.0
  %4536 = vmatpush2.msra.mxu0 0.0
  %4537 = vmatprep.subr.mxu0 0.0
  %4538 = vmatpush2.msra.mxu0 0.0
  %4539 = vmatprep.subr.mxu0 0.0
  %4540 = vmatpush2.msra.mxu0 0.0
  %4541 = vmatprep.subr.mxu0 0.0
  %4542 = vmatpush2.msra.mxu0 0.0
  %4543 = vmatprep.mubr.f32.mxu0 0.0
  %4544 = vmatmul.mubr.f32.gmra.mxu0 %v4465
  %v4545 = vpop.f32.mrf.mxu0
  %v4546 = vadd.f32 0.0, %v4545
  %v4547 = vpop.f32.mrf.mxu0
  %4548 = vmatprep.mubr.f32.mxu0 0.0
  %4549 = vmatmul.mubr.f32.gmra.mxu0 %v4468
  %v4550 = vpop.f32.mrf.mxu0
  %v4551 = vadd.f32 0.0, %v4550
  %v4552 = vpop.f32.mrf.mxu0
  %4553 = vmatprep.mubr.f32.mxu0 0.0
  %4554 = vmatmul.mubr.f32.gmra.mxu0 %v4471
  %v4555 = vpop.f32.mrf.mxu0
  %v4556 = vadd.f32 0.0, %v4555
  %v4557 = vpop.f32.mrf.mxu0
  %4558 = vmatprep.mubr.f32.mxu0 0.0
  %4559 = vmatmul.mubr.f32.gmra.mxu0 %v4474
  %v4560 = vpop.f32.mrf.mxu0
  %v4561 = vadd.f32 0.0, %v4560
  %v4562 = vpop.f32.mrf.mxu0
  %4563 = vdwg.mxu0
  %v4564 = vadd.f32 %v4190, %v4546
  %v4565 = vadd.f32 %v4191, %v4551
  %v4566 = vadd.f32 %v4192, %v4556
  %v4567 = vadd.f32 %v4193, %v4561
  %4568 = vrot.lane.b32.xlu0 %v3420, 116
  %v4569 = vpop.permute.xlu0 %4568
  %4570 = vrot.lane.b32.xlu0 %v3425, 116
  %v4571 = vpop.permute.xlu0 %4570
  %4572 = vrot.lane.b32.xlu0 %v3430, 116
  %v4573 = vpop.permute.xlu0 %4572
  %4574 = vrot.lane.b32.xlu0 %v3435, 116
  %v4575 = vpop.permute.xlu0 %4574
  %4576 = vrot.lane.b32.xlu0 %v3420, 100
  %v4577 = vpop.permute.xlu0 %4576
  %4578 = vrot.lane.b32.xlu0 %v3425, 100
  %v4579 = vpop.permute.xlu0 %4578
  %4580 = vrot.lane.b32.xlu0 %v3430, 100
  %v4581 = vpop.permute.xlu0 %4580
  %4582 = vrot.lane.b32.xlu0 %v3435, 100
  %v4583 = vpop.permute.xlu0 %4582
  %v4584 = vsel %vm3460, %v4569, 0
  %v4586 = vsel %vm3460, %v4571, 0
  %v4588 = vsel %vm3460, %v4573, 0
  %v4590 = vsel %vm3460, %v4575, 0
  %v4592 = vsel %vm3460, %v4577, 0
  %v4594 = vsel %vm3460, %v4579, 0
  %v4596 = vsel %vm3460, %v4581, 0
  %v4598 = vsel %vm3460, %v4583, 0
  %4600 = vmatprep.subr.mxu0 0.0
  %4601 = vmatpush1.xpose.msra.mxu0 0.0
  %4602 = vmatprep.subr.mxu0 0.0
  %4603 = vmatpush1.xpose.msra.mxu0 0.0
  %4604 = vmatprep.subr.mxu0 0.0
  %4605 = vmatpush1.xpose.msra.mxu0 0.0
  %4606 = vmatprep.subr.mxu0 0.0
  %4607 = vmatpush1.xpose.msra.mxu0 0.0
  %4608 = vmatprep.subr.mxu0 0.0
  %4609 = vmatpush1.xpose.msra.mxu0 0.0
  %4610 = vmatprep.subr.mxu0 0.0
  %4611 = vmatpush1.xpose.msra.mxu0 0.0
  %4612 = vmatprep.subr.mxu0 0.0
  %4613 = vmatpush1.xpose.msra.mxu0 0.0
  %4614 = vmatprep.subr.mxu0 0.0
  %4615 = vmatpush1.xpose.msra.mxu0 0.0
  %4616 = vmatprep.subr.mxu0 0.0
  %4617 = vmatpush1.xpose.msra.mxu0 0.0
  %4618 = vmatprep.subr.mxu0 0.0
  %4619 = vmatpush1.xpose.msra.mxu0 0.0
  %4620 = vmatprep.subr.mxu0 0.0
  %4621 = vmatpush1.xpose.msra.mxu0 0.0
  %4622 = vmatprep.subr.mxu0 0.0
  %4623 = vmatpush1.xpose.msra.mxu0 0.0
  %4624 = vmatprep.subr.mxu0 0.0
  %4625 = vmatpush1.xpose.msra.mxu0 %v4598
  %4626 = vmatprep.subr.mxu0 0.0
  %4627 = vmatpush1.xpose.msra.mxu0 %v4596
  %4628 = vmatprep.subr.mxu0 0.0
  %4629 = vmatpush1.xpose.msra.mxu0 %v4594
  %4630 = vmatprep.subr.mxu0 0.0
  %4631 = vmatpush1.xpose.msra.mxu0 %v4592
  %4632 = vmatprep.subr.mxu0 0.0
  %4633 = vmatpush2.xpose.msra.mxu0 0.0
  %4634 = vmatprep.subr.mxu0 0.0
  %4635 = vmatpush2.xpose.msra.mxu0 0.0
  %4636 = vmatprep.subr.mxu0 0.0
  %4637 = vmatpush2.xpose.msra.mxu0 0.0
  %4638 = vmatprep.subr.mxu0 0.0
  %4639 = vmatpush2.xpose.msra.mxu0 0.0
  %4640 = vmatprep.subr.mxu0 0.0
  %4641 = vmatpush2.xpose.msra.mxu0 0.0
  %4642 = vmatprep.subr.mxu0 0.0
  %4643 = vmatpush2.xpose.msra.mxu0 0.0
  %4644 = vmatprep.subr.mxu0 0.0
  %4645 = vmatpush2.xpose.msra.mxu0 0.0
  %4646 = vmatprep.subr.mxu0 0.0
  %4647 = vmatpush2.xpose.msra.mxu0 0.0
  %4648 = vmatprep.subr.mxu0 0.0
  %4649 = vmatpush2.xpose.msra.mxu0 0.0
  %4650 = vmatprep.subr.mxu0 0.0
  %4651 = vmatpush2.xpose.msra.mxu0 0.0
  %4652 = vmatprep.subr.mxu0 0.0
  %4653 = vmatpush2.xpose.msra.mxu0 0.0
  %4654 = vmatprep.subr.mxu0 0.0
  %4655 = vmatpush2.xpose.msra.mxu0 0.0
  %4656 = vmatprep.subr.mxu0 0.0
  %4657 = vmatpush2.xpose.msra.mxu0 0.0
  %4658 = vmatprep.subr.mxu0 0.0
  %4659 = vmatpush2.xpose.msra.mxu0 0.0
  %4660 = vmatprep.subr.mxu0 0.0
  %4661 = vmatpush2.xpose.msra.mxu0 0.0
  %4662 = vmatprep.subr.mxu0 0.0
  %4663 = vmatpush2.xpose.msra.mxu0 0.0
  %4664 = vmatprep.mubr.f32.mxu0 0.0
  %4665 = vmatmul.mubr.f32.gmra.mxu0 %v4584
  %v4666 = vpop.f32.mrf.mxu0
  %v4667 = vadd.f32 0.0, %v4666
  %v4668 = vpop.f32.mrf.mxu0
  %4669 = vmatprep.mubr.f32.mxu0 0.0
  %4670 = vmatmul.mubr.f32.gmra.mxu0 %v4586
  %v4671 = vpop.f32.mrf.mxu0
  %v4672 = vadd.f32 0.0, %v4671
  %v4673 = vpop.f32.mrf.mxu0
  %4674 = vmatprep.mubr.f32.mxu0 0.0
  %4675 = vmatmul.mubr.f32.gmra.mxu0 %v4588
  %v4676 = vpop.f32.mrf.mxu0
  %v4677 = vadd.f32 0.0, %v4676
  %v4678 = vpop.f32.mrf.mxu0
  %4679 = vmatprep.mubr.f32.mxu0 0.0
  %4680 = vmatmul.mubr.f32.gmra.mxu0 %v4590
  %v4681 = vpop.f32.mrf.mxu0
  %v4682 = vadd.f32 0.0, %v4681
  %v4683 = vpop.f32.mrf.mxu0
  %4684 = vdwg.mxu0
  %v4685 = vsel %vm329, %v4667, -inf
  %4686 = vmax.xlane.f32.xlu0 %v4685
  %v4687 = vpop.xlane.xlu0 %4686
  %v4688 = vsel %vm329, %v4672, -inf
  %4689 = vmax.xlane.f32.xlu0 %v4688
  %v4690 = vpop.xlane.xlu0 %4689
  %v4691 = vsel %vm329, %v4677, -inf
  %4692 = vmax.xlane.f32.xlu0 %v4691
  %v4693 = vpop.xlane.xlu0 %4692
  %v4694 = vsel %vm329, %v4682, -inf
  %4695 = vmax.xlane.f32.xlu0 %v4694
  %v4696 = vpop.xlane.xlu0 %4695
  %v4697 = vsub.f32 %v4667, %v4687
  %v4698 = vsub.f32 %v4672, %v4690
  %v4699 = vsub.f32 %v4677, %v4693
  %v4700 = vsub.f32 %v4682, %v4696
  %v4701 = vmul.f32 %v4697, 1.442695
  %v4702 = vpow.pop %v4701
  %v4703 = vmul.f32 %v4698, 1.442695
  %v4704 = vpow.pop %v4703
  %v4705 = vmul.f32 %v4699, 1.442695
  %v4706 = vpow.pop %v4705
  %v4707 = vmul.f32 %v4700, 1.442695
  %v4708 = vpow.pop %v4707
  %v4709 = vsel %vm329, %v4702, 0.0
  %4710 = vadd.xlane.f32.xlu0 %v4709
  %v4711 = vpop.xlane.xlu0 %4710
  %v4712 = vsel %vm329, %v4704, 0.0
  %4713 = vadd.xlane.f32.xlu0 %v4712
  %v4714 = vpop.xlane.xlu0 %4713
  %v4715 = vsel %vm329, %v4706, 0.0
  %4716 = vadd.xlane.f32.xlu0 %v4715
  %v4717 = vpop.xlane.xlu0 %4716
  %v4718 = vsel %vm329, %v4708, 0.0
  %4719 = vadd.xlane.f32.xlu0 %v4718
  %v4720 = vpop.xlane.xlu0 %4719
  %v4721 = vrcp.pop %v4711
  %v4722 = vrcp.pop %v4714
  %v4723 = vrcp.pop %v4717
  %v4724 = vrcp.pop %v4720
  %v4725 = vmul.f32 %v4702, %v4721
  %v4726 = vmul.f32 %v4704, %v4722
  %v4727 = vmul.f32 %v4706, %v4723
  %v4728 = vmul.f32 %v4708, %v4724
  %4729 = vrot.lane.b32.xlu0 %v3420, 84
  %v4730 = vpop.permute.xlu0 %4729
  %4731 = vrot.lane.b32.xlu0 %v3425, 84
  %v4732 = vpop.permute.xlu0 %4731
  %4733 = vrot.lane.b32.xlu0 %v3430, 84
  %v4734 = vpop.permute.xlu0 %4733
  %4735 = vrot.lane.b32.xlu0 %v3435, 84
  %v4736 = vpop.permute.xlu0 %4735
  %v4742 = vsel %vm329, %v4725, 0
  %v4745 = vsel %vm329, %v4726, 0
  %v4748 = vsel %vm329, %v4727, 0
  %v4751 = vsel %vm329, %v4728, 0
  %4753 = vmatprep.subr.mxu0 0.0
  %4754 = vmatpush1.msra.mxu0 0.0
  %4755 = vmatprep.subr.mxu0 0.0
  %4756 = vmatpush1.msra.mxu0 0.0
  %4757 = vmatprep.subr.mxu0 0.0
  %4758 = vmatpush1.msra.mxu0 0.0
  %4759 = vmatprep.subr.mxu0 0.0
  %4760 = vmatpush1.msra.mxu0 0.0
  %4761 = vmatprep.subr.mxu0 0.0
  %4762 = vmatpush1.msra.mxu0 0.0
  %4763 = vmatprep.subr.mxu0 0.0
  %4764 = vmatpush1.msra.mxu0 0.0
  %4765 = vmatprep.subr.mxu0 0.0
  %4766 = vmatpush1.msra.mxu0 0.0
  %4767 = vmatprep.subr.mxu0 0.0
  %4768 = vmatpush1.msra.mxu0 0.0
  %4769 = vmatprep.subr.mxu0 0.0
  %4770 = vmatpush1.msra.mxu0 0.0
  %4771 = vmatprep.subr.mxu0 0.0
  %4772 = vmatpush1.msra.mxu0 0.0
  %4773 = vmatprep.subr.mxu0 0.0
  %4774 = vmatpush1.msra.mxu0 0.0
  %4775 = vmatprep.subr.mxu0 0.0
  %4776 = vmatpush1.msra.mxu0 0.0
  %4777 = vmatprep.subr.mxu0 0.0
  %4778 = vmatpush1.msra.mxu0 %v4736
  %4779 = vmatprep.subr.mxu0 0.0
  %4780 = vmatpush1.msra.mxu0 %v4734
  %4781 = vmatprep.subr.mxu0 0.0
  %4782 = vmatpush1.msra.mxu0 %v4732
  %4783 = vmatprep.subr.mxu0 0.0
  %4784 = vmatpush1.msra.mxu0 %v4730
  %4785 = vmatprep.subr.mxu0 0.0
  %4786 = vmatpush2.msra.mxu0 0.0
  %4787 = vmatprep.subr.mxu0 0.0
  %4788 = vmatpush2.msra.mxu0 0.0
  %4789 = vmatprep.subr.mxu0 0.0
  %4790 = vmatpush2.msra.mxu0 0.0
  %4791 = vmatprep.subr.mxu0 0.0
  %4792 = vmatpush2.msra.mxu0 0.0
  %4793 = vmatprep.subr.mxu0 0.0
  %4794 = vmatpush2.msra.mxu0 0.0
  %4795 = vmatprep.subr.mxu0 0.0
  %4796 = vmatpush2.msra.mxu0 0.0
  %4797 = vmatprep.subr.mxu0 0.0
  %4798 = vmatpush2.msra.mxu0 0.0
  %4799 = vmatprep.subr.mxu0 0.0
  %4800 = vmatpush2.msra.mxu0 0.0
  %4801 = vmatprep.subr.mxu0 0.0
  %4802 = vmatpush2.msra.mxu0 0.0
  %4803 = vmatprep.subr.mxu0 0.0
  %4804 = vmatpush2.msra.mxu0 0.0
  %4805 = vmatprep.subr.mxu0 0.0
  %4806 = vmatpush2.msra.mxu0 0.0
  %4807 = vmatprep.subr.mxu0 0.0
  %4808 = vmatpush2.msra.mxu0 0.0
  %4809 = vmatprep.subr.mxu0 0.0
  %4810 = vmatpush2.msra.mxu0 0.0
  %4811 = vmatprep.subr.mxu0 0.0
  %4812 = vmatpush2.msra.mxu0 0.0
  %4813 = vmatprep.subr.mxu0 0.0
  %4814 = vmatpush2.msra.mxu0 0.0
  %4815 = vmatprep.subr.mxu0 0.0
  %4816 = vmatpush2.msra.mxu0 0.0
  %4817 = vmatprep.mubr.f32.mxu0 0.0
  %4818 = vmatmul.mubr.f32.gmra.mxu0 %v4742
  %v4819 = vpop.f32.mrf.mxu0
  %v4820 = vadd.f32 0.0, %v4819
  %v4821 = vpop.f32.mrf.mxu0
  %4822 = vmatprep.mubr.f32.mxu0 0.0
  %4823 = vmatmul.mubr.f32.gmra.mxu0 %v4745
  %v4824 = vpop.f32.mrf.mxu0
  %v4825 = vadd.f32 0.0, %v4824
  %v4826 = vpop.f32.mrf.mxu0
  %4827 = vmatprep.mubr.f32.mxu0 0.0
  %4828 = vmatmul.mubr.f32.gmra.mxu0 %v4748
  %v4829 = vpop.f32.mrf.mxu0
  %v4830 = vadd.f32 0.0, %v4829
  %v4831 = vpop.f32.mrf.mxu0
  %4832 = vmatprep.mubr.f32.mxu0 0.0
  %4833 = vmatmul.mubr.f32.gmra.mxu0 %v4751
  %v4834 = vpop.f32.mrf.mxu0
  %v4835 = vadd.f32 0.0, %v4834
  %v4836 = vpop.f32.mrf.mxu0
  %4837 = vdwg.mxu0
  %v4838 = vrot.slane %v3439, 4
  %v4840 = vsel %vm3460, %v4820, 0
  %v4843 = vsel %vm3460, %v4825, 0
  %v4846 = vsel %vm3460, %v4830, 0
  %v4849 = vsel %vm3460, %v4835, 0
  %v4851 = vsel %vm3727, %v4838, 0
  %4853 = vmatprep.subr.mxu0 0.0
  %4854 = vmatpush1.msra.mxu0 0.0
  %4855 = vmatprep.subr.mxu0 0.0
  %4856 = vmatpush1.msra.mxu0 0.0
  %4857 = vmatprep.subr.mxu0 0.0
  %4858 = vmatpush1.msra.mxu0 0.0
  %4859 = vmatprep.subr.mxu0 0.0
  %4860 = vmatpush1.msra.mxu0 0.0
  %4861 = vmatprep.subr.mxu0 0.0
  %4862 = vmatpush1.msra.mxu0 0.0
  %4863 = vmatprep.subr.mxu0 0.0
  %4864 = vmatpush1.msra.mxu0 0.0
  %4865 = vmatprep.subr.mxu0 0.0
  %4866 = vmatpush1.msra.mxu0 0.0
  %4867 = vmatprep.subr.mxu0 0.0
  %4868 = vmatpush1.msra.mxu0 0.0
  %4869 = vmatprep.subr.mxu0 0.0
  %4870 = vmatpush1.msra.mxu0 0.0
  %4871 = vmatprep.subr.mxu0 0.0
  %4872 = vmatpush1.msra.mxu0 0.0
  %4873 = vmatprep.subr.mxu0 0.0
  %4874 = vmatpush1.msra.mxu0 0.0
  %4875 = vmatprep.subr.mxu0 0.0
  %4876 = vmatpush1.msra.mxu0 0.0
  %4877 = vmatprep.subr.mxu0 0.0
  %4878 = vmatpush1.msra.mxu0 0.0
  %4879 = vmatprep.subr.mxu0 0.0
  %4880 = vmatpush1.msra.mxu0 0.0
  %4881 = vmatprep.subr.mxu0 0.0
  %4882 = vmatpush1.msra.mxu0 0.0
  %4883 = vmatprep.subr.mxu0 0.0
  %4884 = vmatpush1.msra.mxu0 %v4851
  %4885 = vmatprep.subr.mxu0 0.0
  %4886 = vmatpush2.msra.mxu0 0.0
  %4887 = vmatprep.subr.mxu0 0.0
  %4888 = vmatpush2.msra.mxu0 0.0
  %4889 = vmatprep.subr.mxu0 0.0
  %4890 = vmatpush2.msra.mxu0 0.0
  %4891 = vmatprep.subr.mxu0 0.0
  %4892 = vmatpush2.msra.mxu0 0.0
  %4893 = vmatprep.subr.mxu0 0.0
  %4894 = vmatpush2.msra.mxu0 0.0
  %4895 = vmatprep.subr.mxu0 0.0
  %4896 = vmatpush2.msra.mxu0 0.0
  %4897 = vmatprep.subr.mxu0 0.0
  %4898 = vmatpush2.msra.mxu0 0.0
  %4899 = vmatprep.subr.mxu0 0.0
  %4900 = vmatpush2.msra.mxu0 0.0
  %4901 = vmatprep.subr.mxu0 0.0
  %4902 = vmatpush2.msra.mxu0 0.0
  %4903 = vmatprep.subr.mxu0 0.0
  %4904 = vmatpush2.msra.mxu0 0.0
  %4905 = vmatprep.subr.mxu0 0.0
  %4906 = vmatpush2.msra.mxu0 0.0
  %4907 = vmatprep.subr.mxu0 0.0
  %4908 = vmatpush2.msra.mxu0 0.0
  %4909 = vmatprep.subr.mxu0 0.0
  %4910 = vmatpush2.msra.mxu0 0.0
  %4911 = vmatprep.subr.mxu0 0.0
  %4912 = vmatpush2.msra.mxu0 0.0
  %4913 = vmatprep.subr.mxu0 0.0
  %4914 = vmatpush2.msra.mxu0 0.0
  %4915 = vmatprep.subr.mxu0 0.0
  %4916 = vmatpush2.msra.mxu0 0.0
  %4917 = vmatprep.mubr.f32.mxu0 0.0
  %4918 = vmatmul.mubr.f32.gmra.mxu0 %v4840
  %v4919 = vpop.f32.mrf.mxu0
  %v4920 = vadd.f32 0.0, %v4919
  %v4921 = vpop.f32.mrf.mxu0
  %4922 = vmatprep.mubr.f32.mxu0 0.0
  %4923 = vmatmul.mubr.f32.gmra.mxu0 %v4843
  %v4924 = vpop.f32.mrf.mxu0
  %v4925 = vadd.f32 0.0, %v4924
  %v4926 = vpop.f32.mrf.mxu0
  %4927 = vmatprep.mubr.f32.mxu0 0.0
  %4928 = vmatmul.mubr.f32.gmra.mxu0 %v4846
  %v4929 = vpop.f32.mrf.mxu0
  %v4930 = vadd.f32 0.0, %v4929
  %v4931 = vpop.f32.mrf.mxu0
  %4932 = vmatprep.mubr.f32.mxu0 0.0
  %4933 = vmatmul.mubr.f32.gmra.mxu0 %v4849
  %v4934 = vpop.f32.mrf.mxu0
  %v4935 = vadd.f32 0.0, %v4934
  %v4936 = vpop.f32.mrf.mxu0
  %4937 = vdwg.mxu0
  %v4938 = vadd.f32 %v4564, %v4920
  %v4939 = vadd.f32 %v4565, %v4925
  %v4940 = vadd.f32 %v4566, %v4930
  %v4941 = vadd.f32 %v4567, %v4935
  %v4942 = vadd.f32 %v4938, %v2693
  %v4943 = vadd.f32 %v4939, %v2694
  %v4944 = vadd.f32 %v4940, %v2695
  %v4945 = vadd.f32 %v4941, %v2696
  %v4946 = vld [vmem:[%s18] sm:$0x1]
  %v4948 = vlaneseq
  %v4949 = vshrl.u32 %v4948, 7
  %v4950 = vsub.s32 0, %v4949
  %v4951 = vrot.slane %v4946, %v4950
  %v4953 = vmul.f32 %v4942, %v4951
  %v4954 = vmul.f32 %v4943, %v4951
  %v4955 = vmul.f32 %v4944, %v4951
  %v4956 = vmul.f32 %v4945, %v4951
  %v4957 = vld [vmem:[%s19] sm:$0x1]
  %v4959 = vlaneseq
  %v4960 = vshrl.u32 %v4959, 7
  %v4961 = vsub.s32 0, %v4960
  %v4962 = vrot.slane %v4957, %v4961
  %v4964 = vadd.f32 %v4953, %v4962
  %v4965 = vadd.f32 %v4954, %v4962
  %v4966 = vadd.f32 %v4955, %v4962
  %v4967 = vadd.f32 %v4956, %v4962
  %v4968 = vadd.f32 %v3328, %v4964
  %v4969 = vadd.f32 %v3329, %v4965
  %v4970 = vadd.f32 %v3330, %v4966
  %v4971 = vadd.f32 %v3331, %v4967
  %v4972 = vld [vmem:[%s20] sm:$0xff]
  %v4973 = vld [vmem:[%s20 + $0x8] sm:$0xff]
  %v4974 = vld [vmem:[%s21] sm:$0x1]
  %v4976 = vlaneseq
  %v4977 = vshrl.u32 %v4976, 7
  %v4978 = vsub.s32 0, %v4977
  %v4979 = vrot.slane %v4974, %v4978
  %v4982 = vsel %vm3098, %v4968, 0
  %v4985 = vsel %vm3098, %v4969, 0
  %v4988 = vsel %vm3098, %v4970, 0
  %v4991 = vsel %vm3098, %v4971, 0
  %4993 = vmatprep.subr.mxu0 0.0
  %4994 = vmatpush1.msra.mxu0 0.0
  %4995 = vmatprep.subr.mxu0 0.0
  %4996 = vmatpush1.msra.mxu0 0.0
  %4997 = vmatprep.subr.mxu0 0.0
  %4998 = vmatpush1.msra.mxu0 0.0
  %4999 = vmatprep.subr.mxu0 0.0
  %5000 = vmatpush1.msra.mxu0 0.0
  %5001 = vmatprep.subr.mxu0 0.0
  %5002 = vmatpush1.msra.mxu0 0.0
  %5003 = vmatprep.subr.mxu0 0.0
  %5004 = vmatpush1.msra.mxu0 0.0
  %5005 = vmatprep.subr.mxu0 0.0
  %5006 = vmatpush1.msra.mxu0 0.0
  %5007 = vmatprep.subr.mxu0 0.0
  %5008 = vmatpush1.msra.mxu0 0.0
  %5009 = vmatprep.subr.mxu0 0.0
  %5010 = vmatpush1.msra.mxu0 0.0
  %5011 = vmatprep.subr.mxu0 0.0
  %5012 = vmatpush1.msra.mxu0 0.0
  %5013 = vmatprep.subr.mxu0 0.0
  %5014 = vmatpush1.msra.mxu0 0.0
  %5015 = vmatprep.subr.mxu0 0.0
  %5016 = vmatpush1.msra.mxu0 0.0
  %5017 = vmatprep.subr.mxu0 0.0
  %5018 = vmatpush1.msra.mxu0 0.0
  %5019 = vmatprep.subr.mxu0 0.0
  %5020 = vmatpush1.msra.mxu0 0.0
  %5021 = vmatprep.subr.mxu0 0.0
  %5022 = vmatpush1.msra.mxu0 %v4973
  %5023 = vmatprep.subr.mxu0 0.0
  %5024 = vmatpush1.msra.mxu0 %v4972
  %5025 = vmatprep.subr.mxu0 0.0
  %5026 = vmatpush2.msra.mxu0 0.0
  %5027 = vmatprep.subr.mxu0 0.0
  %5028 = vmatpush2.msra.mxu0 0.0
  %5029 = vmatprep.subr.mxu0 0.0
  %5030 = vmatpush2.msra.mxu0 0.0
  %5031 = vmatprep.subr.mxu0 0.0
  %5032 = vmatpush2.msra.mxu0 0.0
  %5033 = vmatprep.subr.mxu0 0.0
  %5034 = vmatpush2.msra.mxu0 0.0
  %5035 = vmatprep.subr.mxu0 0.0
  %5036 = vmatpush2.msra.mxu0 0.0
  %5037 = vmatprep.subr.mxu0 0.0
  %5038 = vmatpush2.msra.mxu0 0.0
  %5039 = vmatprep.subr.mxu0 0.0
  %5040 = vmatpush2.msra.mxu0 0.0
  %5041 = vmatprep.subr.mxu0 0.0
  %5042 = vmatpush2.msra.mxu0 0.0
  %5043 = vmatprep.subr.mxu0 0.0
  %5044 = vmatpush2.msra.mxu0 0.0
  %5045 = vmatprep.subr.mxu0 0.0
  %5046 = vmatpush2.msra.mxu0 0.0
  %5047 = vmatprep.subr.mxu0 0.0
  %5048 = vmatpush2.msra.mxu0 0.0
  %5049 = vmatprep.subr.mxu0 0.0
  %5050 = vmatpush2.msra.mxu0 0.0
  %5051 = vmatprep.subr.mxu0 0.0
  %5052 = vmatpush2.msra.mxu0 0.0
  %5053 = vmatprep.subr.mxu0 0.0
  %5054 = vmatpush2.msra.mxu0 0.0
  %5055 = vmatprep.subr.mxu0 0.0
  %5056 = vmatpush2.msra.mxu0 0.0
  %5057 = vmatprep.mubr.f32.mxu0 0.0
  %5058 = vmatmul.mubr.f32.gmra.mxu0 %v4982
  %v5059 = vpop.f32.mrf.mxu0
  %v5060 = vadd.f32 %v4979, %v5059
  %v5061 = vpop.f32.mrf.mxu0
  %5062 = vmatprep.mubr.f32.mxu0 0.0
  %5063 = vmatmul.mubr.f32.gmra.mxu0 %v4985
  %v5064 = vpop.f32.mrf.mxu0
  %v5065 = vadd.f32 %v4979, %v5064
  %v5066 = vpop.f32.mrf.mxu0
  %5067 = vmatprep.mubr.f32.mxu0 0.0
  %5068 = vmatmul.mubr.f32.gmra.mxu0 %v4988
  %v5069 = vpop.f32.mrf.mxu0
  %v5070 = vadd.f32 %v4979, %v5069
  %v5071 = vpop.f32.mrf.mxu0
  %5072 = vmatprep.mubr.f32.mxu0 0.0
  %5073 = vmatmul.mubr.f32.gmra.mxu0 %v4991
  %v5074 = vpop.f32.mrf.mxu0
  %v5075 = vadd.f32 %v4979, %v5074
  %v5076 = vpop.f32.mrf.mxu0
  %5077 = vdwg.mxu0
  %v5078 = vmax.f32 %v5060, 0.0
  %v5079 = vmax.f32 %v5065, 0.0
  %v5080 = vmax.f32 %v5070, 0.0
  %v5081 = vmax.f32 %v5075, 0.0
  %v5082 = vld [vmem:[%s22] sm:$0xff]
  %v5083 = vld [vmem:[%s22 + $0x8] sm:$0xff]
  %v5084 = vld [vmem:[%s22 + $0x10] sm:$0xff]
  %v5085 = vld [vmem:[%s22 + $0x18] sm:$0xff]
  %v5086 = vld [vmem:[%s23] sm:$0x1]
  %v5088 = vlaneseq
  %v5089 = vshrl.u32 %v5088, 7
  %v5090 = vsub.s32 0, %v5089
  %v5091 = vrot.slane %v5086, %v5090
  %v5094 = vsel %vm329, %v5078, 0
  %v5097 = vsel %vm329, %v5079, 0
  %v5100 = vsel %vm329, %v5080, 0
  %v5103 = vsel %vm329, %v5081, 0
  %5105 = vmatprep.subr.mxu0 0.0
  %5106 = vmatpush1.msra.mxu0 0.0
  %5107 = vmatprep.subr.mxu0 0.0
  %5108 = vmatpush1.msra.mxu0 0.0
  %5109 = vmatprep.subr.mxu0 0.0
  %5110 = vmatpush1.msra.mxu0 0.0
  %5111 = vmatprep.subr.mxu0 0.0
  %5112 = vmatpush1.msra.mxu0 0.0
  %5113 = vmatprep.subr.mxu0 0.0
  %5114 = vmatpush1.msra.mxu0 0.0
  %5115 = vmatprep.subr.mxu0 0.0
  %5116 = vmatpush1.msra.mxu0 0.0
  %5117 = vmatprep.subr.mxu0 0.0
  %5118 = vmatpush1.msra.mxu0 0.0
  %5119 = vmatprep.subr.mxu0 0.0
  %5120 = vmatpush1.msra.mxu0 0.0
  %5121 = vmatprep.subr.mxu0 0.0
  %5122 = vmatpush1.msra.mxu0 0.0
  %5123 = vmatprep.subr.mxu0 0.0
  %5124 = vmatpush1.msra.mxu0 0.0
  %5125 = vmatprep.subr.mxu0 0.0
  %5126 = vmatpush1.msra.mxu0 0.0
  %5127 = vmatprep.subr.mxu0 0.0
  %5128 = vmatpush1.msra.mxu0 0.0
  %5129 = vmatprep.subr.mxu0 0.0
  %5130 = vmatpush1.msra.mxu0 %v5085
  %5131 = vmatprep.subr.mxu0 0.0
  %5132 = vmatpush1.msra.mxu0 %v5084
  %5133 = vmatprep.subr.mxu0 0.0
  %5134 = vmatpush1.msra.mxu0 %v5083
  %5135 = vmatprep.subr.mxu0 0.0
  %5136 = vmatpush1.msra.mxu0 %v5082
  %5137 = vmatprep.subr.mxu0 0.0
  %5138 = vmatpush2.msra.mxu0 0.0
  %5139 = vmatprep.subr.mxu0 0.0
  %5140 = vmatpush2.msra.mxu0 0.0
  %5141 = vmatprep.subr.mxu0 0.0
  %5142 = vmatpush2.msra.mxu0 0.0
  %5143 = vmatprep.subr.mxu0 0.0
  %5144 = vmatpush2.msra.mxu0 0.0
  %5145 = vmatprep.subr.mxu0 0.0
  %5146 = vmatpush2.msra.mxu0 0.0
  %5147 = vmatprep.subr.mxu0 0.0
  %5148 = vmatpush2.msra.mxu0 0.0
  %5149 = vmatprep.subr.mxu0 0.0
  %5150 = vmatpush2.msra.mxu0 0.0
  %5151 = vmatprep.subr.mxu0 0.0
  %5152 = vmatpush2.msra.mxu0 0.0
  %5153 = vmatprep.subr.mxu0 0.0
  %5154 = vmatpush2.msra.mxu0 0.0
  %5155 = vmatprep.subr.mxu0 0.0
  %5156 = vmatpush2.msra.mxu0 0.0
  %5157 = vmatprep.subr.mxu0 0.0
  %5158 = vmatpush2.msra.mxu0 0.0
  %5159 = vmatprep.subr.mxu0 0.0
  %5160 = vmatpush2.msra.mxu0 0.0
  %5161 = vmatprep.subr.mxu0 0.0
  %5162 = vmatpush2.msra.mxu0 0.0
  %5163 = vmatprep.subr.mxu0 0.0
  %5164 = vmatpush2.msra.mxu0 0.0
  %5165 = vmatprep.subr.mxu0 0.0
  %5166 = vmatpush2.msra.mxu0 0.0
  %5167 = vmatprep.subr.mxu0 0.0
  %5168 = vmatpush2.msra.mxu0 0.0
  %5169 = vmatprep.mubr.f32.mxu0 0.0
  %5170 = vmatmul.mubr.f32.gmra.mxu0 %v5094
  %v5171 = vpop.f32.mrf.mxu0
  %v5172 = vadd.f32 %v5091, %v5171
  %v5173 = vpop.f32.mrf.mxu0
  %5174 = vmatprep.mubr.f32.mxu0 0.0
  %5175 = vmatmul.mubr.f32.gmra.mxu0 %v5097
  %v5176 = vpop.f32.mrf.mxu0
  %v5177 = vadd.f32 %v5091, %v5176
  %v5178 = vpop.f32.mrf.mxu0
  %5179 = vmatprep.mubr.f32.mxu0 0.0
  %5180 = vmatmul.mubr.f32.gmra.mxu0 %v5100
  %v5181 = vpop.f32.mrf.mxu0
  %v5182 = vadd.f32 %v5091, %v5181
  %v5183 = vpop.f32.mrf.mxu0
  %5184 = vmatprep.mubr.f32.mxu0 0.0
  %5185 = vmatmul.mubr.f32.gmra.mxu0 %v5103
  %v5186 = vpop.f32.mrf.mxu0
  %v5187 = vadd.f32 %v5091, %v5186
  %v5188 = vpop.f32.mrf.mxu0
  %5189 = vdwg.mxu0
  %v5190 = vadd.f32 %v4968, %v5172
  %v5191 = vadd.f32 %v4969, %v5177
  %v5192 = vadd.f32 %v4970, %v5182
  %v5193 = vadd.f32 %v4971, %v5187
  %v5194 = vld [vmem:[%s24] sm:$0x1]
  %v5196 = vlaneseq
  %v5197 = vshrl.u32 %v5196, 7
  %v5198 = vsub.s32 0, %v5197
  %v5199 = vrot.slane %v5194, %v5198
  %v5201 = vmul.f32 %v5190, %v5199
  %v5202 = vmul.f32 %v5191, %v5199
  %v5203 = vmul.f32 %v5192, %v5199
  %v5204 = vmul.f32 %v5193, %v5199
  %v5205 = vld [vmem:[%s25] sm:$0x1]
  %v5207 = vlaneseq
  %v5208 = vshrl.u32 %v5207, 7
  %v5209 = vsub.s32 0, %v5208
  %v5210 = vrot.slane %v5205, %v5209
  %v5212 = vadd.f32 %v5201, %v5210
  %v5213 = vadd.f32 %v5202, %v5210
  %v5214 = vadd.f32 %v5203, %v5210
  %v5215 = vadd.f32 %v5204, %v5210
  %5216 = vst.msk [vmem:[%s26] sm:$0xff] %vm3098, %v5212
  %5217 = vst.msk [vmem:[%s26 + $0x8] sm:$0xff] %vm3098, %v5213
  %5218 = vst.msk [vmem:[%s26 + $0x10] sm:$0xff] %vm3098, %v5214
  %5219 = vst.msk [vmem:[%s26 + $0x18] sm:$0xff] %vm3098, %v5215
  // Predicated region
  $region106: #{homo_molecule_gnn_gps_forward.1} parent=0 // pred_check
    _
  $region107: #{homo_molecule_gnn_gps_forward.1} parent=0 // pred_check_branch
    %5221 = sbr.rel (0) target = $region109
  $region108: #{homo_molecule_gnn_gps_forward.1} parent=0 // pred_region
    _
  $region109: #{homo_molecule_gnn_gps_forward.1} parent=0 // pred_fallthru
    _
  // Predicated region
  $region110: #{homo_molecule_gnn_gps_forward.1} parent=0 // pred_check
    _
  $region111: #{homo_molecule_gnn_gps_forward.1} parent=0 // pred_check_branch
    %5223 = sbr.rel (0) target = $region113
  $region112: #{homo_molecule_gnn_gps_forward.1} parent=0 // pred_region
    _
  $region113: #{homo_molecule_gnn_gps_forward.1} parent=0 // pred_fallthru
    _

</llo_original>
